<compile_context>
chip_gen: v5e
topology: v5e:2x2
jax: 0.10.0
libtpu: 0.0.40
codegen_flags: <defaults>
</compile_context>

<pallas_src>
import functools
import math

import jax
import jax.numpy as jnp
from jax.experimental import pallas as pl
from jax.experimental.pallas import tpu as pltpu


def _gaussian_filter(sigma, amplitude, w):
    """Gaussian2DIsotropic.get_filter():
       A/(2*pi*sigma^2) * exp(-(xv^2+yv^2)/(2*sigma^2)) on a [-1,1]^2 grid."""
    xes = jnp.linspace(-1.0, 1.0, w, dtype=jnp.float32)
    xv, yv = jnp.meshgrid(xes, xes)
    r2 = xv * xv + yv * yv                         # (w, w)
    s2 = (sigma * sigma)[:, None, None]            # (C*G, 1, 1)
    amp = amplitude[:, None, None]                 # (C*G, 1, 1)
    return amp * jnp.exp(-r2[None, :, :] / (2.0 * s2)) / (2.0 * math.pi * s2)


def _dog_conv_kernel(x_ref, f_ref, o_ref, pad_ref, *, C, G, H, W, w):
    """One grid step = one batch element, all C*G output channels.

    x_ref:   (1, C, H, W)     unpadded input planes (VMEM)
    f_ref:   (C*G, w*w)       flattened DoG filters (SMEM, scalar taps)
    o_ref:   (1, C*G, H, W)   output planes (VMEM)
    pad_ref: (C, H+2p, W+2p)  zero-padded staging scratch (VMEM, f32)
    """
    p = w // 2
    n_acc = 4

    # Zero the padded scratch (borders) and copy the interior, upcast to f32.
    pad_ref[...] = jnp.zeros_like(pad_ref)
    pad_ref[:, p:p + H, p:p + W] = x_ref[0].astype(jnp.float32)

    # F.conv2d is cross-correlation (no kernel flip); fully static tap loops.
    for c in range(C):
        # Hoist the w*w shifted windows of this input channel once; they are
        # reused by all G output channels of the group.
        wins = [pad_ref[c, ky:ky + H, kx:kx + W]
                for ky in range(w) for kx in range(w)]
        for g in range(G):
            o = c * G + g
            # Independent partial accumulators -> VALU ILP on the MAC chain.
            parts = [jnp.zeros((H, W), jnp.float32) for _ in range(n_acc)]
            for t in range(w * w):
                # SMEM scalar tap: scalar-unit read + free vector splat.
                parts[t % n_acc] = parts[t % n_acc] + f_ref[o, t] * wins[t]
            acc = (parts[0] + parts[1]) + (parts[2] + parts[3])
            o_ref[0, o] = acc.astype(o_ref.dtype)


def dog2d_isotropic_forward(x, sigma_a, amp_a, sigma_b, amp_b, w, n_gaussian):
    """Equivalent of DoG2DIsotropic.forward(x) (NCHW, groups = in_channels)."""
    # PyTorch F.conv2d(padding=w//2) only preserves H x W for odd w.
    assert w % 2 == 1, "DoG2DIsotropic kernel requires an odd filter width"
    N, C, H, W = x.shape
    G = n_gaussian
    p = w // 2
    Hp, Wp = H + 2 * p, W + 2 * p

    # DoG filter built once in the wrapper: A - B, flattened for SMEM taps.
    filt = (_gaussian_filter(sigma_a, amp_a, w)
            - _gaussian_filter(sigma_b, amp_b, w)).reshape(C * G, w * w)
    filt = filt.astype(jnp.float32)

    kernel = functools.partial(_dog_conv_kernel, C=C, G=G, H=H, W=W, w=w)

    return pl.pallas_call(
        kernel,
        out_shape=jax.ShapeDtypeStruct((N, C * G, H, W), x.dtype),
        grid=(N,),
        in_specs=[
            # All input channels of one batch element per grid step.
            pl.BlockSpec((1, C, H, W), lambda n: (n, 0, 0, 0)),
            # Flattened DoG filters live in SMEM (scalar taps).
            pl.BlockSpec(memory_space=pltpu.MemorySpace.SMEM),
        ],
        out_specs=pl.BlockSpec((1, C * G, H, W), lambda n: (n, 0, 0, 0)),
        scratch_shapes=[pltpu.VMEM((C, Hp, Wp), jnp.float32)],
        compiler_params=pltpu.CompilerParams(
            dimension_semantics=("parallel",)),
    )(x, filt)


if __name__ == "__main__":
    # Small shapes consistent with the module.
    N, C, H, W = 2, 4, 16, 16        # NCHW input
    w, n_gaussian = 5, 2             # filter size, gaussians per input channel
    G = n_gaussian

    key = jax.random.PRNGKey(0)
    x = jax.random.normal(key, (N, C, H, W), dtype=jnp.float32)

    # Deterministic parameter init (synthetic, mirrors DoG2DIsotropic.weights_init:
    # A gets offset 0.0, B gets offset 0.01; amplitudes fixed to 1, not learned).
    base_sigma = 0.5 + 0.05 * jnp.arange(C * G, dtype=jnp.float32)
    sigma_a = base_sigma + 0.0
    sigma_b = base_sigma + 0.01
    amp_a = jnp.ones((C * G,), jnp.float32)
    amp_b = jnp.ones((C * G,), jnp.float32)

    out = dog2d_isotropic_forward(x, sigma_a, amp_a, sigma_b, amp_b, w, n_gaussian)
    out = jax.block_until_ready(out)
    assert out.shape == (N, C * G, H, W), out.shape

    # Reference check against XLA grouped conv (same semantics as F.conv2d groups=C).
    filt_ref = (_gaussian_filter(sigma_a, amp_a, w)
                - _gaussian_filter(sigma_b, amp_b, w))[:, None]   # (C*G, 1, w, w)
    ref = jax.lax.conv_general_dilated(
        x, filt_ref, window_strides=(1, 1),
        padding=[(w // 2, w // 2), (w // 2, w // 2)],
        dimension_numbers=("NCHW", "OIHW", "NCHW"),
        feature_group_count=C)
    assert jnp.allclose(out, ref, atol=1e-5, rtol=1e-5), float(jnp.max(jnp.abs(out - ref)))

    print("KERNEL_OK")
</pallas_src>

<mosaic_0001>
module attributes {stable_mosaic.version = 11 : i64} {
  func.func @_dog_conv_kernel(%arg0: i32, %arg1: memref<1x4x16x16xf32, #tpu.memory_space<vmem>>, %arg2: memref<8x25xf32, #tpu.memory_space<smem>>, %arg3: memref<1x8x16x16xf32, #tpu.memory_space<vmem>>, %arg4: memref<4x20x20xf32, #tpu.memory_space<vmem>>) attributes {dimension_semantics = [#tpu.dimension_semantics<parallel>], iteration_bounds = array<i64: 2>, scalar_prefetch = 0 : i64, scratch_operands = 1 : i64, tpu.core_type = #tpu.core_type<tc>, window_params = [{transform_indices = @transform_0, window_bounds = array<i64: 1, 4, 16, 16>}, {transform_indices = @transform_1, window_bounds = array<i64: 8, 25>}, {transform_indices = @transform_2, window_bounds = array<i64: 1, 8, 16, 16>}]} {
    %cst = arith.constant 0.000000e+00 : f32
    %0 = vector.broadcast %cst : f32 to vector<4x20x20xf32>
    %c0 = arith.constant 0 : index
    %c0_0 = arith.constant 0 : index
    %c0_1 = arith.constant 0 : index
    %1 = vector.load %arg4[%c0, %c0_0, %c0_1] : memref<4x20x20xf32, #tpu.memory_space<vmem>>, vector<4x20x20xf32>
    tpu.vector_store %arg4[%c0, %c0_0, %c0_1], %0 {strides = array<i32>} : memref<4x20x20xf32, #tpu.memory_space<vmem>>, vector<4x20x20xf32>,
    %c0_2 = arith.constant 0 : index
    %c0_3 = arith.constant 0 : index
    %c0_4 = arith.constant 0 : index
    %c0_5 = arith.constant 0 : index
    %2 = vector.load %arg1[%c0_2, %c0_3, %c0_4, %c0_5] : memref<1x4x16x16xf32, #tpu.memory_space<vmem>>, vector<1x4x16x16xf32>
    %3 = vector.shape_cast %2 : vector<1x4x16x16xf32> to vector<4x16x16xf32>
    %c0_6 = arith.constant 0 : index
    %c2 = arith.constant 2 : index
    %c2_7 = arith.constant 2 : index
    %4 = vector.load %arg4[%c0_6, %c2, %c2_7] : memref<4x20x20xf32, #tpu.memory_space<vmem>>, vector<4x16x16xf32>
    tpu.vector_store %arg4[%c0_6, %c2, %c2_7], %3 {strides = array<i32>} : memref<4x20x20xf32, #tpu.memory_space<vmem>>, vector<4x16x16xf32>,
    %c0_8 = arith.constant 0 : index
    %c0_9 = arith.constant 0 : index
    %c0_10 = arith.constant 0 : index
    %5 = vector.load %arg4[%c0_8, %c0_9, %c0_10] : memref<4x20x20xf32, #tpu.memory_space<vmem>>, vector<1x16x16xf32>
    %6 = vector.shape_cast %5 : vector<1x16x16xf32> to vector<16x16xf32>
    %c0_11 = arith.constant 0 : index
    %c0_12 = arith.constant 0 : index
    %c1 = arith.constant 1 : index
    %7 = vector.load %arg4[%c0_11, %c0_12, %c1] : memref<4x20x20xf32, #tpu.memory_space<vmem>>, vector<1x16x16xf32>
    %8 = vector.shape_cast %7 : vector<1x16x16xf32> to vector<16x16xf32>
    %c0_13 = arith.constant 0 : index
    %c0_14 = arith.constant 0 : index
    %c2_15 = arith.constant 2 : index
    %9 = vector.load %arg4[%c0_13, %c0_14, %c2_15] : memref<4x20x20xf32, #tpu.memory_space<vmem>>, vector<1x16x16xf32>
    %10 = vector.shape_cast %9 : vector<1x16x16xf32> to vector<16x16xf32>
    %c0_16 = arith.constant 0 : index
    %c0_17 = arith.constant 0 : index
    %c3 = arith.constant 3 : index
    %11 = vector.load %arg4[%c0_16, %c0_17, %c3] : memref<4x20x20xf32, #tpu.memory_space<vmem>>, vector<1x16x16xf32>
    %12 = vector.shape_cast %11 : vector<1x16x16xf32> to vector<16x16xf32>
    %c0_18 = arith.constant 0 : index
    %c0_19 = arith.constant 0 : index
    %c4 = arith.constant 4 : index
    %13 = vector.load %arg4[%c0_18, %c0_19, %c4] : memref<4x20x20xf32, #tpu.memory_space<vmem>>, vector<1x16x16xf32>
    %14 = vector.shape_cast %13 : vector<1x16x16xf32> to vector<16x16xf32>
    %c0_20 = arith.constant 0 : index
    %c1_21 = arith.constant 1 : index
    %c0_22 = arith.constant 0 : index
    %15 = vector.load %arg4[%c0_20, %c1_21, %c0_22] : memref<4x20x20xf32, #tpu.memory_space<vmem>>, vector<1x16x16xf32>
    %16 = vector.shape_cast %15 : vector<1x16x16xf32> to vector<16x16xf32>
    %c0_23 = arith.constant 0 : index
    %c1_24 = arith.constant 1 : index
    %c1_25 = arith.constant 1 : index
    %17 = vector.load %arg4[%c0_23, %c1_24, %c1_25] : memref<4x20x20xf32, #tpu.memory_space<vmem>>, vector<1x16x16xf32>
    %18 = vector.shape_cast %17 : vector<1x16x16xf32> to vector<16x16xf32>
    %c0_26 = arith.constant 0 : index
    %c1_27 = arith.constant 1 : index
    %c2_28 = arith.constant 2 : index
    %19 = vector.load %arg4[%c0_26, %c1_27, %c2_28] : memref<4x20x20xf32, #tpu.memory_space<vmem>>, vector<1x16x16xf32>
    %20 = vector.shape_cast %19 : vector<1x16x16xf32> to vector<16x16xf32>
    %c0_29 = arith.constant 0 : index
    %c1_30 = arith.constant 1 : index
    %c3_31 = arith.constant 3 : index
    %21 = vector.load %arg4[%c0_29, %c1_30, %c3_31] : memref<4x20x20xf32, #tpu.memory_space<vmem>>, vector<1x16x16xf32>
    %22 = vector.shape_cast %21 : vector<1x16x16xf32> to vector<16x16xf32>
    %c0_32 = arith.constant 0 : index
    %c1_33 = arith.constant 1 : index
    %c4_34 = arith.constant 4 : index
    %23 = vector.load %arg4[%c0_32, %c1_33, %c4_34] : memref<4x20x20xf32, #tpu.memory_space<vmem>>, vector<1x16x16xf32>
    %24 = vector.shape_cast %23 : vector<1x16x16xf32> to vector<16x16xf32>
    %c0_35 = arith.constant 0 : index
    %c2_36 = arith.constant 2 : index
    %c0_37 = arith.constant 0 : index
    %25 = vector.load %arg4[%c0_35, %c2_36, %c0_37] : memref<4x20x20xf32, #tpu.memory_space<vmem>>, vector<1x16x16xf32>
    %26 = vector.shape_cast %25 : vector<1x16x16xf32> to vector<16x16xf32>
    %c0_38 = arith.constant 0 : index
    %c2_39 = arith.constant 2 : index
    %c1_40 = arith.constant 1 : index
    %27 = vector.load %arg4[%c0_38, %c2_39, %c1_40] : memref<4x20x20xf32, #tpu.memory_space<vmem>>, vector<1x16x16xf32>
    %28 = vector.shape_cast %27 : vector<1x16x16xf32> to vector<16x16xf32>
    %c0_41 = arith.constant 0 : index
    %c2_42 = arith.constant 2 : index
    %c2_43 = arith.constant 2 : index
    %29 = vector.load %arg4[%c0_41, %c2_42, %c2_43] : memref<4x20x20xf32, #tpu.memory_space<vmem>>, vector<1x16x16xf32>
    %30 = vector.shape_cast %29 : vector<1x16x16xf32> to vector<16x16xf32>
    %c0_44 = arith.constant 0 : index
    %c2_45 = arith.constant 2 : index
    %c3_46 = arith.constant 3 : index
    %31 = vector.load %arg4[%c0_44, %c2_45, %c3_46] : memref<4x20x20xf32, #tpu.memory_space<vmem>>, vector<1x16x16xf32>
    %32 = vector.shape_cast %31 : vector<1x16x16xf32> to vector<16x16xf32>
    %c0_47 = arith.constant 0 : index
    %c2_48 = arith.constant 2 : index
    %c4_49 = arith.constant 4 : index
    %33 = vector.load %arg4[%c0_47, %c2_48, %c4_49] : memref<4x20x20xf32, #tpu.memory_space<vmem>>, vector<1x16x16xf32>
    %34 = vector.shape_cast %33 : vector<1x16x16xf32> to vector<16x16xf32>
    %c0_50 = arith.constant 0 : index
    %c3_51 = arith.constant 3 : index
    %c0_52 = arith.constant 0 : index
    %35 = vector.load %arg4[%c0_50, %c3_51, %c0_52] : memref<4x20x20xf32, #tpu.memory_space<vmem>>, vector<1x16x16xf32>
    %36 = vector.shape_cast %35 : vector<1x16x16xf32> to vector<16x16xf32>
    %c0_53 = arith.constant 0 : index
    %c3_54 = arith.constant 3 : index
    %c1_55 = arith.constant 1 : index
    %37 = vector.load %arg4[%c0_53, %c3_54, %c1_55] : memref<4x20x20xf32, #tpu.memory_space<vmem>>, vector<1x16x16xf32>
    %38 = vector.shape_cast %37 : vector<1x16x16xf32> to vector<16x16xf32>
    %c0_56 = arith.constant 0 : index
    %c3_57 = arith.constant 3 : index
    %c2_58 = arith.constant 2 : index
    %39 = vector.load %arg4[%c0_56, %c3_57, %c2_58] : memref<4x20x20xf32, #tpu.memory_space<vmem>>, vector<1x16x16xf32>
    %40 = vector.shape_cast %39 : vector<1x16x16xf32> to vector<16x16xf32>
    %c0_59 = arith.constant 0 : index
    %c3_60 = arith.constant 3 : index
    %c3_61 = arith.constant 3 : index
    %41 = vector.load %arg4[%c0_59, %c3_60, %c3_61] : memref<4x20x20xf32, #tpu.memory_space<vmem>>, vector<1x16x16xf32>
    %42 = vector.shape_cast %41 : vector<1x16x16xf32> to vector<16x16xf32>
    %c0_62 = arith.constant 0 : index
    %c3_63 = arith.constant 3 : index
    %c4_64 = arith.constant 4 : index
    %43 = vector.load %arg4[%c0_62, %c3_63, %c4_64] : memref<4x20x20xf32, #tpu.memory_space<vmem>>, vector<1x16x16xf32>
    %44 = vector.shape_cast %43 : vector<1x16x16xf32> to vector<16x16xf32>
    %c0_65 = arith.constant 0 : index
    %c4_66 = arith.constant 4 : index
    %c0_67 = arith.constant 0 : index
    %45 = vector.load %arg4[%c0_65, %c4_66, %c0_67] : memref<4x20x20xf32, #tpu.memory_space<vmem>>, vector<1x16x16xf32>
    %46 = vector.shape_cast %45 : vector<1x16x16xf32> to vector<16x16xf32>
    %c0_68 = arith.constant 0 : index
    %c4_69 = arith.constant 4 : index
    %c1_70 = arith.constant 1 : index
    %47 = vector.load %arg4[%c0_68, %c4_69, %c1_70] : memref<4x20x20xf32, #tpu.memory_space<vmem>>, vector<1x16x16xf32>
    %48 = vector.shape_cast %47 : vector<1x16x16xf32> to vector<16x16xf32>
    %c0_71 = arith.constant 0 : index
    %c4_72 = arith.constant 4 : index
    %c2_73 = arith.constant 2 : index
    %49 = vector.load %arg4[%c0_71, %c4_72, %c2_73] : memref<4x20x20xf32, #tpu.memory_space<vmem>>, vector<1x16x16xf32>
    %50 = vector.shape_cast %49 : vector<1x16x16xf32> to vector<16x16xf32>
    %c0_74 = arith.constant 0 : index
    %c4_75 = arith.constant 4 : index
    %c3_76 = arith.constant 3 : index
    %51 = vector.load %arg4[%c0_74, %c4_75, %c3_76] : memref<4x20x20xf32, #tpu.memory_space<vmem>>, vector<1x16x16xf32>
    %52 = vector.shape_cast %51 : vector<1x16x16xf32> to vector<16x16xf32>
    %c0_77 = arith.constant 0 : index
    %c4_78 = arith.constant 4 : index
    %c4_79 = arith.constant 4 : index
    %53 = vector.load %arg4[%c0_77, %c4_78, %c4_79] : memref<4x20x20xf32, #tpu.memory_space<vmem>>, vector<1x16x16xf32>
    %54 = vector.shape_cast %53 : vector<1x16x16xf32> to vector<16x16xf32>
    %cst_80 = arith.constant 0.000000e+00 : f32
    %55 = vector.broadcast %cst_80 : f32 to vector<16x16xf32>
    %cst_81 = arith.constant 0.000000e+00 : f32
    %56 = vector.broadcast %cst_81 : f32 to vector<16x16xf32>
    %cst_82 = arith.constant 0.000000e+00 : f32
    %57 = vector.broadcast %cst_82 : f32 to vector<16x16xf32>
    %cst_83 = arith.constant 0.000000e+00 : f32
    %58 = vector.broadcast %cst_83 : f32 to vector<16x16xf32>
    %c0_84 = arith.constant 0 : index
    %c0_85 = arith.constant 0 : index
    %59 = memref.load %arg2[%c0_84, %c0_85] : memref<8x25xf32, #tpu.memory_space<smem>>
    %60 = vector.broadcast %59 : f32 to vector<16x16xf32>
    %61 = arith.mulf %60, %6 : vector<16x16xf32>
    %62 = arith.addf %55, %61 : vector<16x16xf32>
    %c0_86 = arith.constant 0 : index
    %c1_87 = arith.constant 1 : index
    %63 = memref.load %arg2[%c0_86, %c1_87] : memref<8x25xf32, #tpu.memory_space<smem>>
    %64 = vector.broadcast %63 : f32 to vector<16x16xf32>
    %65 = arith.mulf %64, %8 : vector<16x16xf32>
    %66 = arith.addf %56, %65 : vector<16x16xf32>
    %c0_88 = arith.constant 0 : index
    %c2_89 = arith.constant 2 : index
    %67 = memref.load %arg2[%c0_88, %c2_89] : memref<8x25xf32, #tpu.memory_space<smem>>
    %68 = vector.broadcast %67 : f32 to vector<16x16xf32>
    %69 = arith.mulf %68, %10 : vector<16x16xf32>
    %70 = arith.addf %57, %69 : vector<16x16xf32>
    %c0_90 = arith.constant 0 : index
    %c3_91 = arith.constant 3 : index
    %71 = memref.load %arg2[%c0_90, %c3_91] : memref<8x25xf32, #tpu.memory_space<smem>>
    %72 = vector.broadcast %71 : f32 to vector<16x16xf32>
    %73 = arith.mulf %72, %12 : vector<16x16xf32>
    %74 = arith.addf %58, %73 : vector<16x16xf32>
    %c0_92 = arith.constant 0 : index
    %c4_93 = arith.constant 4 : index
    %75 = memref.load %arg2[%c0_92, %c4_93] : memref<8x25xf32, #tpu.memory_space<smem>>
    %76 = vector.broadcast %75 : f32 to vector<16x16xf32>
    %77 = arith.mulf %76, %14 : vector<16x16xf32>
    %78 = arith.addf %62, %77 : vector<16x16xf32>
    %c0_94 = arith.constant 0 : index
    %c5 = arith.constant 5 : index
    %79 = memref.load %arg2[%c0_94, %c5] : memref<8x25xf32, #tpu.memory_space<smem>>
    %80 = vector.broadcast %79 : f32 to vector<16x16xf32>
    %81 = arith.mulf %80, %16 : vector<16x16xf32>
    %82 = arith.addf %66, %81 : vector<16x16xf32>
    %c0_95 = arith.constant 0 : index
    %c6 = arith.constant 6 : index
    %83 = memref.load %arg2[%c0_95, %c6] : memref<8x25xf32, #tpu.memory_space<smem>>
    %84 = vector.broadcast %83 : f32 to vector<16x16xf32>
    %85 = arith.mulf %84, %18 : vector<16x16xf32>
    %86 = arith.addf %70, %85 : vector<16x16xf32>
    %c0_96 = arith.constant 0 : index
    %c7 = arith.constant 7 : index
    %87 = memref.load %arg2[%c0_96, %c7] : memref<8x25xf32, #tpu.memory_space<smem>>
    %88 = vector.broadcast %87 : f32 to vector<16x16xf32>
    %89 = arith.mulf %88, %20 : vector<16x16xf32>
    %90 = arith.addf %74, %89 : vector<16x16xf32>
    %c0_97 = arith.constant 0 : index
    %c8 = arith.constant 8 : index
    %91 = memref.load %arg2[%c0_97, %c8] : memref<8x25xf32, #tpu.memory_space<smem>>
    %92 = vector.broadcast %91 : f32 to vector<16x16xf32>
    %93 = arith.mulf %92, %22 : vector<16x16xf32>
    %94 = arith.addf %78, %93 : vector<16x16xf32>
    %c0_98 = arith.constant 0 : index
    %c9 = arith.constant 9 : index
    %95 = memref.load %arg2[%c0_98, %c9] : memref<8x25xf32, #tpu.memory_space<smem>>
    %96 = vector.broadcast %95 : f32 to vector<16x16xf32>
    %97 = arith.mulf %96, %24 : vector<16x16xf32>
    %98 = arith.addf %82, %97 : vector<16x16xf32>
    %c0_99 = arith.constant 0 : index
    %c10 = arith.constant 10 : index
    %99 = memref.load %arg2[%c0_99, %c10] : memref<8x25xf32, #tpu.memory_space<smem>>
    %100 = vector.broadcast %99 : f32 to vector<16x16xf32>
    %101 = arith.mulf %100, %26 : vector<16x16xf32>
    %102 = arith.addf %86, %101 : vector<16x16xf32>
    %c0_100 = arith.constant 0 : index
    %c11 = arith.constant 11 : index
    %103 = memref.load %arg2[%c0_100, %c11] : memref<8x25xf32, #tpu.memory_space<smem>>
    %104 = vector.broadcast %103 : f32 to vector<16x16xf32>
    %105 = arith.mulf %104, %28 : vector<16x16xf32>
    %106 = arith.addf %90, %105 : vector<16x16xf32>
    %c0_101 = arith.constant 0 : index
    %c12 = arith.constant 12 : index
    %107 = memref.load %arg2[%c0_101, %c12] : memref<8x25xf32, #tpu.memory_space<smem>>
    %108 = vector.broadcast %107 : f32 to vector<16x16xf32>
    %109 = arith.mulf %108, %30 : vector<16x16xf32>
    %110 = arith.addf %94, %109 : vector<16x16xf32>
    %c0_102 = arith.constant 0 : index
    %c13 = arith.constant 13 : index
    %111 = memref.load %arg2[%c0_102, %c13] : memref<8x25xf32, #tpu.memory_space<smem>>
    %112 = vector.broadcast %111 : f32 to vector<16x16xf32>
    %113 = arith.mulf %112, %32 : vector<16x16xf32>
    %114 = arith.addf %98, %113 : vector<16x16xf32>
    %c0_103 = arith.constant 0 : index
    %c14 = arith.constant 14 : index
    %115 = memref.load %arg2[%c0_103, %c14] : memref<8x25xf32, #tpu.memory_space<smem>>
    %116 = vector.broadcast %115 : f32 to vector<16x16xf32>
    %117 = arith.mulf %116, %34 : vector<16x16xf32>
    %118 = arith.addf %102, %117 : vector<16x16xf32>
    %c0_104 = arith.constant 0 : index
    %c15 = arith.constant 15 : index
    %119 = memref.load %arg2[%c0_104, %c15] : memref<8x25xf32, #tpu.memory_space<smem>>
    %120 = vector.broadcast %119 : f32 to vector<16x16xf32>
    %121 = arith.mulf %120, %36 : vector<16x16xf32>
    %122 = arith.addf %106, %121 : vector<16x16xf32>
    %c0_105 = arith.constant 0 : index
    %c16 = arith.constant 16 : index
    %123 = memref.load %arg2[%c0_105, %c16] : memref<8x25xf32, #tpu.memory_space<smem>>
    %124 = vector.broadcast %123 : f32 to vector<16x16xf32>
    %125 = arith.mulf %124, %38 : vector<16x16xf32>
    %126 = arith.addf %110, %125 : vector<16x16xf32>
    %c0_106 = arith.constant 0 : index
    %c17 = arith.constant 17 : index
    %127 = memref.load %arg2[%c0_106, %c17] : memref<8x25xf32, #tpu.memory_space<smem>>
    %128 = vector.broadcast %127 : f32 to vector<16x16xf32>
    %129 = arith.mulf %128, %40 : vector<16x16xf32>
    %130 = arith.addf %114, %129 : vector<16x16xf32>
    %c0_107 = arith.constant 0 : index
    %c18 = arith.constant 18 : index
    %131 = memref.load %arg2[%c0_107, %c18] : memref<8x25xf32, #tpu.memory_space<smem>>
    %132 = vector.broadcast %131 : f32 to vector<16x16xf32>
    %133 = arith.mulf %132, %42 : vector<16x16xf32>
    %134 = arith.addf %118, %133 : vector<16x16xf32>
    %c0_108 = arith.constant 0 : index
    %c19 = arith.constant 19 : index
    %135 = memref.load %arg2[%c0_108, %c19] : memref<8x25xf32, #tpu.memory_space<smem>>
    %136 = vector.broadcast %135 : f32 to vector<16x16xf32>
    %137 = arith.mulf %136, %44 : vector<16x16xf32>
    %138 = arith.addf %122, %137 : vector<16x16xf32>
    %c0_109 = arith.constant 0 : index
    %c20 = arith.constant 20 : index
    %139 = memref.load %arg2[%c0_109, %c20] : memref<8x25xf32, #tpu.memory_space<smem>>
    %140 = vector.broadcast %139 : f32 to vector<16x16xf32>
    %141 = arith.mulf %140, %46 : vector<16x16xf32>
    %142 = arith.addf %126, %141 : vector<16x16xf32>
    %c0_110 = arith.constant 0 : index
    %c21 = arith.constant 21 : index
    %143 = memref.load %arg2[%c0_110, %c21] : memref<8x25xf32, #tpu.memory_space<smem>>
    %144 = vector.broadcast %143 : f32 to vector<16x16xf32>
    %145 = arith.mulf %144, %48 : vector<16x16xf32>
    %146 = arith.addf %130, %145 : vector<16x16xf32>
    %c0_111 = arith.constant 0 : index
    %c22 = arith.constant 22 : index
    %147 = memref.load %arg2[%c0_111, %c22] : memref<8x25xf32, #tpu.memory_space<smem>>
    %148 = vector.broadcast %147 : f32 to vector<16x16xf32>
    %149 = arith.mulf %148, %50 : vector<16x16xf32>
    %150 = arith.addf %134, %149 : vector<16x16xf32>
    %c0_112 = arith.constant 0 : index
    %c23 = arith.constant 23 : index
    %151 = memref.load %arg2[%c0_112, %c23] : memref<8x25xf32, #tpu.memory_space<smem>>
    %152 = vector.broadcast %151 : f32 to vector<16x16xf32>
    %153 = arith.mulf %152, %52 : vector<16x16xf32>
    %154 = arith.addf %138, %153 : vector<16x16xf32>
    %c0_113 = arith.constant 0 : index
    %c24 = arith.constant 24 : index
    %155 = memref.load %arg2[%c0_113, %c24] : memref<8x25xf32, #tpu.memory_space<smem>>
    %156 = vector.broadcast %155 : f32 to vector<16x16xf32>
    %157 = arith.mulf %156, %54 : vector<16x16xf32>
    %158 = arith.addf %142, %157 : vector<16x16xf32>
    %159 = arith.addf %158, %146 : vector<16x16xf32>
    %160 = arith.addf %150, %154 : vector<16x16xf32>
    %161 = arith.addf %159, %160 : vector<16x16xf32>
    %c0_114 = arith.constant 0 : index
    %c0_115 = arith.constant 0 : index
    %c0_116 = arith.constant 0 : index
    %c0_117 = arith.constant 0 : index
    %162 = vector.load %arg3[%c0_114, %c0_115, %c0_116, %c0_117] : memref<1x8x16x16xf32, #tpu.memory_space<vmem>>, vector<1x1x16x16xf32>
    %163 = vector.shape_cast %162 : vector<1x1x16x16xf32> to vector<16x16xf32>
    %164 = vector.shape_cast %161 : vector<16x16xf32> to vector<1x1x16x16xf32>
    tpu.vector_store %arg3[%c0_114, %c0_115, %c0_116, %c0_117], %164 {strides = array<i32>} : memref<1x8x16x16xf32, #tpu.memory_space<vmem>>, vector<1x1x16x16xf32>,
    %cst_118 = arith.constant 0.000000e+00 : f32
    %165 = vector.broadcast %cst_118 : f32 to vector<16x16xf32>
    %cst_119 = arith.constant 0.000000e+00 : f32
    %166 = vector.broadcast %cst_119 : f32 to vector<16x16xf32>
    %cst_120 = arith.constant 0.000000e+00 : f32
    %167 = vector.broadcast %cst_120 : f32 to vector<16x16xf32>
    %cst_121 = arith.constant 0.000000e+00 : f32
    %168 = vector.broadcast %cst_121 : f32 to vector<16x16xf32>
    %c1_122 = arith.constant 1 : index
    %c0_123 = arith.constant 0 : index
    %169 = memref.load %arg2[%c1_122, %c0_123] : memref<8x25xf32, #tpu.memory_space<smem>>
    %170 = vector.broadcast %169 : f32 to vector<16x16xf32>
    %171 = arith.mulf %170, %6 : vector<16x16xf32>
    %172 = arith.addf %165, %171 : vector<16x16xf32>
    %c1_124 = arith.constant 1 : index
    %c1_125 = arith.constant 1 : index
    %173 = memref.load %arg2[%c1_124, %c1_125] : memref<8x25xf32, #tpu.memory_space<smem>>
    %174 = vector.broadcast %173 : f32 to vector<16x16xf32>
    %175 = arith.mulf %174, %8 : vector<16x16xf32>
    %176 = arith.addf %166, %175 : vector<16x16xf32>
    %c1_126 = arith.constant 1 : index
    %c2_127 = arith.constant 2 : index
    %177 = memref.load %arg2[%c1_126, %c2_127] : memref<8x25xf32, #tpu.memory_space<smem>>
    %178 = vector.broadcast %177 : f32 to vector<16x16xf32>
    %179 = arith.mulf %178, %10 : vector<16x16xf32>
    %180 = arith.addf %167, %179 : vector<16x16xf32>
    %c1_128 = arith.constant 1 : index
    %c3_129 = arith.constant 3 : index
    %181 = memref.load %arg2[%c1_128, %c3_129] : memref<8x25xf32, #tpu.memory_space<smem>>
    %182 = vector.broadcast %181 : f32 to vector<16x16xf32>
    %183 = arith.mulf %182, %12 : vector<16x16xf32>
    %184 = arith.addf %168, %183 : vector<16x16xf32>
    %c1_130 = arith.constant 1 : index
    %c4_131 = arith.constant 4 : index
    %185 = memref.load %arg2[%c1_130, %c4_131] : memref<8x25xf32, #tpu.memory_space<smem>>
    %186 = vector.broadcast %185 : f32 to vector<16x16xf32>
    %187 = arith.mulf %186, %14 : vector<16x16xf32>
    %188 = arith.addf %172, %187 : vector<16x16xf32>
    %c1_132 = arith.constant 1 : index
    %c5_133 = arith.constant 5 : index
    %189 = memref.load %arg2[%c1_132, %c5_133] : memref<8x25xf32, #tpu.memory_space<smem>>
    %190 = vector.broadcast %189 : f32 to vector<16x16xf32>
    %191 = arith.mulf %190, %16 : vector<16x16xf32>
    %192 = arith.addf %176, %191 : vector<16x16xf32>
    %c1_134 = arith.constant 1 : index
    %c6_135 = arith.constant 6 : index
    %193 = memref.load %arg2[%c1_134, %c6_135] : memref<8x25xf32, #tpu.memory_space<smem>>
    %194 = vector.broadcast %193 : f32 to vector<16x16xf32>
    %195 = arith.mulf %194, %18 : vector<16x16xf32>
    %196 = arith.addf %180, %195 : vector<16x16xf32>
    %c1_136 = arith.constant 1 : index
    %c7_137 = arith.constant 7 : index
    %197 = memref.load %arg2[%c1_136, %c7_137] : memref<8x25xf32, #tpu.memory_space<smem>>
    %198 = vector.broadcast %197 : f32 to vector<16x16xf32>
    %199 = arith.mulf %198, %20 : vector<16x16xf32>
    %200 = arith.addf %184, %199 : vector<16x16xf32>
    %c1_138 = arith.constant 1 : index
    %c8_139 = arith.constant 8 : index
    %201 = memref.load %arg2[%c1_138, %c8_139] : memref<8x25xf32, #tpu.memory_space<smem>>
    %202 = vector.broadcast %201 : f32 to vector<16x16xf32>
    %203 = arith.mulf %202, %22 : vector<16x16xf32>
    %204 = arith.addf %188, %203 : vector<16x16xf32>
    %c1_140 = arith.constant 1 : index
    %c9_141 = arith.constant 9 : index
    %205 = memref.load %arg2[%c1_140, %c9_141] : memref<8x25xf32, #tpu.memory_space<smem>>
    %206 = vector.broadcast %205 : f32 to vector<16x16xf32>
    %207 = arith.mulf %206, %24 : vector<16x16xf32>
    %208 = arith.addf %192, %207 : vector<16x16xf32>
    %c1_142 = arith.constant 1 : index
    %c10_143 = arith.constant 10 : index
    %209 = memref.load %arg2[%c1_142, %c10_143] : memref<8x25xf32, #tpu.memory_space<smem>>
    %210 = vector.broadcast %209 : f32 to vector<16x16xf32>
    %211 = arith.mulf %210, %26 : vector<16x16xf32>
    %212 = arith.addf %196, %211 : vector<16x16xf32>
    %c1_144 = arith.constant 1 : index
    %c11_145 = arith.constant 11 : index
    %213 = memref.load %arg2[%c1_144, %c11_145] : memref<8x25xf32, #tpu.memory_space<smem>>
    %214 = vector.broadcast %213 : f32 to vector<16x16xf32>
    %215 = arith.mulf %214, %28 : vector<16x16xf32>
    %216 = arith.addf %200, %215 : vector<16x16xf32>
    %c1_146 = arith.constant 1 : index
    %c12_147 = arith.constant 12 : index
    %217 = memref.load %arg2[%c1_146, %c12_147] : memref<8x25xf32, #tpu.memory_space<smem>>
    %218 = vector.broadcast %217 : f32 to vector<16x16xf32>
    %219 = arith.mulf %218, %30 : vector<16x16xf32>
    %220 = arith.addf %204, %219 : vector<16x16xf32>
    %c1_148 = arith.constant 1 : index
    %c13_149 = arith.constant 13 : index
    %221 = memref.load %arg2[%c1_148, %c13_149] : memref<8x25xf32, #tpu.memory_space<smem>>
    %222 = vector.broadcast %221 : f32 to vector<16x16xf32>
    %223 = arith.mulf %222, %32 : vector<16x16xf32>
    %224 = arith.addf %208, %223 : vector<16x16xf32>
    %c1_150 = arith.constant 1 : index
    %c14_151 = arith.constant 14 : index
    %225 = memref.load %arg2[%c1_150, %c14_151] : memref<8x25xf32, #tpu.memory_space<smem>>
    %226 = vector.broadcast %225 : f32 to vector<16x16xf32>
    %227 = arith.mulf %226, %34 : vector<16x16xf32>
    %228 = arith.addf %212, %227 : vector<16x16xf32>
    %c1_152 = arith.constant 1 : index
    %c15_153 = arith.constant 15 : index
    %229 = memref.load %arg2[%c1_152, %c15_153] : memref<8x25xf32, #tpu.memory_space<smem>>
    %230 = vector.broadcast %229 : f32 to vector<16x16xf32>
    %231 = arith.mulf %230, %36 : vector<16x16xf32>
    %232 = arith.addf %216, %231 : vector<16x16xf32>
    %c1_154 = arith.constant 1 : index
    %c16_155 = arith.constant 16 : index
    %233 = memref.load %arg2[%c1_154, %c16_155] : memref<8x25xf32, #tpu.memory_space<smem>>
    %234 = vector.broadcast %233 : f32 to vector<16x16xf32>
    %235 = arith.mulf %234, %38 : vector<16x16xf32>
    %236 = arith.addf %220, %235 : vector<16x16xf32>
    %c1_156 = arith.constant 1 : index
    %c17_157 = arith.constant 17 : index
    %237 = memref.load %arg2[%c1_156, %c17_157] : memref<8x25xf32, #tpu.memory_space<smem>>
    %238 = vector.broadcast %237 : f32 to vector<16x16xf32>
    %239 = arith.mulf %238, %40 : vector<16x16xf32>
    %240 = arith.addf %224, %239 : vector<16x16xf32>
    %c1_158 = arith.constant 1 : index
    %c18_159 = arith.constant 18 : index
    %241 = memref.load %arg2[%c1_158, %c18_159] : memref<8x25xf32, #tpu.memory_space<smem>>
    %242 = vector.broadcast %241 : f32 to vector<16x16xf32>
    %243 = arith.mulf %242, %42 : vector<16x16xf32>
    %244 = arith.addf %228, %243 : vector<16x16xf32>
    %c1_160 = arith.constant 1 : index
    %c19_161 = arith.constant 19 : index
    %245 = memref.load %arg2[%c1_160, %c19_161] : memref<8x25xf32, #tpu.memory_space<smem>>
    %246 = vector.broadcast %245 : f32 to vector<16x16xf32>
    %247 = arith.mulf %246, %44 : vector<16x16xf32>
    %248 = arith.addf %232, %247 : vector<16x16xf32>
    %c1_162 = arith.constant 1 : index
    %c20_163 = arith.constant 20 : index
    %249 = memref.load %arg2[%c1_162, %c20_163] : memref<8x25xf32, #tpu.memory_space<smem>>
    %250 = vector.broadcast %249 : f32 to vector<16x16xf32>
    %251 = arith.mulf %250, %46 : vector<16x16xf32>
    %252 = arith.addf %236, %251 : vector<16x16xf32>
    %c1_164 = arith.constant 1 : index
    %c21_165 = arith.constant 21 : index
    %253 = memref.load %arg2[%c1_164, %c21_165] : memref<8x25xf32, #tpu.memory_space<smem>>
    %254 = vector.broadcast %253 : f32 to vector<16x16xf32>
    %255 = arith.mulf %254, %48 : vector<16x16xf32>
    %256 = arith.addf %240, %255 : vector<16x16xf32>
    %c1_166 = arith.constant 1 : index
    %c22_167 = arith.constant 22 : index
    %257 = memref.load %arg2[%c1_166, %c22_167] : memref<8x25xf32, #tpu.memory_space<smem>>
    %258 = vector.broadcast %257 : f32 to vector<16x16xf32>
    %259 = arith.mulf %258, %50 : vector<16x16xf32>
    %260 = arith.addf %244, %259 : vector<16x16xf32>
    %c1_168 = arith.constant 1 : index
    %c23_169 = arith.constant 23 : index
    %261 = memref.load %arg2[%c1_168, %c23_169] : memref<8x25xf32, #tpu.memory_space<smem>>
    %262 = vector.broadcast %261 : f32 to vector<16x16xf32>
    %263 = arith.mulf %262, %52 : vector<16x16xf32>
    %264 = arith.addf %248, %263 : vector<16x16xf32>
    %c1_170 = arith.constant 1 : index
    %c24_171 = arith.constant 24 : index
    %265 = memref.load %arg2[%c1_170, %c24_171] : memref<8x25xf32, #tpu.memory_space<smem>>
    %266 = vector.broadcast %265 : f32 to vector<16x16xf32>
    %267 = arith.mulf %266, %54 : vector<16x16xf32>
    %268 = arith.addf %252, %267 : vector<16x16xf32>
    %269 = arith.addf %268, %256 : vector<16x16xf32>
    %270 = arith.addf %260, %264 : vector<16x16xf32>
    %271 = arith.addf %269, %270 : vector<16x16xf32>
    %c0_172 = arith.constant 0 : index
    %c1_173 = arith.constant 1 : index
    %c0_174 = arith.constant 0 : index
    %c0_175 = arith.constant 0 : index
    %272 = vector.load %arg3[%c0_172, %c1_173, %c0_174, %c0_175] : memref<1x8x16x16xf32, #tpu.memory_space<vmem>>, vector<1x1x16x16xf32>
    %273 = vector.shape_cast %272 : vector<1x1x16x16xf32> to vector<16x16xf32>
    %274 = vector.shape_cast %271 : vector<16x16xf32> to vector<1x1x16x16xf32>
    tpu.vector_store %arg3[%c0_172, %c1_173, %c0_174, %c0_175], %274 {strides = array<i32>} : memref<1x8x16x16xf32, #tpu.memory_space<vmem>>, vector<1x1x16x16xf32>,
    %c1_176 = arith.constant 1 : index
    %c0_177 = arith.constant 0 : index
    %c0_178 = arith.constant 0 : index
    %275 = vector.load %arg4[%c1_176, %c0_177, %c0_178] : memref<4x20x20xf32, #tpu.memory_space<vmem>>, vector<1x16x16xf32>
    %276 = vector.shape_cast %275 : vector<1x16x16xf32> to vector<16x16xf32>
    %c1_179 = arith.constant 1 : index
    %c0_180 = arith.constant 0 : index
    %c1_181 = arith.constant 1 : index
    %277 = vector.load %arg4[%c1_179, %c0_180, %c1_181] : memref<4x20x20xf32, #tpu.memory_space<vmem>>, vector<1x16x16xf32>
    %278 = vector.shape_cast %277 : vector<1x16x16xf32> to vector<16x16xf32>
    %c1_182 = arith.constant 1 : index
    %c0_183 = arith.constant 0 : index
    %c2_184 = arith.constant 2 : index
    %279 = vector.load %arg4[%c1_182, %c0_183, %c2_184] : memref<4x20x20xf32, #tpu.memory_space<vmem>>, vector<1x16x16xf32>
    %280 = vector.shape_cast %279 : vector<1x16x16xf32> to vector<16x16xf32>
    %c1_185 = arith.constant 1 : index
    %c0_186 = arith.constant 0 : index
    %c3_187 = arith.constant 3 : index
    %281 = vector.load %arg4[%c1_185, %c0_186, %c3_187] : memref<4x20x20xf32, #tpu.memory_space<vmem>>, vector<1x16x16xf32>
    %282 = vector.shape_cast %281 : vector<1x16x16xf32> to vector<16x16xf32>
    %c1_188 = arith.constant 1 : index
    %c0_189 = arith.constant 0 : index
    %c4_190 = arith.constant 4 : index
    %283 = vector.load %arg4[%c1_188, %c0_189, %c4_190] : memref<4x20x20xf32, #tpu.memory_space<vmem>>, vector<1x16x16xf32>
    %284 = vector.shape_cast %283 : vector<1x16x16xf32> to vector<16x16xf32>
    %c1_191 = arith.constant 1 : index
    %c1_192 = arith.constant 1 : index
    %c0_193 = arith.constant 0 : index
    %285 = vector.load %arg4[%c1_191, %c1_192, %c0_193] : memref<4x20x20xf32, #tpu.memory_space<vmem>>, vector<1x16x16xf32>
    %286 = vector.shape_cast %285 : vector<1x16x16xf32> to vector<16x16xf32>
    %c1_194 = arith.constant 1 : index
    %c1_195 = arith.constant 1 : index
    %c1_196 = arith.constant 1 : index
    %287 = vector.load %arg4[%c1_194, %c1_195, %c1_196] : memref<4x20x20xf32, #tpu.memory_space<vmem>>, vector<1x16x16xf32>
    %288 = vector.shape_cast %287 : vector<1x16x16xf32> to vector<16x16xf32>
    %c1_197 = arith.constant 1 : index
    %c1_198 = arith.constant 1 : index
    %c2_199 = arith.constant 2 : index
    %289 = vector.load %arg4[%c1_197, %c1_198, %c2_199] : memref<4x20x20xf32, #tpu.memory_space<vmem>>, vector<1x16x16xf32>
    %290 = vector.shape_cast %289 : vector<1x16x16xf32> to vector<16x16xf32>
    %c1_200 = arith.constant 1 : index
    %c1_201 = arith.constant 1 : index
    %c3_202 = arith.constant 3 : index
    %291 = vector.load %arg4[%c1_200, %c1_201, %c3_202] : memref<4x20x20xf32, #tpu.memory_space<vmem>>, vector<1x16x16xf32>
    %292 = vector.shape_cast %291 : vector<1x16x16xf32> to vector<16x16xf32>
    %c1_203 = arith.constant 1 : index
    %c1_204 = arith.constant 1 : index
    %c4_205 = arith.constant 4 : index
    %293 = vector.load %arg4[%c1_203, %c1_204, %c4_205] : memref<4x20x20xf32, #tpu.memory_space<vmem>>, vector<1x16x16xf32>
    %294 = vector.shape_cast %293 : vector<1x16x16xf32> to vector<16x16xf32>
    %c1_206 = arith.constant 1 : index
    %c2_207 = arith.constant 2 : index
    %c0_208 = arith.constant 0 : index
    %295 = vector.load %arg4[%c1_206, %c2_207, %c0_208] : memref<4x20x20xf32, #tpu.memory_space<vmem>>, vector<1x16x16xf32>
    %296 = vector.shape_cast %295 : vector<1x16x16xf32> to vector<16x16xf32>
    %c1_209 = arith.constant 1 : index
    %c2_210 = arith.constant 2 : index
    %c1_211 = arith.constant 1 : index
    %297 = vector.load %arg4[%c1_209, %c2_210, %c1_211] : memref<4x20x20xf32, #tpu.memory_space<vmem>>, vector<1x16x16xf32>
    %298 = vector.shape_cast %297 : vector<1x16x16xf32> to vector<16x16xf32>
    %c1_212 = arith.constant 1 : index
    %c2_213 = arith.constant 2 : index
    %c2_214 = arith.constant 2 : index
    %299 = vector.load %arg4[%c1_212, %c2_213, %c2_214] : memref<4x20x20xf32, #tpu.memory_space<vmem>>, vector<1x16x16xf32>
    %300 = vector.shape_cast %299 : vector<1x16x16xf32> to vector<16x16xf32>
    %c1_215 = arith.constant 1 : index
    %c2_216 = arith.constant 2 : index
    %c3_217 = arith.constant 3 : index
    %301 = vector.load %arg4[%c1_215, %c2_216, %c3_217] : memref<4x20x20xf32, #tpu.memory_space<vmem>>, vector<1x16x16xf32>
    %302 = vector.shape_cast %301 : vector<1x16x16xf32> to vector<16x16xf32>
    %c1_218 = arith.constant 1 : index
    %c2_219 = arith.constant 2 : index
    %c4_220 = arith.constant 4 : index
    %303 = vector.load %arg4[%c1_218, %c2_219, %c4_220] : memref<4x20x20xf32, #tpu.memory_space<vmem>>, vector<1x16x16xf32>
    %304 = vector.shape_cast %303 : vector<1x16x16xf32> to vector<16x16xf32>
    %c1_221 = arith.constant 1 : index
    %c3_222 = arith.constant 3 : index
    %c0_223 = arith.constant 0 : index
    %305 = vector.load %arg4[%c1_221, %c3_222, %c0_223] : memref<4x20x20xf32, #tpu.memory_space<vmem>>, vector<1x16x16xf32>
    %306 = vector.shape_cast %305 : vector<1x16x16xf32> to vector<16x16xf32>
    %c1_224 = arith.constant 1 : index
    %c3_225 = arith.constant 3 : index
    %c1_226 = arith.constant 1 : index
    %307 = vector.load %arg4[%c1_224, %c3_225, %c1_226] : memref<4x20x20xf32, #tpu.memory_space<vmem>>, vector<1x16x16xf32>
    %308 = vector.shape_cast %307 : vector<1x16x16xf32> to vector<16x16xf32>
    %c1_227 = arith.constant 1 : index
    %c3_228 = arith.constant 3 : index
    %c2_229 = arith.constant 2 : index
    %309 = vector.load %arg4[%c1_227, %c3_228, %c2_229] : memref<4x20x20xf32, #tpu.memory_space<vmem>>, vector<1x16x16xf32>
    %310 = vector.shape_cast %309 : vector<1x16x16xf32> to vector<16x16xf32>
    %c1_230 = arith.constant 1 : index
    %c3_231 = arith.constant 3 : index
    %c3_232 = arith.constant 3 : index
    %311 = vector.load %arg4[%c1_230, %c3_231, %c3_232] : memref<4x20x20xf32, #tpu.memory_space<vmem>>, vector<1x16x16xf32>
    %312 = vector.shape_cast %311 : vector<1x16x16xf32> to vector<16x16xf32>
    %c1_233 = arith.constant 1 : index
    %c3_234 = arith.constant 3 : index
    %c4_235 = arith.constant 4 : index
    %313 = vector.load %arg4[%c1_233, %c3_234, %c4_235] : memref<4x20x20xf32, #tpu.memory_space<vmem>>, vector<1x16x16xf32>
    %314 = vector.shape_cast %313 : vector<1x16x16xf32> to vector<16x16xf32>
    %c1_236 = arith.constant 1 : index
    %c4_237 = arith.constant 4 : index
    %c0_238 = arith.constant 0 : index
    %315 = vector.load %arg4[%c1_236, %c4_237, %c0_238] : memref<4x20x20xf32, #tpu.memory_space<vmem>>, vector<1x16x16xf32>
    %316 = vector.shape_cast %315 : vector<1x16x16xf32> to vector<16x16xf32>
    %c1_239 = arith.constant 1 : index
    %c4_240 = arith.constant 4 : index
    %c1_241 = arith.constant 1 : index
    %317 = vector.load %arg4[%c1_239, %c4_240, %c1_241] : memref<4x20x20xf32, #tpu.memory_space<vmem>>, vector<1x16x16xf32>
    %318 = vector.shape_cast %317 : vector<1x16x16xf32> to vector<16x16xf32>
    %c1_242 = arith.constant 1 : index
    %c4_243 = arith.constant 4 : index
    %c2_244 = arith.constant 2 : index
    %319 = vector.load %arg4[%c1_242, %c4_243, %c2_244] : memref<4x20x20xf32, #tpu.memory_space<vmem>>, vector<1x16x16xf32>
    %320 = vector.shape_cast %319 : vector<1x16x16xf32> to vector<16x16xf32>
    %c1_245 = arith.constant 1 : index
    %c4_246 = arith.constant 4 : index
    %c3_247 = arith.constant 3 : index
    %321 = vector.load %arg4[%c1_245, %c4_246, %c3_247] : memref<4x20x20xf32, #tpu.memory_space<vmem>>, vector<1x16x16xf32>
    %322 = vector.shape_cast %321 : vector<1x16x16xf32> to vector<16x16xf32>
    %c1_248 = arith.constant 1 : index
    %c4_249 = arith.constant 4 : index
    %c4_250 = arith.constant 4 : index
    %323 = vector.load %arg4[%c1_248, %c4_249, %c4_250] : memref<4x20x20xf32, #tpu.memory_space<vmem>>, vector<1x16x16xf32>
    %324 = vector.shape_cast %323 : vector<1x16x16xf32> to vector<16x16xf32>
    %cst_251 = arith.constant 0.000000e+00 : f32
    %325 = vector.broadcast %cst_251 : f32 to vector<16x16xf32>
    %cst_252 = arith.constant 0.000000e+00 : f32
    %326 = vector.broadcast %cst_252 : f32 to vector<16x16xf32>
    %cst_253 = arith.constant 0.000000e+00 : f32
    %327 = vector.broadcast %cst_253 : f32 to vector<16x16xf32>
    %cst_254 = arith.constant 0.000000e+00 : f32
    %328 = vector.broadcast %cst_254 : f32 to vector<16x16xf32>
    %c2_255 = arith.constant 2 : index
    %c0_256 = arith.constant 0 : index
    %329 = memref.load %arg2[%c2_255, %c0_256] : memref<8x25xf32, #tpu.memory_space<smem>>
    %330 = vector.broadcast %329 : f32 to vector<16x16xf32>
    %331 = arith.mulf %330, %276 : vector<16x16xf32>
    %332 = arith.addf %325, %331 : vector<16x16xf32>
    %c2_257 = arith.constant 2 : index
    %c1_258 = arith.constant 1 : index
    %333 = memref.load %arg2[%c2_257, %c1_258] : memref<8x25xf32, #tpu.memory_space<smem>>
    %334 = vector.broadcast %333 : f32 to vector<16x16xf32>
    %335 = arith.mulf %334, %278 : vector<16x16xf32>
    %336 = arith.addf %326, %335 : vector<16x16xf32>
    %c2_259 = arith.constant 2 : index
    %c2_260 = arith.constant 2 : index
    %337 = memref.load %arg2[%c2_259, %c2_260] : memref<8x25xf32, #tpu.memory_space<smem>>
    %338 = vector.broadcast %337 : f32 to vector<16x16xf32>
    %339 = arith.mulf %338, %280 : vector<16x16xf32>
    %340 = arith.addf %327, %339 : vector<16x16xf32>
    %c2_261 = arith.constant 2 : index
    %c3_262 = arith.constant 3 : index
    %341 = memref.load %arg2[%c2_261, %c3_262] : memref<8x25xf32, #tpu.memory_space<smem>>
    %342 = vector.broadcast %341 : f32 to vector<16x16xf32>
    %343 = arith.mulf %342, %282 : vector<16x16xf32>
    %344 = arith.addf %328, %343 : vector<16x16xf32>
    %c2_263 = arith.constant 2 : index
    %c4_264 = arith.constant 4 : index
    %345 = memref.load %arg2[%c2_263, %c4_264] : memref<8x25xf32, #tpu.memory_space<smem>>
    %346 = vector.broadcast %345 : f32 to vector<16x16xf32>
    %347 = arith.mulf %346, %284 : vector<16x16xf32>
    %348 = arith.addf %332, %347 : vector<16x16xf32>
    %c2_265 = arith.constant 2 : index
    %c5_266 = arith.constant 5 : index
    %349 = memref.load %arg2[%c2_265, %c5_266] : memref<8x25xf32, #tpu.memory_space<smem>>
    %350 = vector.broadcast %349 : f32 to vector<16x16xf32>
    %351 = arith.mulf %350, %286 : vector<16x16xf32>
    %352 = arith.addf %336, %351 : vector<16x16xf32>
    %c2_267 = arith.constant 2 : index
    %c6_268 = arith.constant 6 : index
    %353 = memref.load %arg2[%c2_267, %c6_268] : memref<8x25xf32, #tpu.memory_space<smem>>
    %354 = vector.broadcast %353 : f32 to vector<16x16xf32>
    %355 = arith.mulf %354, %288 : vector<16x16xf32>
    %356 = arith.addf %340, %355 : vector<16x16xf32>
    %c2_269 = arith.constant 2 : index
    %c7_270 = arith.constant 7 : index
    %357 = memref.load %arg2[%c2_269, %c7_270] : memref<8x25xf32, #tpu.memory_space<smem>>
    %358 = vector.broadcast %357 : f32 to vector<16x16xf32>
    %359 = arith.mulf %358, %290 : vector<16x16xf32>
    %360 = arith.addf %344, %359 : vector<16x16xf32>
    %c2_271 = arith.constant 2 : index
    %c8_272 = arith.constant 8 : index
    %361 = memref.load %arg2[%c2_271, %c8_272] : memref<8x25xf32, #tpu.memory_space<smem>>
    %362 = vector.broadcast %361 : f32 to vector<16x16xf32>
    %363 = arith.mulf %362, %292 : vector<16x16xf32>
    %364 = arith.addf %348, %363 : vector<16x16xf32>
    %c2_273 = arith.constant 2 : index
    %c9_274 = arith.constant 9 : index
    %365 = memref.load %arg2[%c2_273, %c9_274] : memref<8x25xf32, #tpu.memory_space<smem>>
    %366 = vector.broadcast %365 : f32 to vector<16x16xf32>
    %367 = arith.mulf %366, %294 : vector<16x16xf32>
    %368 = arith.addf %352, %367 : vector<16x16xf32>
    %c2_275 = arith.constant 2 : index
    %c10_276 = arith.constant 10 : index
    %369 = memref.load %arg2[%c2_275, %c10_276] : memref<8x25xf32, #tpu.memory_space<smem>>
    %370 = vector.broadcast %369 : f32 to vector<16x16xf32>
    %371 = arith.mulf %370, %296 : vector<16x16xf32>
    %372 = arith.addf %356, %371 : vector<16x16xf32>
    %c2_277 = arith.constant 2 : index
    %c11_278 = arith.constant 11 : index
    %373 = memref.load %arg2[%c2_277, %c11_278] : memref<8x25xf32, #tpu.memory_space<smem>>
    %374 = vector.broadcast %373 : f32 to vector<16x16xf32>
    %375 = arith.mulf %374, %298 : vector<16x16xf32>
    %376 = arith.addf %360, %375 : vector<16x16xf32>
    %c2_279 = arith.constant 2 : index
    %c12_280 = arith.constant 12 : index
    %377 = memref.load %arg2[%c2_279, %c12_280] : memref<8x25xf32, #tpu.memory_space<smem>>
    %378 = vector.broadcast %377 : f32 to vector<16x16xf32>
    %379 = arith.mulf %378, %300 : vector<16x16xf32>
    %380 = arith.addf %364, %379 : vector<16x16xf32>
    %c2_281 = arith.constant 2 : index
    %c13_282 = arith.constant 13 : index
    %381 = memref.load %arg2[%c2_281, %c13_282] : memref<8x25xf32, #tpu.memory_space<smem>>
    %382 = vector.broadcast %381 : f32 to vector<16x16xf32>
    %383 = arith.mulf %382, %302 : vector<16x16xf32>
    %384 = arith.addf %368, %383 : vector<16x16xf32>
    %c2_283 = arith.constant 2 : index
    %c14_284 = arith.constant 14 : index
    %385 = memref.load %arg2[%c2_283, %c14_284] : memref<8x25xf32, #tpu.memory_space<smem>>
    %386 = vector.broadcast %385 : f32 to vector<16x16xf32>
    %387 = arith.mulf %386, %304 : vector<16x16xf32>
    %388 = arith.addf %372, %387 : vector<16x16xf32>
    %c2_285 = arith.constant 2 : index
    %c15_286 = arith.constant 15 : index
    %389 = memref.load %arg2[%c2_285, %c15_286] : memref<8x25xf32, #tpu.memory_space<smem>>
    %390 = vector.broadcast %389 : f32 to vector<16x16xf32>
    %391 = arith.mulf %390, %306 : vector<16x16xf32>
    %392 = arith.addf %376, %391 : vector<16x16xf32>
    %c2_287 = arith.constant 2 : index
    %c16_288 = arith.constant 16 : index
    %393 = memref.load %arg2[%c2_287, %c16_288] : memref<8x25xf32, #tpu.memory_space<smem>>
    %394 = vector.broadcast %393 : f32 to vector<16x16xf32>
    %395 = arith.mulf %394, %308 : vector<16x16xf32>
    %396 = arith.addf %380, %395 : vector<16x16xf32>
    %c2_289 = arith.constant 2 : index
    %c17_290 = arith.constant 17 : index
    %397 = memref.load %arg2[%c2_289, %c17_290] : memref<8x25xf32, #tpu.memory_space<smem>>
    %398 = vector.broadcast %397 : f32 to vector<16x16xf32>
    %399 = arith.mulf %398, %310 : vector<16x16xf32>
    %400 = arith.addf %384, %399 : vector<16x16xf32>
    %c2_291 = arith.constant 2 : index
    %c18_292 = arith.constant 18 : index
    %401 = memref.load %arg2[%c2_291, %c18_292] : memref<8x25xf32, #tpu.memory_space<smem>>
    %402 = vector.broadcast %401 : f32 to vector<16x16xf32>
    %403 = arith.mulf %402, %312 : vector<16x16xf32>
    %404 = arith.addf %388, %403 : vector<16x16xf32>
    %c2_293 = arith.constant 2 : index
    %c19_294 = arith.constant 19 : index
    %405 = memref.load %arg2[%c2_293, %c19_294] : memref<8x25xf32, #tpu.memory_space<smem>>
    %406 = vector.broadcast %405 : f32 to vector<16x16xf32>
    %407 = arith.mulf %406, %314 : vector<16x16xf32>
    %408 = arith.addf %392, %407 : vector<16x16xf32>
    %c2_295 = arith.constant 2 : index
    %c20_296 = arith.constant 20 : index
    %409 = memref.load %arg2[%c2_295, %c20_296] : memref<8x25xf32, #tpu.memory_space<smem>>
    %410 = vector.broadcast %409 : f32 to vector<16x16xf32>
    %411 = arith.mulf %410, %316 : vector<16x16xf32>
    %412 = arith.addf %396, %411 : vector<16x16xf32>
    %c2_297 = arith.constant 2 : index
    %c21_298 = arith.constant 21 : index
    %413 = memref.load %arg2[%c2_297, %c21_298] : memref<8x25xf32, #tpu.memory_space<smem>>
    %414 = vector.broadcast %413 : f32 to vector<16x16xf32>
    %415 = arith.mulf %414, %318 : vector<16x16xf32>
    %416 = arith.addf %400, %415 : vector<16x16xf32>
    %c2_299 = arith.constant 2 : index
    %c22_300 = arith.constant 22 : index
    %417 = memref.load %arg2[%c2_299, %c22_300] : memref<8x25xf32, #tpu.memory_space<smem>>
    %418 = vector.broadcast %417 : f32 to vector<16x16xf32>
    %419 = arith.mulf %418, %320 : vector<16x16xf32>
    %420 = arith.addf %404, %419 : vector<16x16xf32>
    %c2_301 = arith.constant 2 : index
    %c23_302 = arith.constant 23 : index
    %421 = memref.load %arg2[%c2_301, %c23_302] : memref<8x25xf32, #tpu.memory_space<smem>>
    %422 = vector.broadcast %421 : f32 to vector<16x16xf32>
    %423 = arith.mulf %422, %322 : vector<16x16xf32>
    %424 = arith.addf %408, %423 : vector<16x16xf32>
    %c2_303 = arith.constant 2 : index
    %c24_304 = arith.constant 24 : index
    %425 = memref.load %arg2[%c2_303, %c24_304] : memref<8x25xf32, #tpu.memory_space<smem>>
    %426 = vector.broadcast %425 : f32 to vector<16x16xf32>
    %427 = arith.mulf %426, %324 : vector<16x16xf32>
    %428 = arith.addf %412, %427 : vector<16x16xf32>
    %429 = arith.addf %428, %416 : vector<16x16xf32>
    %430 = arith.addf %420, %424 : vector<16x16xf32>
    %431 = arith.addf %429, %430 : vector<16x16xf32>
    %c0_305 = arith.constant 0 : index
    %c2_306 = arith.constant 2 : index
    %c0_307 = arith.constant 0 : index
    %c0_308 = arith.constant 0 : index
    %432 = vector.load %arg3[%c0_305, %c2_306, %c0_307, %c0_308] : memref<1x8x16x16xf32, #tpu.memory_space<vmem>>, vector<1x1x16x16xf32>
    %433 = vector.shape_cast %432 : vector<1x1x16x16xf32> to vector<16x16xf32>
    %434 = vector.shape_cast %431 : vector<16x16xf32> to vector<1x1x16x16xf32>
    tpu.vector_store %arg3[%c0_305, %c2_306, %c0_307, %c0_308], %434 {strides = array<i32>} : memref<1x8x16x16xf32, #tpu.memory_space<vmem>>, vector<1x1x16x16xf32>,
    %cst_309 = arith.constant 0.000000e+00 : f32
    %435 = vector.broadcast %cst_309 : f32 to vector<16x16xf32>
    %cst_310 = arith.constant 0.000000e+00 : f32
    %436 = vector.broadcast %cst_310 : f32 to vector<16x16xf32>
    %cst_311 = arith.constant 0.000000e+00 : f32
    %437 = vector.broadcast %cst_311 : f32 to vector<16x16xf32>
    %cst_312 = arith.constant 0.000000e+00 : f32
    %438 = vector.broadcast %cst_312 : f32 to vector<16x16xf32>
    %c3_313 = arith.constant 3 : index
    %c0_314 = arith.constant 0 : index
    %439 = memref.load %arg2[%c3_313, %c0_314] : memref<8x25xf32, #tpu.memory_space<smem>>
    %440 = vector.broadcast %439 : f32 to vector<16x16xf32>
    %441 = arith.mulf %440, %276 : vector<16x16xf32>
    %442 = arith.addf %435, %441 : vector<16x16xf32>
    %c3_315 = arith.constant 3 : index
    %c1_316 = arith.constant 1 : index
    %443 = memref.load %arg2[%c3_315, %c1_316] : memref<8x25xf32, #tpu.memory_space<smem>>
    %444 = vector.broadcast %443 : f32 to vector<16x16xf32>
    %445 = arith.mulf %444, %278 : vector<16x16xf32>
    %446 = arith.addf %436, %445 : vector<16x16xf32>
    %c3_317 = arith.constant 3 : index
    %c2_318 = arith.constant 2 : index
    %447 = memref.load %arg2[%c3_317, %c2_318] : memref<8x25xf32, #tpu.memory_space<smem>>
    %448 = vector.broadcast %447 : f32 to vector<16x16xf32>
    %449 = arith.mulf %448, %280 : vector<16x16xf32>
    %450 = arith.addf %437, %449 : vector<16x16xf32>
    %c3_319 = arith.constant 3 : index
    %c3_320 = arith.constant 3 : index
    %451 = memref.load %arg2[%c3_319, %c3_320] : memref<8x25xf32, #tpu.memory_space<smem>>
    %452 = vector.broadcast %451 : f32 to vector<16x16xf32>
    %453 = arith.mulf %452, %282 : vector<16x16xf32>
    %454 = arith.addf %438, %453 : vector<16x16xf32>
    %c3_321 = arith.constant 3 : index
    %c4_322 = arith.constant 4 : index
    %455 = memref.load %arg2[%c3_321, %c4_322] : memref<8x25xf32, #tpu.memory_space<smem>>
    %456 = vector.broadcast %455 : f32 to vector<16x16xf32>
    %457 = arith.mulf %456, %284 : vector<16x16xf32>
    %458 = arith.addf %442, %457 : vector<16x16xf32>
    %c3_323 = arith.constant 3 : index
    %c5_324 = arith.constant 5 : index
    %459 = memref.load %arg2[%c3_323, %c5_324] : memref<8x25xf32, #tpu.memory_space<smem>>
    %460 = vector.broadcast %459 : f32 to vector<16x16xf32>
    %461 = arith.mulf %460, %286 : vector<16x16xf32>
    %462 = arith.addf %446, %461 : vector<16x16xf32>
    %c3_325 = arith.constant 3 : index
    %c6_326 = arith.constant 6 : index
    %463 = memref.load %arg2[%c3_325, %c6_326] : memref<8x25xf32, #tpu.memory_space<smem>>
    %464 = vector.broadcast %463 : f32 to vector<16x16xf32>
    %465 = arith.mulf %464, %288 : vector<16x16xf32>
    %466 = arith.addf %450, %465 : vector<16x16xf32>
    %c3_327 = arith.constant 3 : index
    %c7_328 = arith.constant 7 : index
    %467 = memref.load %arg2[%c3_327, %c7_328] : memref<8x25xf32, #tpu.memory_space<smem>>
    %468 = vector.broadcast %467 : f32 to vector<16x16xf32>
    %469 = arith.mulf %468, %290 : vector<16x16xf32>
    %470 = arith.addf %454, %469 : vector<16x16xf32>
    %c3_329 = arith.constant 3 : index
    %c8_330 = arith.constant 8 : index
    %471 = memref.load %arg2[%c3_329, %c8_330] : memref<8x25xf32, #tpu.memory_space<smem>>
    %472 = vector.broadcast %471 : f32 to vector<16x16xf32>
    %473 = arith.mulf %472, %292 : vector<16x16xf32>
    %474 = arith.addf %458, %473 : vector<16x16xf32>
    %c3_331 = arith.constant 3 : index
    %c9_332 = arith.constant 9 : index
    %475 = memref.load %arg2[%c3_331, %c9_332] : memref<8x25xf32, #tpu.memory_space<smem>>
    %476 = vector.broadcast %475 : f32 to vector<16x16xf32>
    %477 = arith.mulf %476, %294 : vector<16x16xf32>
    %478 = arith.addf %462, %477 : vector<16x16xf32>
    %c3_333 = arith.constant 3 : index
    %c10_334 = arith.constant 10 : index
    %479 = memref.load %arg2[%c3_333, %c10_334] : memref<8x25xf32, #tpu.memory_space<smem>>
    %480 = vector.broadcast %479 : f32 to vector<16x16xf32>
    %481 = arith.mulf %480, %296 : vector<16x16xf32>
    %482 = arith.addf %466, %481 : vector<16x16xf32>
    %c3_335 = arith.constant 3 : index
    %c11_336 = arith.constant 11 : index
    %483 = memref.load %arg2[%c3_335, %c11_336] : memref<8x25xf32, #tpu.memory_space<smem>>
    %484 = vector.broadcast %483 : f32 to vector<16x16xf32>
    %485 = arith.mulf %484, %298 : vector<16x16xf32>
    %486 = arith.addf %470, %485 : vector<16x16xf32>
    %c3_337 = arith.constant 3 : index
    %c12_338 = arith.constant 12 : index
    %487 = memref.load %arg2[%c3_337, %c12_338] : memref<8x25xf32, #tpu.memory_space<smem>>
    %488 = vector.broadcast %487 : f32 to vector<16x16xf32>
    %489 = arith.mulf %488, %300 : vector<16x16xf32>
    %490 = arith.addf %474, %489 : vector<16x16xf32>
    %c3_339 = arith.constant 3 : index
    %c13_340 = arith.constant 13 : index
    %491 = memref.load %arg2[%c3_339, %c13_340] : memref<8x25xf32, #tpu.memory_space<smem>>
    %492 = vector.broadcast %491 : f32 to vector<16x16xf32>
    %493 = arith.mulf %492, %302 : vector<16x16xf32>
    %494 = arith.addf %478, %493 : vector<16x16xf32>
    %c3_341 = arith.constant 3 : index
    %c14_342 = arith.constant 14 : index
    %495 = memref.load %arg2[%c3_341, %c14_342] : memref<8x25xf32, #tpu.memory_space<smem>>
    %496 = vector.broadcast %495 : f32 to vector<16x16xf32>
    %497 = arith.mulf %496, %304 : vector<16x16xf32>
    %498 = arith.addf %482, %497 : vector<16x16xf32>
    %c3_343 = arith.constant 3 : index
    %c15_344 = arith.constant 15 : index
    %499 = memref.load %arg2[%c3_343, %c15_344] : memref<8x25xf32, #tpu.memory_space<smem>>
    %500 = vector.broadcast %499 : f32 to vector<16x16xf32>
    %501 = arith.mulf %500, %306 : vector<16x16xf32>
    %502 = arith.addf %486, %501 : vector<16x16xf32>
    %c3_345 = arith.constant 3 : index
    %c16_346 = arith.constant 16 : index
    %503 = memref.load %arg2[%c3_345, %c16_346] : memref<8x25xf32, #tpu.memory_space<smem>>
    %504 = vector.broadcast %503 : f32 to vector<16x16xf32>
    %505 = arith.mulf %504, %308 : vector<16x16xf32>
    %506 = arith.addf %490, %505 : vector<16x16xf32>
    %c3_347 = arith.constant 3 : index
    %c17_348 = arith.constant 17 : index
    %507 = memref.load %arg2[%c3_347, %c17_348] : memref<8x25xf32, #tpu.memory_space<smem>>
    %508 = vector.broadcast %507 : f32 to vector<16x16xf32>
    %509 = arith.mulf %508, %310 : vector<16x16xf32>
    %510 = arith.addf %494, %509 : vector<16x16xf32>
    %c3_349 = arith.constant 3 : index
    %c18_350 = arith.constant 18 : index
    %511 = memref.load %arg2[%c3_349, %c18_350] : memref<8x25xf32, #tpu.memory_space<smem>>
    %512 = vector.broadcast %511 : f32 to vector<16x16xf32>
    %513 = arith.mulf %512, %312 : vector<16x16xf32>
    %514 = arith.addf %498, %513 : vector<16x16xf32>
    %c3_351 = arith.constant 3 : index
    %c19_352 = arith.constant 19 : index
    %515 = memref.load %arg2[%c3_351, %c19_352] : memref<8x25xf32, #tpu.memory_space<smem>>
    %516 = vector.broadcast %515 : f32 to vector<16x16xf32>
    %517 = arith.mulf %516, %314 : vector<16x16xf32>
    %518 = arith.addf %502, %517 : vector<16x16xf32>
    %c3_353 = arith.constant 3 : index
    %c20_354 = arith.constant 20 : index
    %519 = memref.load %arg2[%c3_353, %c20_354] : memref<8x25xf32, #tpu.memory_space<smem>>
    %520 = vector.broadcast %519 : f32 to vector<16x16xf32>
    %521 = arith.mulf %520, %316 : vector<16x16xf32>
    %522 = arith.addf %506, %521 : vector<16x16xf32>
    %c3_355 = arith.constant 3 : index
    %c21_356 = arith.constant 21 : index
    %523 = memref.load %arg2[%c3_355, %c21_356] : memref<8x25xf32, #tpu.memory_space<smem>>
    %524 = vector.broadcast %523 : f32 to vector<16x16xf32>
    %525 = arith.mulf %524, %318 : vector<16x16xf32>
    %526 = arith.addf %510, %525 : vector<16x16xf32>
    %c3_357 = arith.constant 3 : index
    %c22_358 = arith.constant 22 : index
    %527 = memref.load %arg2[%c3_357, %c22_358] : memref<8x25xf32, #tpu.memory_space<smem>>
    %528 = vector.broadcast %527 : f32 to vector<16x16xf32>
    %529 = arith.mulf %528, %320 : vector<16x16xf32>
    %530 = arith.addf %514, %529 : vector<16x16xf32>
    %c3_359 = arith.constant 3 : index
    %c23_360 = arith.constant 23 : index
    %531 = memref.load %arg2[%c3_359, %c23_360] : memref<8x25xf32, #tpu.memory_space<smem>>
    %532 = vector.broadcast %531 : f32 to vector<16x16xf32>
    %533 = arith.mulf %532, %322 : vector<16x16xf32>
    %534 = arith.addf %518, %533 : vector<16x16xf32>
    %c3_361 = arith.constant 3 : index
    %c24_362 = arith.constant 24 : index
    %535 = memref.load %arg2[%c3_361, %c24_362] : memref<8x25xf32, #tpu.memory_space<smem>>
    %536 = vector.broadcast %535 : f32 to vector<16x16xf32>
    %537 = arith.mulf %536, %324 : vector<16x16xf32>
    %538 = arith.addf %522, %537 : vector<16x16xf32>
    %539 = arith.addf %538, %526 : vector<16x16xf32>
    %540 = arith.addf %530, %534 : vector<16x16xf32>
    %541 = arith.addf %539, %540 : vector<16x16xf32>
    %c0_363 = arith.constant 0 : index
    %c3_364 = arith.constant 3 : index
    %c0_365 = arith.constant 0 : index
    %c0_366 = arith.constant 0 : index
    %542 = vector.load %arg3[%c0_363, %c3_364, %c0_365, %c0_366] : memref<1x8x16x16xf32, #tpu.memory_space<vmem>>, vector<1x1x16x16xf32>
    %543 = vector.shape_cast %542 : vector<1x1x16x16xf32> to vector<16x16xf32>
    %544 = vector.shape_cast %541 : vector<16x16xf32> to vector<1x1x16x16xf32>
    tpu.vector_store %arg3[%c0_363, %c3_364, %c0_365, %c0_366], %544 {strides = array<i32>} : memref<1x8x16x16xf32, #tpu.memory_space<vmem>>, vector<1x1x16x16xf32>,
    %c2_367 = arith.constant 2 : index
    %c0_368 = arith.constant 0 : index
    %c0_369 = arith.constant 0 : index
    %545 = vector.load %arg4[%c2_367, %c0_368, %c0_369] : memref<4x20x20xf32, #tpu.memory_space<vmem>>, vector<1x16x16xf32>
    %546 = vector.shape_cast %545 : vector<1x16x16xf32> to vector<16x16xf32>
    %c2_370 = arith.constant 2 : index
    %c0_371 = arith.constant 0 : index
    %c1_372 = arith.constant 1 : index
    %547 = vector.load %arg4[%c2_370, %c0_371, %c1_372] : memref<4x20x20xf32, #tpu.memory_space<vmem>>, vector<1x16x16xf32>
    %548 = vector.shape_cast %547 : vector<1x16x16xf32> to vector<16x16xf32>
    %c2_373 = arith.constant 2 : index
    %c0_374 = arith.constant 0 : index
    %c2_375 = arith.constant 2 : index
    %549 = vector.load %arg4[%c2_373, %c0_374, %c2_375] : memref<4x20x20xf32, #tpu.memory_space<vmem>>, vector<1x16x16xf32>
    %550 = vector.shape_cast %549 : vector<1x16x16xf32> to vector<16x16xf32>
    %c2_376 = arith.constant 2 : index
    %c0_377 = arith.constant 0 : index
    %c3_378 = arith.constant 3 : index
    %551 = vector.load %arg4[%c2_376, %c0_377, %c3_378] : memref<4x20x20xf32, #tpu.memory_space<vmem>>, vector<1x16x16xf32>
    %552 = vector.shape_cast %551 : vector<1x16x16xf32> to vector<16x16xf32>
    %c2_379 = arith.constant 2 : index
    %c0_380 = arith.constant 0 : index
    %c4_381 = arith.constant 4 : index
    %553 = vector.load %arg4[%c2_379, %c0_380, %c4_381] : memref<4x20x20xf32, #tpu.memory_space<vmem>>, vector<1x16x16xf32>
    %554 = vector.shape_cast %553 : vector<1x16x16xf32> to vector<16x16xf32>
    %c2_382 = arith.constant 2 : index
    %c1_383 = arith.constant 1 : index
    %c0_384 = arith.constant 0 : index
    %555 = vector.load %arg4[%c2_382, %c1_383, %c0_384] : memref<4x20x20xf32, #tpu.memory_space<vmem>>, vector<1x16x16xf32>
    %556 = vector.shape_cast %555 : vector<1x16x16xf32> to vector<16x16xf32>
    %c2_385 = arith.constant 2 : index
    %c1_386 = arith.constant 1 : index
    %c1_387 = arith.constant 1 : index
    %557 = vector.load %arg4[%c2_385, %c1_386, %c1_387] : memref<4x20x20xf32, #tpu.memory_space<vmem>>, vector<1x16x16xf32>
    %558 = vector.shape_cast %557 : vector<1x16x16xf32> to vector<16x16xf32>
    %c2_388 = arith.constant 2 : index
    %c1_389 = arith.constant 1 : index
    %c2_390 = arith.constant 2 : index
    %559 = vector.load %arg4[%c2_388, %c1_389, %c2_390] : memref<4x20x20xf32, #tpu.memory_space<vmem>>, vector<1x16x16xf32>
    %560 = vector.shape_cast %559 : vector<1x16x16xf32> to vector<16x16xf32>
    %c2_391 = arith.constant 2 : index
    %c1_392 = arith.constant 1 : index
    %c3_393 = arith.constant 3 : index
    %561 = vector.load %arg4[%c2_391, %c1_392, %c3_393] : memref<4x20x20xf32, #tpu.memory_space<vmem>>, vector<1x16x16xf32>
    %562 = vector.shape_cast %561 : vector<1x16x16xf32> to vector<16x16xf32>
    %c2_394 = arith.constant 2 : index
    %c1_395 = arith.constant 1 : index
    %c4_396 = arith.constant 4 : index
    %563 = vector.load %arg4[%c2_394, %c1_395, %c4_396] : memref<4x20x20xf32, #tpu.memory_space<vmem>>, vector<1x16x16xf32>
    %564 = vector.shape_cast %563 : vector<1x16x16xf32> to vector<16x16xf32>
    %c2_397 = arith.constant 2 : index
    %c2_398 = arith.constant 2 : index
    %c0_399 = arith.constant 0 : index
    %565 = vector.load %arg4[%c2_397, %c2_398, %c0_399] : memref<4x20x20xf32, #tpu.memory_space<vmem>>, vector<1x16x16xf32>
    %566 = vector.shape_cast %565 : vector<1x16x16xf32> to vector<16x16xf32>
    %c2_400 = arith.constant 2 : index
    %c2_401 = arith.constant 2 : index
    %c1_402 = arith.constant 1 : index
    %567 = vector.load %arg4[%c2_400, %c2_401, %c1_402] : memref<4x20x20xf32, #tpu.memory_space<vmem>>, vector<1x16x16xf32>
    %568 = vector.shape_cast %567 : vector<1x16x16xf32> to vector<16x16xf32>
    %c2_403 = arith.constant 2 : index
    %c2_404 = arith.constant 2 : index
    %c2_405 = arith.constant 2 : index
    %569 = vector.load %arg4[%c2_403, %c2_404, %c2_405] : memref<4x20x20xf32, #tpu.memory_space<vmem>>, vector<1x16x16xf32>
    %570 = vector.shape_cast %569 : vector<1x16x16xf32> to vector<16x16xf32>
    %c2_406 = arith.constant 2 : index
    %c2_407 = arith.constant 2 : index
    %c3_408 = arith.constant 3 : index
    %571 = vector.load %arg4[%c2_406, %c2_407, %c3_408] : memref<4x20x20xf32, #tpu.memory_space<vmem>>, vector<1x16x16xf32>
    %572 = vector.shape_cast %571 : vector<1x16x16xf32> to vector<16x16xf32>
    %c2_409 = arith.constant 2 : index
    %c2_410 = arith.constant 2 : index
    %c4_411 = arith.constant 4 : index
    %573 = vector.load %arg4[%c2_409, %c2_410, %c4_411] : memref<4x20x20xf32, #tpu.memory_space<vmem>>, vector<1x16x16xf32>
    %574 = vector.shape_cast %573 : vector<1x16x16xf32> to vector<16x16xf32>
    %c2_412 = arith.constant 2 : index
    %c3_413 = arith.constant 3 : index
    %c0_414 = arith.constant 0 : index
    %575 = vector.load %arg4[%c2_412, %c3_413, %c0_414] : memref<4x20x20xf32, #tpu.memory_space<vmem>>, vector<1x16x16xf32>
    %576 = vector.shape_cast %575 : vector<1x16x16xf32> to vector<16x16xf32>
    %c2_415 = arith.constant 2 : index
    %c3_416 = arith.constant 3 : index
    %c1_417 = arith.constant 1 : index
    %577 = vector.load %arg4[%c2_415, %c3_416, %c1_417] : memref<4x20x20xf32, #tpu.memory_space<vmem>>, vector<1x16x16xf32>
    %578 = vector.shape_cast %577 : vector<1x16x16xf32> to vector<16x16xf32>
    %c2_418 = arith.constant 2 : index
    %c3_419 = arith.constant 3 : index
    %c2_420 = arith.constant 2 : index
    %579 = vector.load %arg4[%c2_418, %c3_419, %c2_420] : memref<4x20x20xf32, #tpu.memory_space<vmem>>, vector<1x16x16xf32>
    %580 = vector.shape_cast %579 : vector<1x16x16xf32> to vector<16x16xf32>
    %c2_421 = arith.constant 2 : index
    %c3_422 = arith.constant 3 : index
    %c3_423 = arith.constant 3 : index
    %581 = vector.load %arg4[%c2_421, %c3_422, %c3_423] : memref<4x20x20xf32, #tpu.memory_space<vmem>>, vector<1x16x16xf32>
    %582 = vector.shape_cast %581 : vector<1x16x16xf32> to vector<16x16xf32>
    %c2_424 = arith.constant 2 : index
    %c3_425 = arith.constant 3 : index
    %c4_426 = arith.constant 4 : index
    %583 = vector.load %arg4[%c2_424, %c3_425, %c4_426] : memref<4x20x20xf32, #tpu.memory_space<vmem>>, vector<1x16x16xf32>
    %584 = vector.shape_cast %583 : vector<1x16x16xf32> to vector<16x16xf32>
    %c2_427 = arith.constant 2 : index
    %c4_428 = arith.constant 4 : index
    %c0_429 = arith.constant 0 : index
    %585 = vector.load %arg4[%c2_427, %c4_428, %c0_429] : memref<4x20x20xf32, #tpu.memory_space<vmem>>, vector<1x16x16xf32>
    %586 = vector.shape_cast %585 : vector<1x16x16xf32> to vector<16x16xf32>
    %c2_430 = arith.constant 2 : index
    %c4_431 = arith.constant 4 : index
    %c1_432 = arith.constant 1 : index
    %587 = vector.load %arg4[%c2_430, %c4_431, %c1_432] : memref<4x20x20xf32, #tpu.memory_space<vmem>>, vector<1x16x16xf32>
    %588 = vector.shape_cast %587 : vector<1x16x16xf32> to vector<16x16xf32>
    %c2_433 = arith.constant 2 : index
    %c4_434 = arith.constant 4 : index
    %c2_435 = arith.constant 2 : index
    %589 = vector.load %arg4[%c2_433, %c4_434, %c2_435] : memref<4x20x20xf32, #tpu.memory_space<vmem>>, vector<1x16x16xf32>
    %590 = vector.shape_cast %589 : vector<1x16x16xf32> to vector<16x16xf32>
    %c2_436 = arith.constant 2 : index
    %c4_437 = arith.constant 4 : index
    %c3_438 = arith.constant 3 : index
    %591 = vector.load %arg4[%c2_436, %c4_437, %c3_438] : memref<4x20x20xf32, #tpu.memory_space<vmem>>, vector<1x16x16xf32>
    %592 = vector.shape_cast %591 : vector<1x16x16xf32> to vector<16x16xf32>
    %c2_439 = arith.constant 2 : index
    %c4_440 = arith.constant 4 : index
    %c4_441 = arith.constant 4 : index
    %593 = vector.load %arg4[%c2_439, %c4_440, %c4_441] : memref<4x20x20xf32, #tpu.memory_space<vmem>>, vector<1x16x16xf32>
    %594 = vector.shape_cast %593 : vector<1x16x16xf32> to vector<16x16xf32>
    %cst_442 = arith.constant 0.000000e+00 : f32
    %595 = vector.broadcast %cst_442 : f32 to vector<16x16xf32>
    %cst_443 = arith.constant 0.000000e+00 : f32
    %596 = vector.broadcast %cst_443 : f32 to vector<16x16xf32>
    %cst_444 = arith.constant 0.000000e+00 : f32
    %597 = vector.broadcast %cst_444 : f32 to vector<16x16xf32>
    %cst_445 = arith.constant 0.000000e+00 : f32
    %598 = vector.broadcast %cst_445 : f32 to vector<16x16xf32>
    %c4_446 = arith.constant 4 : index
    %c0_447 = arith.constant 0 : index
    %599 = memref.load %arg2[%c4_446, %c0_447] : memref<8x25xf32, #tpu.memory_space<smem>>
    %600 = vector.broadcast %599 : f32 to vector<16x16xf32>
    %601 = arith.mulf %600, %546 : vector<16x16xf32>
    %602 = arith.addf %595, %601 : vector<16x16xf32>
    %c4_448 = arith.constant 4 : index
    %c1_449 = arith.constant 1 : index
    %603 = memref.load %arg2[%c4_448, %c1_449] : memref<8x25xf32, #tpu.memory_space<smem>>
    %604 = vector.broadcast %603 : f32 to vector<16x16xf32>
    %605 = arith.mulf %604, %548 : vector<16x16xf32>
    %606 = arith.addf %596, %605 : vector<16x16xf32>
    %c4_450 = arith.constant 4 : index
    %c2_451 = arith.constant 2 : index
    %607 = memref.load %arg2[%c4_450, %c2_451] : memref<8x25xf32, #tpu.memory_space<smem>>
    %608 = vector.broadcast %607 : f32 to vector<16x16xf32>
    %609 = arith.mulf %608, %550 : vector<16x16xf32>
    %610 = arith.addf %597, %609 : vector<16x16xf32>
    %c4_452 = arith.constant 4 : index
    %c3_453 = arith.constant 3 : index
    %611 = memref.load %arg2[%c4_452, %c3_453] : memref<8x25xf32, #tpu.memory_space<smem>>
    %612 = vector.broadcast %611 : f32 to vector<16x16xf32>
    %613 = arith.mulf %612, %552 : vector<16x16xf32>
    %614 = arith.addf %598, %613 : vector<16x16xf32>
    %c4_454 = arith.constant 4 : index
    %c4_455 = arith.constant 4 : index
    %615 = memref.load %arg2[%c4_454, %c4_455] : memref<8x25xf32, #tpu.memory_space<smem>>
    %616 = vector.broadcast %615 : f32 to vector<16x16xf32>
    %617 = arith.mulf %616, %554 : vector<16x16xf32>
    %618 = arith.addf %602, %617 : vector<16x16xf32>
    %c4_456 = arith.constant 4 : index
    %c5_457 = arith.constant 5 : index
    %619 = memref.load %arg2[%c4_456, %c5_457] : memref<8x25xf32, #tpu.memory_space<smem>>
    %620 = vector.broadcast %619 : f32 to vector<16x16xf32>
    %621 = arith.mulf %620, %556 : vector<16x16xf32>
    %622 = arith.addf %606, %621 : vector<16x16xf32>
    %c4_458 = arith.constant 4 : index
    %c6_459 = arith.constant 6 : index
    %623 = memref.load %arg2[%c4_458, %c6_459] : memref<8x25xf32, #tpu.memory_space<smem>>
    %624 = vector.broadcast %623 : f32 to vector<16x16xf32>
    %625 = arith.mulf %624, %558 : vector<16x16xf32>
    %626 = arith.addf %610, %625 : vector<16x16xf32>
    %c4_460 = arith.constant 4 : index
    %c7_461 = arith.constant 7 : index
    %627 = memref.load %arg2[%c4_460, %c7_461] : memref<8x25xf32, #tpu.memory_space<smem>>
    %628 = vector.broadcast %627 : f32 to vector<16x16xf32>
    %629 = arith.mulf %628, %560 : vector<16x16xf32>
    %630 = arith.addf %614, %629 : vector<16x16xf32>
    %c4_462 = arith.constant 4 : index
    %c8_463 = arith.constant 8 : index
    %631 = memref.load %arg2[%c4_462, %c8_463] : memref<8x25xf32, #tpu.memory_space<smem>>
    %632 = vector.broadcast %631 : f32 to vector<16x16xf32>
    %633 = arith.mulf %632, %562 : vector<16x16xf32>
    %634 = arith.addf %618, %633 : vector<16x16xf32>
    %c4_464 = arith.constant 4 : index
    %c9_465 = arith.constant 9 : index
    %635 = memref.load %arg2[%c4_464, %c9_465] : memref<8x25xf32, #tpu.memory_space<smem>>
    %636 = vector.broadcast %635 : f32 to vector<16x16xf32>
    %637 = arith.mulf %636, %564 : vector<16x16xf32>
    %638 = arith.addf %622, %637 : vector<16x16xf32>
    %c4_466 = arith.constant 4 : index
    %c10_467 = arith.constant 10 : index
    %639 = memref.load %arg2[%c4_466, %c10_467] : memref<8x25xf32, #tpu.memory_space<smem>>
    %640 = vector.broadcast %639 : f32 to vector<16x16xf32>
    %641 = arith.mulf %640, %566 : vector<16x16xf32>
    %642 = arith.addf %626, %641 : vector<16x16xf32>
    %c4_468 = arith.constant 4 : index
    %c11_469 = arith.constant 11 : index
    %643 = memref.load %arg2[%c4_468, %c11_469] : memref<8x25xf32, #tpu.memory_space<smem>>
    %644 = vector.broadcast %643 : f32 to vector<16x16xf32>
    %645 = arith.mulf %644, %568 : vector<16x16xf32>
    %646 = arith.addf %630, %645 : vector<16x16xf32>
    %c4_470 = arith.constant 4 : index
    %c12_471 = arith.constant 12 : index
    %647 = memref.load %arg2[%c4_470, %c12_471] : memref<8x25xf32, #tpu.memory_space<smem>>
    %648 = vector.broadcast %647 : f32 to vector<16x16xf32>
    %649 = arith.mulf %648, %570 : vector<16x16xf32>
    %650 = arith.addf %634, %649 : vector<16x16xf32>
    %c4_472 = arith.constant 4 : index
    %c13_473 = arith.constant 13 : index
    %651 = memref.load %arg2[%c4_472, %c13_473] : memref<8x25xf32, #tpu.memory_space<smem>>
    %652 = vector.broadcast %651 : f32 to vector<16x16xf32>
    %653 = arith.mulf %652, %572 : vector<16x16xf32>
    %654 = arith.addf %638, %653 : vector<16x16xf32>
    %c4_474 = arith.constant 4 : index
    %c14_475 = arith.constant 14 : index
    %655 = memref.load %arg2[%c4_474, %c14_475] : memref<8x25xf32, #tpu.memory_space<smem>>
    %656 = vector.broadcast %655 : f32 to vector<16x16xf32>
    %657 = arith.mulf %656, %574 : vector<16x16xf32>
    %658 = arith.addf %642, %657 : vector<16x16xf32>
    %c4_476 = arith.constant 4 : index
    %c15_477 = arith.constant 15 : index
    %659 = memref.load %arg2[%c4_476, %c15_477] : memref<8x25xf32, #tpu.memory_space<smem>>
    %660 = vector.broadcast %659 : f32 to vector<16x16xf32>
    %661 = arith.mulf %660, %576 : vector<16x16xf32>
    %662 = arith.addf %646, %661 : vector<16x16xf32>
    %c4_478 = arith.constant 4 : index
    %c16_479 = arith.constant 16 : index
    %663 = memref.load %arg2[%c4_478, %c16_479] : memref<8x25xf32, #tpu.memory_space<smem>>
    %664 = vector.broadcast %663 : f32 to vector<16x16xf32>
    %665 = arith.mulf %664, %578 : vector<16x16xf32>
    %666 = arith.addf %650, %665 : vector<16x16xf32>
    %c4_480 = arith.constant 4 : index
    %c17_481 = arith.constant 17 : index
    %667 = memref.load %arg2[%c4_480, %c17_481] : memref<8x25xf32, #tpu.memory_space<smem>>
    %668 = vector.broadcast %667 : f32 to vector<16x16xf32>
    %669 = arith.mulf %668, %580 : vector<16x16xf32>
    %670 = arith.addf %654, %669 : vector<16x16xf32>
    %c4_482 = arith.constant 4 : index
    %c18_483 = arith.constant 18 : index
    %671 = memref.load %arg2[%c4_482, %c18_483] : memref<8x25xf32, #tpu.memory_space<smem>>
    %672 = vector.broadcast %671 : f32 to vector<16x16xf32>
    %673 = arith.mulf %672, %582 : vector<16x16xf32>
    %674 = arith.addf %658, %673 : vector<16x16xf32>
    %c4_484 = arith.constant 4 : index
    %c19_485 = arith.constant 19 : index
    %675 = memref.load %arg2[%c4_484, %c19_485] : memref<8x25xf32, #tpu.memory_space<smem>>
    %676 = vector.broadcast %675 : f32 to vector<16x16xf32>
    %677 = arith.mulf %676, %584 : vector<16x16xf32>
    %678 = arith.addf %662, %677 : vector<16x16xf32>
    %c4_486 = arith.constant 4 : index
    %c20_487 = arith.constant 20 : index
    %679 = memref.load %arg2[%c4_486, %c20_487] : memref<8x25xf32, #tpu.memory_space<smem>>
    %680 = vector.broadcast %679 : f32 to vector<16x16xf32>
    %681 = arith.mulf %680, %586 : vector<16x16xf32>
    %682 = arith.addf %666, %681 : vector<16x16xf32>
    %c4_488 = arith.constant 4 : index
    %c21_489 = arith.constant 21 : index
    %683 = memref.load %arg2[%c4_488, %c21_489] : memref<8x25xf32, #tpu.memory_space<smem>>
    %684 = vector.broadcast %683 : f32 to vector<16x16xf32>
    %685 = arith.mulf %684, %588 : vector<16x16xf32>
    %686 = arith.addf %670, %685 : vector<16x16xf32>
    %c4_490 = arith.constant 4 : index
    %c22_491 = arith.constant 22 : index
    %687 = memref.load %arg2[%c4_490, %c22_491] : memref<8x25xf32, #tpu.memory_space<smem>>
    %688 = vector.broadcast %687 : f32 to vector<16x16xf32>
    %689 = arith.mulf %688, %590 : vector<16x16xf32>
    %690 = arith.addf %674, %689 : vector<16x16xf32>
    %c4_492 = arith.constant 4 : index
    %c23_493 = arith.constant 23 : index
    %691 = memref.load %arg2[%c4_492, %c23_493] : memref<8x25xf32, #tpu.memory_space<smem>>
    %692 = vector.broadcast %691 : f32 to vector<16x16xf32>
    %693 = arith.mulf %692, %592 : vector<16x16xf32>
    %694 = arith.addf %678, %693 : vector<16x16xf32>
    %c4_494 = arith.constant 4 : index
    %c24_495 = arith.constant 24 : index
    %695 = memref.load %arg2[%c4_494, %c24_495] : memref<8x25xf32, #tpu.memory_space<smem>>
    %696 = vector.broadcast %695 : f32 to vector<16x16xf32>
    %697 = arith.mulf %696, %594 : vector<16x16xf32>
    %698 = arith.addf %682, %697 : vector<16x16xf32>
    %699 = arith.addf %698, %686 : vector<16x16xf32>
    %700 = arith.addf %690, %694 : vector<16x16xf32>
    %701 = arith.addf %699, %700 : vector<16x16xf32>
    %c0_496 = arith.constant 0 : index
    %c4_497 = arith.constant 4 : index
    %c0_498 = arith.constant 0 : index
    %c0_499 = arith.constant 0 : index
    %702 = vector.load %arg3[%c0_496, %c4_497, %c0_498, %c0_499] : memref<1x8x16x16xf32, #tpu.memory_space<vmem>>, vector<1x1x16x16xf32>
    %703 = vector.shape_cast %702 : vector<1x1x16x16xf32> to vector<16x16xf32>
    %704 = vector.shape_cast %701 : vector<16x16xf32> to vector<1x1x16x16xf32>
    tpu.vector_store %arg3[%c0_496, %c4_497, %c0_498, %c0_499], %704 {strides = array<i32>} : memref<1x8x16x16xf32, #tpu.memory_space<vmem>>, vector<1x1x16x16xf32>,
    %cst_500 = arith.constant 0.000000e+00 : f32
    %705 = vector.broadcast %cst_500 : f32 to vector<16x16xf32>
    %cst_501 = arith.constant 0.000000e+00 : f32
    %706 = vector.broadcast %cst_501 : f32 to vector<16x16xf32>
    %cst_502 = arith.constant 0.000000e+00 : f32
    %707 = vector.broadcast %cst_502 : f32 to vector<16x16xf32>
    %cst_503 = arith.constant 0.000000e+00 : f32
    %708 = vector.broadcast %cst_503 : f32 to vector<16x16xf32>
    %c5_504 = arith.constant 5 : index
    %c0_505 = arith.constant 0 : index
    %709 = memref.load %arg2[%c5_504, %c0_505] : memref<8x25xf32, #tpu.memory_space<smem>>
    %710 = vector.broadcast %709 : f32 to vector<16x16xf32>
    %711 = arith.mulf %710, %546 : vector<16x16xf32>
    %712 = arith.addf %705, %711 : vector<16x16xf32>
    %c5_506 = arith.constant 5 : index
    %c1_507 = arith.constant 1 : index
    %713 = memref.load %arg2[%c5_506, %c1_507] : memref<8x25xf32, #tpu.memory_space<smem>>
    %714 = vector.broadcast %713 : f32 to vector<16x16xf32>
    %715 = arith.mulf %714, %548 : vector<16x16xf32>
    %716 = arith.addf %706, %715 : vector<16x16xf32>
    %c5_508 = arith.constant 5 : index
    %c2_509 = arith.constant 2 : index
    %717 = memref.load %arg2[%c5_508, %c2_509] : memref<8x25xf32, #tpu.memory_space<smem>>
    %718 = vector.broadcast %717 : f32 to vector<16x16xf32>
    %719 = arith.mulf %718, %550 : vector<16x16xf32>
    %720 = arith.addf %707, %719 : vector<16x16xf32>
    %c5_510 = arith.constant 5 : index
    %c3_511 = arith.constant 3 : index
    %721 = memref.load %arg2[%c5_510, %c3_511] : memref<8x25xf32, #tpu.memory_space<smem>>
    %722 = vector.broadcast %721 : f32 to vector<16x16xf32>
    %723 = arith.mulf %722, %552 : vector<16x16xf32>
    %724 = arith.addf %708, %723 : vector<16x16xf32>
    %c5_512 = arith.constant 5 : index
    %c4_513 = arith.constant 4 : index
    %725 = memref.load %arg2[%c5_512, %c4_513] : memref<8x25xf32, #tpu.memory_space<smem>>
    %726 = vector.broadcast %725 : f32 to vector<16x16xf32>
    %727 = arith.mulf %726, %554 : vector<16x16xf32>
    %728 = arith.addf %712, %727 : vector<16x16xf32>
    %c5_514 = arith.constant 5 : index
    %c5_515 = arith.constant 5 : index
    %729 = memref.load %arg2[%c5_514, %c5_515] : memref<8x25xf32, #tpu.memory_space<smem>>
    %730 = vector.broadcast %729 : f32 to vector<16x16xf32>
    %731 = arith.mulf %730, %556 : vector<16x16xf32>
    %732 = arith.addf %716, %731 : vector<16x16xf32>
    %c5_516 = arith.constant 5 : index
    %c6_517 = arith.constant 6 : index
    %733 = memref.load %arg2[%c5_516, %c6_517] : memref<8x25xf32, #tpu.memory_space<smem>>
    %734 = vector.broadcast %733 : f32 to vector<16x16xf32>
    %735 = arith.mulf %734, %558 : vector<16x16xf32>
    %736 = arith.addf %720, %735 : vector<16x16xf32>
    %c5_518 = arith.constant 5 : index
    %c7_519 = arith.constant 7 : index
    %737 = memref.load %arg2[%c5_518, %c7_519] : memref<8x25xf32, #tpu.memory_space<smem>>
    %738 = vector.broadcast %737 : f32 to vector<16x16xf32>
    %739 = arith.mulf %738, %560 : vector<16x16xf32>
    %740 = arith.addf %724, %739 : vector<16x16xf32>
    %c5_520 = arith.constant 5 : index
    %c8_521 = arith.constant 8 : index
    %741 = memref.load %arg2[%c5_520, %c8_521] : memref<8x25xf32, #tpu.memory_space<smem>>
    %742 = vector.broadcast %741 : f32 to vector<16x16xf32>
    %743 = arith.mulf %742, %562 : vector<16x16xf32>
    %744 = arith.addf %728, %743 : vector<16x16xf32>
    %c5_522 = arith.constant 5 : index
    %c9_523 = arith.constant 9 : index
    %745 = memref.load %arg2[%c5_522, %c9_523] : memref<8x25xf32, #tpu.memory_space<smem>>
    %746 = vector.broadcast %745 : f32 to vector<16x16xf32>
    %747 = arith.mulf %746, %564 : vector<16x16xf32>
    %748 = arith.addf %732, %747 : vector<16x16xf32>
    %c5_524 = arith.constant 5 : index
    %c10_525 = arith.constant 10 : index
    %749 = memref.load %arg2[%c5_524, %c10_525] : memref<8x25xf32, #tpu.memory_space<smem>>
    %750 = vector.broadcast %749 : f32 to vector<16x16xf32>
    %751 = arith.mulf %750, %566 : vector<16x16xf32>
    %752 = arith.addf %736, %751 : vector<16x16xf32>
    %c5_526 = arith.constant 5 : index
    %c11_527 = arith.constant 11 : index
    %753 = memref.load %arg2[%c5_526, %c11_527] : memref<8x25xf32, #tpu.memory_space<smem>>
    %754 = vector.broadcast %753 : f32 to vector<16x16xf32>
    %755 = arith.mulf %754, %568 : vector<16x16xf32>
    %756 = arith.addf %740, %755 : vector<16x16xf32>
    %c5_528 = arith.constant 5 : index
    %c12_529 = arith.constant 12 : index
    %757 = memref.load %arg2[%c5_528, %c12_529] : memref<8x25xf32, #tpu.memory_space<smem>>
    %758 = vector.broadcast %757 : f32 to vector<16x16xf32>
    %759 = arith.mulf %758, %570 : vector<16x16xf32>
    %760 = arith.addf %744, %759 : vector<16x16xf32>
    %c5_530 = arith.constant 5 : index
    %c13_531 = arith.constant 13 : index
    %761 = memref.load %arg2[%c5_530, %c13_531] : memref<8x25xf32, #tpu.memory_space<smem>>
    %762 = vector.broadcast %761 : f32 to vector<16x16xf32>
    %763 = arith.mulf %762, %572 : vector<16x16xf32>
    %764 = arith.addf %748, %763 : vector<16x16xf32>
    %c5_532 = arith.constant 5 : index
    %c14_533 = arith.constant 14 : index
    %765 = memref.load %arg2[%c5_532, %c14_533] : memref<8x25xf32, #tpu.memory_space<smem>>
    %766 = vector.broadcast %765 : f32 to vector<16x16xf32>
    %767 = arith.mulf %766, %574 : vector<16x16xf32>
    %768 = arith.addf %752, %767 : vector<16x16xf32>
    %c5_534 = arith.constant 5 : index
    %c15_535 = arith.constant 15 : index
    %769 = memref.load %arg2[%c5_534, %c15_535] : memref<8x25xf32, #tpu.memory_space<smem>>
    %770 = vector.broadcast %769 : f32 to vector<16x16xf32>
    %771 = arith.mulf %770, %576 : vector<16x16xf32>
    %772 = arith.addf %756, %771 : vector<16x16xf32>
    %c5_536 = arith.constant 5 : index
    %c16_537 = arith.constant 16 : index
    %773 = memref.load %arg2[%c5_536, %c16_537] : memref<8x25xf32, #tpu.memory_space<smem>>
    %774 = vector.broadcast %773 : f32 to vector<16x16xf32>
    %775 = arith.mulf %774, %578 : vector<16x16xf32>
    %776 = arith.addf %760, %775 : vector<16x16xf32>
    %c5_538 = arith.constant 5 : index
    %c17_539 = arith.constant 17 : index
    %777 = memref.load %arg2[%c5_538, %c17_539] : memref<8x25xf32, #tpu.memory_space<smem>>
    %778 = vector.broadcast %777 : f32 to vector<16x16xf32>
    %779 = arith.mulf %778, %580 : vector<16x16xf32>
    %780 = arith.addf %764, %779 : vector<16x16xf32>
    %c5_540 = arith.constant 5 : index
    %c18_541 = arith.constant 18 : index
    %781 = memref.load %arg2[%c5_540, %c18_541] : memref<8x25xf32, #tpu.memory_space<smem>>
    %782 = vector.broadcast %781 : f32 to vector<16x16xf32>
    %783 = arith.mulf %782, %582 : vector<16x16xf32>
    %784 = arith.addf %768, %783 : vector<16x16xf32>
    %c5_542 = arith.constant 5 : index
    %c19_543 = arith.constant 19 : index
    %785 = memref.load %arg2[%c5_542, %c19_543] : memref<8x25xf32, #tpu.memory_space<smem>>
    %786 = vector.broadcast %785 : f32 to vector<16x16xf32>
    %787 = arith.mulf %786, %584 : vector<16x16xf32>
    %788 = arith.addf %772, %787 : vector<16x16xf32>
    %c5_544 = arith.constant 5 : index
    %c20_545 = arith.constant 20 : index
    %789 = memref.load %arg2[%c5_544, %c20_545] : memref<8x25xf32, #tpu.memory_space<smem>>
    %790 = vector.broadcast %789 : f32 to vector<16x16xf32>
    %791 = arith.mulf %790, %586 : vector<16x16xf32>
    %792 = arith.addf %776, %791 : vector<16x16xf32>
    %c5_546 = arith.constant 5 : index
    %c21_547 = arith.constant 21 : index
    %793 = memref.load %arg2[%c5_546, %c21_547] : memref<8x25xf32, #tpu.memory_space<smem>>
    %794 = vector.broadcast %793 : f32 to vector<16x16xf32>
    %795 = arith.mulf %794, %588 : vector<16x16xf32>
    %796 = arith.addf %780, %795 : vector<16x16xf32>
    %c5_548 = arith.constant 5 : index
    %c22_549 = arith.constant 22 : index
    %797 = memref.load %arg2[%c5_548, %c22_549] : memref<8x25xf32, #tpu.memory_space<smem>>
    %798 = vector.broadcast %797 : f32 to vector<16x16xf32>
    %799 = arith.mulf %798, %590 : vector<16x16xf32>
    %800 = arith.addf %784, %799 : vector<16x16xf32>
    %c5_550 = arith.constant 5 : index
    %c23_551 = arith.constant 23 : index
    %801 = memref.load %arg2[%c5_550, %c23_551] : memref<8x25xf32, #tpu.memory_space<smem>>
    %802 = vector.broadcast %801 : f32 to vector<16x16xf32>
    %803 = arith.mulf %802, %592 : vector<16x16xf32>
    %804 = arith.addf %788, %803 : vector<16x16xf32>
    %c5_552 = arith.constant 5 : index
    %c24_553 = arith.constant 24 : index
    %805 = memref.load %arg2[%c5_552, %c24_553] : memref<8x25xf32, #tpu.memory_space<smem>>
    %806 = vector.broadcast %805 : f32 to vector<16x16xf32>
    %807 = arith.mulf %806, %594 : vector<16x16xf32>
    %808 = arith.addf %792, %807 : vector<16x16xf32>
    %809 = arith.addf %808, %796 : vector<16x16xf32>
    %810 = arith.addf %800, %804 : vector<16x16xf32>
    %811 = arith.addf %809, %810 : vector<16x16xf32>
    %c0_554 = arith.constant 0 : index
    %c5_555 = arith.constant 5 : index
    %c0_556 = arith.constant 0 : index
    %c0_557 = arith.constant 0 : index
    %812 = vector.load %arg3[%c0_554, %c5_555, %c0_556, %c0_557] : memref<1x8x16x16xf32, #tpu.memory_space<vmem>>, vector<1x1x16x16xf32>
    %813 = vector.shape_cast %812 : vector<1x1x16x16xf32> to vector<16x16xf32>
    %814 = vector.shape_cast %811 : vector<16x16xf32> to vector<1x1x16x16xf32>
    tpu.vector_store %arg3[%c0_554, %c5_555, %c0_556, %c0_557], %814 {strides = array<i32>} : memref<1x8x16x16xf32, #tpu.memory_space<vmem>>, vector<1x1x16x16xf32>,
    %c3_558 = arith.constant 3 : index
    %c0_559 = arith.constant 0 : index
    %c0_560 = arith.constant 0 : index
    %815 = vector.load %arg4[%c3_558, %c0_559, %c0_560] : memref<4x20x20xf32, #tpu.memory_space<vmem>>, vector<1x16x16xf32>
    %816 = vector.shape_cast %815 : vector<1x16x16xf32> to vector<16x16xf32>
    %c3_561 = arith.constant 3 : index
    %c0_562 = arith.constant 0 : index
    %c1_563 = arith.constant 1 : index
    %817 = vector.load %arg4[%c3_561, %c0_562, %c1_563] : memref<4x20x20xf32, #tpu.memory_space<vmem>>, vector<1x16x16xf32>
    %818 = vector.shape_cast %817 : vector<1x16x16xf32> to vector<16x16xf32>
    %c3_564 = arith.constant 3 : index
    %c0_565 = arith.constant 0 : index
    %c2_566 = arith.constant 2 : index
    %819 = vector.load %arg4[%c3_564, %c0_565, %c2_566] : memref<4x20x20xf32, #tpu.memory_space<vmem>>, vector<1x16x16xf32>
    %820 = vector.shape_cast %819 : vector<1x16x16xf32> to vector<16x16xf32>
    %c3_567 = arith.constant 3 : index
    %c0_568 = arith.constant 0 : index
    %c3_569 = arith.constant 3 : index
    %821 = vector.load %arg4[%c3_567, %c0_568, %c3_569] : memref<4x20x20xf32, #tpu.memory_space<vmem>>, vector<1x16x16xf32>
    %822 = vector.shape_cast %821 : vector<1x16x16xf32> to vector<16x16xf32>
    %c3_570 = arith.constant 3 : index
    %c0_571 = arith.constant 0 : index
    %c4_572 = arith.constant 4 : index
    %823 = vector.load %arg4[%c3_570, %c0_571, %c4_572] : memref<4x20x20xf32, #tpu.memory_space<vmem>>, vector<1x16x16xf32>
    %824 = vector.shape_cast %823 : vector<1x16x16xf32> to vector<16x16xf32>
    %c3_573 = arith.constant 3 : index
    %c1_574 = arith.constant 1 : index
    %c0_575 = arith.constant 0 : index
    %825 = vector.load %arg4[%c3_573, %c1_574, %c0_575] : memref<4x20x20xf32, #tpu.memory_space<vmem>>, vector<1x16x16xf32>
    %826 = vector.shape_cast %825 : vector<1x16x16xf32> to vector<16x16xf32>
    %c3_576 = arith.constant 3 : index
    %c1_577 = arith.constant 1 : index
    %c1_578 = arith.constant 1 : index
    %827 = vector.load %arg4[%c3_576, %c1_577, %c1_578] : memref<4x20x20xf32, #tpu.memory_space<vmem>>, vector<1x16x16xf32>
    %828 = vector.shape_cast %827 : vector<1x16x16xf32> to vector<16x16xf32>
    %c3_579 = arith.constant 3 : index
    %c1_580 = arith.constant 1 : index
    %c2_581 = arith.constant 2 : index
    %829 = vector.load %arg4[%c3_579, %c1_580, %c2_581] : memref<4x20x20xf32, #tpu.memory_space<vmem>>, vector<1x16x16xf32>
    %830 = vector.shape_cast %829 : vector<1x16x16xf32> to vector<16x16xf32>
    %c3_582 = arith.constant 3 : index
    %c1_583 = arith.constant 1 : index
    %c3_584 = arith.constant 3 : index
    %831 = vector.load %arg4[%c3_582, %c1_583, %c3_584] : memref<4x20x20xf32, #tpu.memory_space<vmem>>, vector<1x16x16xf32>
    %832 = vector.shape_cast %831 : vector<1x16x16xf32> to vector<16x16xf32>
    %c3_585 = arith.constant 3 : index
    %c1_586 = arith.constant 1 : index
    %c4_587 = arith.constant 4 : index
    %833 = vector.load %arg4[%c3_585, %c1_586, %c4_587] : memref<4x20x20xf32, #tpu.memory_space<vmem>>, vector<1x16x16xf32>
    %834 = vector.shape_cast %833 : vector<1x16x16xf32> to vector<16x16xf32>
    %c3_588 = arith.constant 3 : index
    %c2_589 = arith.constant 2 : index
    %c0_590 = arith.constant 0 : index
    %835 = vector.load %arg4[%c3_588, %c2_589, %c0_590] : memref<4x20x20xf32, #tpu.memory_space<vmem>>, vector<1x16x16xf32>
    %836 = vector.shape_cast %835 : vector<1x16x16xf32> to vector<16x16xf32>
    %c3_591 = arith.constant 3 : index
    %c2_592 = arith.constant 2 : index
    %c1_593 = arith.constant 1 : index
    %837 = vector.load %arg4[%c3_591, %c2_592, %c1_593] : memref<4x20x20xf32, #tpu.memory_space<vmem>>, vector<1x16x16xf32>
    %838 = vector.shape_cast %837 : vector<1x16x16xf32> to vector<16x16xf32>
    %c3_594 = arith.constant 3 : index
    %c2_595 = arith.constant 2 : index
    %c2_596 = arith.constant 2 : index
    %839 = vector.load %arg4[%c3_594, %c2_595, %c2_596] : memref<4x20x20xf32, #tpu.memory_space<vmem>>, vector<1x16x16xf32>
    %840 = vector.shape_cast %839 : vector<1x16x16xf32> to vector<16x16xf32>
    %c3_597 = arith.constant 3 : index
    %c2_598 = arith.constant 2 : index
    %c3_599 = arith.constant 3 : index
    %841 = vector.load %arg4[%c3_597, %c2_598, %c3_599] : memref<4x20x20xf32, #tpu.memory_space<vmem>>, vector<1x16x16xf32>
    %842 = vector.shape_cast %841 : vector<1x16x16xf32> to vector<16x16xf32>
    %c3_600 = arith.constant 3 : index
    %c2_601 = arith.constant 2 : index
    %c4_602 = arith.constant 4 : index
    %843 = vector.load %arg4[%c3_600, %c2_601, %c4_602] : memref<4x20x20xf32, #tpu.memory_space<vmem>>, vector<1x16x16xf32>
    %844 = vector.shape_cast %843 : vector<1x16x16xf32> to vector<16x16xf32>
    %c3_603 = arith.constant 3 : index
    %c3_604 = arith.constant 3 : index
    %c0_605 = arith.constant 0 : index
    %845 = vector.load %arg4[%c3_603, %c3_604, %c0_605] : memref<4x20x20xf32, #tpu.memory_space<vmem>>, vector<1x16x16xf32>
    %846 = vector.shape_cast %845 : vector<1x16x16xf32> to vector<16x16xf32>
    %c3_606 = arith.constant 3 : index
    %c3_607 = arith.constant 3 : index
    %c1_608 = arith.constant 1 : index
    %847 = vector.load %arg4[%c3_606, %c3_607, %c1_608] : memref<4x20x20xf32, #tpu.memory_space<vmem>>, vector<1x16x16xf32>
    %848 = vector.shape_cast %847 : vector<1x16x16xf32> to vector<16x16xf32>
    %c3_609 = arith.constant 3 : index
    %c3_610 = arith.constant 3 : index
    %c2_611 = arith.constant 2 : index
    %849 = vector.load %arg4[%c3_609, %c3_610, %c2_611] : memref<4x20x20xf32, #tpu.memory_space<vmem>>, vector<1x16x16xf32>
    %850 = vector.shape_cast %849 : vector<1x16x16xf32> to vector<16x16xf32>
    %c3_612 = arith.constant 3 : index
    %c3_613 = arith.constant 3 : index
    %c3_614 = arith.constant 3 : index
    %851 = vector.load %arg4[%c3_612, %c3_613, %c3_614] : memref<4x20x20xf32, #tpu.memory_space<vmem>>, vector<1x16x16xf32>
    %852 = vector.shape_cast %851 : vector<1x16x16xf32> to vector<16x16xf32>
    %c3_615 = arith.constant 3 : index
    %c3_616 = arith.constant 3 : index
    %c4_617 = arith.constant 4 : index
    %853 = vector.load %arg4[%c3_615, %c3_616, %c4_617] : memref<4x20x20xf32, #tpu.memory_space<vmem>>, vector<1x16x16xf32>
    %854 = vector.shape_cast %853 : vector<1x16x16xf32> to vector<16x16xf32>
    %c3_618 = arith.constant 3 : index
    %c4_619 = arith.constant 4 : index
    %c0_620 = arith.constant 0 : index
    %855 = vector.load %arg4[%c3_618, %c4_619, %c0_620] : memref<4x20x20xf32, #tpu.memory_space<vmem>>, vector<1x16x16xf32>
    %856 = vector.shape_cast %855 : vector<1x16x16xf32> to vector<16x16xf32>
    %c3_621 = arith.constant 3 : index
    %c4_622 = arith.constant 4 : index
    %c1_623 = arith.constant 1 : index
    %857 = vector.load %arg4[%c3_621, %c4_622, %c1_623] : memref<4x20x20xf32, #tpu.memory_space<vmem>>, vector<1x16x16xf32>
    %858 = vector.shape_cast %857 : vector<1x16x16xf32> to vector<16x16xf32>
    %c3_624 = arith.constant 3 : index
    %c4_625 = arith.constant 4 : index
    %c2_626 = arith.constant 2 : index
    %859 = vector.load %arg4[%c3_624, %c4_625, %c2_626] : memref<4x20x20xf32, #tpu.memory_space<vmem>>, vector<1x16x16xf32>
    %860 = vector.shape_cast %859 : vector<1x16x16xf32> to vector<16x16xf32>
    %c3_627 = arith.constant 3 : index
    %c4_628 = arith.constant 4 : index
    %c3_629 = arith.constant 3 : index
    %861 = vector.load %arg4[%c3_627, %c4_628, %c3_629] : memref<4x20x20xf32, #tpu.memory_space<vmem>>, vector<1x16x16xf32>
    %862 = vector.shape_cast %861 : vector<1x16x16xf32> to vector<16x16xf32>
    %c3_630 = arith.constant 3 : index
    %c4_631 = arith.constant 4 : index
    %c4_632 = arith.constant 4 : index
    %863 = vector.load %arg4[%c3_630, %c4_631, %c4_632] : memref<4x20x20xf32, #tpu.memory_space<vmem>>, vector<1x16x16xf32>
    %864 = vector.shape_cast %863 : vector<1x16x16xf32> to vector<16x16xf32>
    %cst_633 = arith.constant 0.000000e+00 : f32
    %865 = vector.broadcast %cst_633 : f32 to vector<16x16xf32>
    %cst_634 = arith.constant 0.000000e+00 : f32
    %866 = vector.broadcast %cst_634 : f32 to vector<16x16xf32>
    %cst_635 = arith.constant 0.000000e+00 : f32
    %867 = vector.broadcast %cst_635 : f32 to vector<16x16xf32>
    %cst_636 = arith.constant 0.000000e+00 : f32
    %868 = vector.broadcast %cst_636 : f32 to vector<16x16xf32>
    %c6_637 = arith.constant 6 : index
    %c0_638 = arith.constant 0 : index
    %869 = memref.load %arg2[%c6_637, %c0_638] : memref<8x25xf32, #tpu.memory_space<smem>>
    %870 = vector.broadcast %869 : f32 to vector<16x16xf32>
    %871 = arith.mulf %870, %816 : vector<16x16xf32>
    %872 = arith.addf %865, %871 : vector<16x16xf32>
    %c6_639 = arith.constant 6 : index
    %c1_640 = arith.constant 1 : index
    %873 = memref.load %arg2[%c6_639, %c1_640] : memref<8x25xf32, #tpu.memory_space<smem>>
    %874 = vector.broadcast %873 : f32 to vector<16x16xf32>
    %875 = arith.mulf %874, %818 : vector<16x16xf32>
    %876 = arith.addf %866, %875 : vector<16x16xf32>
    %c6_641 = arith.constant 6 : index
    %c2_642 = arith.constant 2 : index
    %877 = memref.load %arg2[%c6_641, %c2_642] : memref<8x25xf32, #tpu.memory_space<smem>>
    %878 = vector.broadcast %877 : f32 to vector<16x16xf32>
    %879 = arith.mulf %878, %820 : vector<16x16xf32>
    %880 = arith.addf %867, %879 : vector<16x16xf32>
    %c6_643 = arith.constant 6 : index
    %c3_644 = arith.constant 3 : index
    %881 = memref.load %arg2[%c6_643, %c3_644] : memref<8x25xf32, #tpu.memory_space<smem>>
    %882 = vector.broadcast %881 : f32 to vector<16x16xf32>
    %883 = arith.mulf %882, %822 : vector<16x16xf32>
    %884 = arith.addf %868, %883 : vector<16x16xf32>
    %c6_645 = arith.constant 6 : index
    %c4_646 = arith.constant 4 : index
    %885 = memref.load %arg2[%c6_645, %c4_646] : memref<8x25xf32, #tpu.memory_space<smem>>
    %886 = vector.broadcast %885 : f32 to vector<16x16xf32>
    %887 = arith.mulf %886, %824 : vector<16x16xf32>
    %888 = arith.addf %872, %887 : vector<16x16xf32>
    %c6_647 = arith.constant 6 : index
    %c5_648 = arith.constant 5 : index
    %889 = memref.load %arg2[%c6_647, %c5_648] : memref<8x25xf32, #tpu.memory_space<smem>>
    %890 = vector.broadcast %889 : f32 to vector<16x16xf32>
    %891 = arith.mulf %890, %826 : vector<16x16xf32>
    %892 = arith.addf %876, %891 : vector<16x16xf32>
    %c6_649 = arith.constant 6 : index
    %c6_650 = arith.constant 6 : index
    %893 = memref.load %arg2[%c6_649, %c6_650] : memref<8x25xf32, #tpu.memory_space<smem>>
    %894 = vector.broadcast %893 : f32 to vector<16x16xf32>
    %895 = arith.mulf %894, %828 : vector<16x16xf32>
    %896 = arith.addf %880, %895 : vector<16x16xf32>
    %c6_651 = arith.constant 6 : index
    %c7_652 = arith.constant 7 : index
    %897 = memref.load %arg2[%c6_651, %c7_652] : memref<8x25xf32, #tpu.memory_space<smem>>
    %898 = vector.broadcast %897 : f32 to vector<16x16xf32>
    %899 = arith.mulf %898, %830 : vector<16x16xf32>
    %900 = arith.addf %884, %899 : vector<16x16xf32>
    %c6_653 = arith.constant 6 : index
    %c8_654 = arith.constant 8 : index
    %901 = memref.load %arg2[%c6_653, %c8_654] : memref<8x25xf32, #tpu.memory_space<smem>>
    %902 = vector.broadcast %901 : f32 to vector<16x16xf32>
    %903 = arith.mulf %902, %832 : vector<16x16xf32>
    %904 = arith.addf %888, %903 : vector<16x16xf32>
    %c6_655 = arith.constant 6 : index
    %c9_656 = arith.constant 9 : index
    %905 = memref.load %arg2[%c6_655, %c9_656] : memref<8x25xf32, #tpu.memory_space<smem>>
    %906 = vector.broadcast %905 : f32 to vector<16x16xf32>
    %907 = arith.mulf %906, %834 : vector<16x16xf32>
    %908 = arith.addf %892, %907 : vector<16x16xf32>
    %c6_657 = arith.constant 6 : index
    %c10_658 = arith.constant 10 : index
    %909 = memref.load %arg2[%c6_657, %c10_658] : memref<8x25xf32, #tpu.memory_space<smem>>
    %910 = vector.broadcast %909 : f32 to vector<16x16xf32>
    %911 = arith.mulf %910, %836 : vector<16x16xf32>
    %912 = arith.addf %896, %911 : vector<16x16xf32>
    %c6_659 = arith.constant 6 : index
    %c11_660 = arith.constant 11 : index
    %913 = memref.load %arg2[%c6_659, %c11_660] : memref<8x25xf32, #tpu.memory_space<smem>>
    %914 = vector.broadcast %913 : f32 to vector<16x16xf32>
    %915 = arith.mulf %914, %838 : vector<16x16xf32>
    %916 = arith.addf %900, %915 : vector<16x16xf32>
    %c6_661 = arith.constant 6 : index
    %c12_662 = arith.constant 12 : index
    %917 = memref.load %arg2[%c6_661, %c12_662] : memref<8x25xf32, #tpu.memory_space<smem>>
    %918 = vector.broadcast %917 : f32 to vector<16x16xf32>
    %919 = arith.mulf %918, %840 : vector<16x16xf32>
    %920 = arith.addf %904, %919 : vector<16x16xf32>
    %c6_663 = arith.constant 6 : index
    %c13_664 = arith.constant 13 : index
    %921 = memref.load %arg2[%c6_663, %c13_664] : memref<8x25xf32, #tpu.memory_space<smem>>
    %922 = vector.broadcast %921 : f32 to vector<16x16xf32>
    %923 = arith.mulf %922, %842 : vector<16x16xf32>
    %924 = arith.addf %908, %923 : vector<16x16xf32>
    %c6_665 = arith.constant 6 : index
    %c14_666 = arith.constant 14 : index
    %925 = memref.load %arg2[%c6_665, %c14_666] : memref<8x25xf32, #tpu.memory_space<smem>>
    %926 = vector.broadcast %925 : f32 to vector<16x16xf32>
    %927 = arith.mulf %926, %844 : vector<16x16xf32>
    %928 = arith.addf %912, %927 : vector<16x16xf32>
    %c6_667 = arith.constant 6 : index
    %c15_668 = arith.constant 15 : index
    %929 = memref.load %arg2[%c6_667, %c15_668] : memref<8x25xf32, #tpu.memory_space<smem>>
    %930 = vector.broadcast %929 : f32 to vector<16x16xf32>
    %931 = arith.mulf %930, %846 : vector<16x16xf32>
    %932 = arith.addf %916, %931 : vector<16x16xf32>
    %c6_669 = arith.constant 6 : index
    %c16_670 = arith.constant 16 : index
    %933 = memref.load %arg2[%c6_669, %c16_670] : memref<8x25xf32, #tpu.memory_space<smem>>
    %934 = vector.broadcast %933 : f32 to vector<16x16xf32>
    %935 = arith.mulf %934, %848 : vector<16x16xf32>
    %936 = arith.addf %920, %935 : vector<16x16xf32>
    %c6_671 = arith.constant 6 : index
    %c17_672 = arith.constant 17 : index
    %937 = memref.load %arg2[%c6_671, %c17_672] : memref<8x25xf32, #tpu.memory_space<smem>>
    %938 = vector.broadcast %937 : f32 to vector<16x16xf32>
    %939 = arith.mulf %938, %850 : vector<16x16xf32>
    %940 = arith.addf %924, %939 : vector<16x16xf32>
    %c6_673 = arith.constant 6 : index
    %c18_674 = arith.constant 18 : index
    %941 = memref.load %arg2[%c6_673, %c18_674] : memref<8x25xf32, #tpu.memory_space<smem>>
    %942 = vector.broadcast %941 : f32 to vector<16x16xf32>
    %943 = arith.mulf %942, %852 : vector<16x16xf32>
    %944 = arith.addf %928, %943 : vector<16x16xf32>
    %c6_675 = arith.constant 6 : index
    %c19_676 = arith.constant 19 : index
    %945 = memref.load %arg2[%c6_675, %c19_676] : memref<8x25xf32, #tpu.memory_space<smem>>
    %946 = vector.broadcast %945 : f32 to vector<16x16xf32>
    %947 = arith.mulf %946, %854 : vector<16x16xf32>
    %948 = arith.addf %932, %947 : vector<16x16xf32>
    %c6_677 = arith.constant 6 : index
    %c20_678 = arith.constant 20 : index
    %949 = memref.load %arg2[%c6_677, %c20_678] : memref<8x25xf32, #tpu.memory_space<smem>>
    %950 = vector.broadcast %949 : f32 to vector<16x16xf32>
    %951 = arith.mulf %950, %856 : vector<16x16xf32>
    %952 = arith.addf %936, %951 : vector<16x16xf32>
    %c6_679 = arith.constant 6 : index
    %c21_680 = arith.constant 21 : index
    %953 = memref.load %arg2[%c6_679, %c21_680] : memref<8x25xf32, #tpu.memory_space<smem>>
    %954 = vector.broadcast %953 : f32 to vector<16x16xf32>
    %955 = arith.mulf %954, %858 : vector<16x16xf32>
    %956 = arith.addf %940, %955 : vector<16x16xf32>
    %c6_681 = arith.constant 6 : index
    %c22_682 = arith.constant 22 : index
    %957 = memref.load %arg2[%c6_681, %c22_682] : memref<8x25xf32, #tpu.memory_space<smem>>
    %958 = vector.broadcast %957 : f32 to vector<16x16xf32>
    %959 = arith.mulf %958, %860 : vector<16x16xf32>
    %960 = arith.addf %944, %959 : vector<16x16xf32>
    %c6_683 = arith.constant 6 : index
    %c23_684 = arith.constant 23 : index
    %961 = memref.load %arg2[%c6_683, %c23_684] : memref<8x25xf32, #tpu.memory_space<smem>>
    %962 = vector.broadcast %961 : f32 to vector<16x16xf32>
    %963 = arith.mulf %962, %862 : vector<16x16xf32>
    %964 = arith.addf %948, %963 : vector<16x16xf32>
    %c6_685 = arith.constant 6 : index
    %c24_686 = arith.constant 24 : index
    %965 = memref.load %arg2[%c6_685, %c24_686] : memref<8x25xf32, #tpu.memory_space<smem>>
    %966 = vector.broadcast %965 : f32 to vector<16x16xf32>
    %967 = arith.mulf %966, %864 : vector<16x16xf32>
    %968 = arith.addf %952, %967 : vector<16x16xf32>
    %969 = arith.addf %968, %956 : vector<16x16xf32>
    %970 = arith.addf %960, %964 : vector<16x16xf32>
    %971 = arith.addf %969, %970 : vector<16x16xf32>
    %c0_687 = arith.constant 0 : index
    %c6_688 = arith.constant 6 : index
    %c0_689 = arith.constant 0 : index
    %c0_690 = arith.constant 0 : index
    %972 = vector.load %arg3[%c0_687, %c6_688, %c0_689, %c0_690] : memref<1x8x16x16xf32, #tpu.memory_space<vmem>>, vector<1x1x16x16xf32>
    %973 = vector.shape_cast %972 : vector<1x1x16x16xf32> to vector<16x16xf32>
    %974 = vector.shape_cast %971 : vector<16x16xf32> to vector<1x1x16x16xf32>
    tpu.vector_store %arg3[%c0_687, %c6_688, %c0_689, %c0_690], %974 {strides = array<i32>} : memref<1x8x16x16xf32, #tpu.memory_space<vmem>>, vector<1x1x16x16xf32>,
    %cst_691 = arith.constant 0.000000e+00 : f32
    %975 = vector.broadcast %cst_691 : f32 to vector<16x16xf32>
    %cst_692 = arith.constant 0.000000e+00 : f32
    %976 = vector.broadcast %cst_692 : f32 to vector<16x16xf32>
    %cst_693 = arith.constant 0.000000e+00 : f32
    %977 = vector.broadcast %cst_693 : f32 to vector<16x16xf32>
    %cst_694 = arith.constant 0.000000e+00 : f32
    %978 = vector.broadcast %cst_694 : f32 to vector<16x16xf32>
    %c7_695 = arith.constant 7 : index
    %c0_696 = arith.constant 0 : index
    %979 = memref.load %arg2[%c7_695, %c0_696] : memref<8x25xf32, #tpu.memory_space<smem>>
    %980 = vector.broadcast %979 : f32 to vector<16x16xf32>
    %981 = arith.mulf %980, %816 : vector<16x16xf32>
    %982 = arith.addf %975, %981 : vector<16x16xf32>
    %c7_697 = arith.constant 7 : index
    %c1_698 = arith.constant 1 : index
    %983 = memref.load %arg2[%c7_697, %c1_698] : memref<8x25xf32, #tpu.memory_space<smem>>
    %984 = vector.broadcast %983 : f32 to vector<16x16xf32>
    %985 = arith.mulf %984, %818 : vector<16x16xf32>
    %986 = arith.addf %976, %985 : vector<16x16xf32>
    %c7_699 = arith.constant 7 : index
    %c2_700 = arith.constant 2 : index
    %987 = memref.load %arg2[%c7_699, %c2_700] : memref<8x25xf32, #tpu.memory_space<smem>>
    %988 = vector.broadcast %987 : f32 to vector<16x16xf32>
    %989 = arith.mulf %988, %820 : vector<16x16xf32>
    %990 = arith.addf %977, %989 : vector<16x16xf32>
    %c7_701 = arith.constant 7 : index
    %c3_702 = arith.constant 3 : index
    %991 = memref.load %arg2[%c7_701, %c3_702] : memref<8x25xf32, #tpu.memory_space<smem>>
    %992 = vector.broadcast %991 : f32 to vector<16x16xf32>
    %993 = arith.mulf %992, %822 : vector<16x16xf32>
    %994 = arith.addf %978, %993 : vector<16x16xf32>
    %c7_703 = arith.constant 7 : index
    %c4_704 = arith.constant 4 : index
    %995 = memref.load %arg2[%c7_703, %c4_704] : memref<8x25xf32, #tpu.memory_space<smem>>
    %996 = vector.broadcast %995 : f32 to vector<16x16xf32>
    %997 = arith.mulf %996, %824 : vector<16x16xf32>
    %998 = arith.addf %982, %997 : vector<16x16xf32>
    %c7_705 = arith.constant 7 : index
    %c5_706 = arith.constant 5 : index
    %999 = memref.load %arg2[%c7_705, %c5_706] : memref<8x25xf32, #tpu.memory_space<smem>>
    %1000 = vector.broadcast %999 : f32 to vector<16x16xf32>
    %1001 = arith.mulf %1000, %826 : vector<16x16xf32>
    %1002 = arith.addf %986, %1001 : vector<16x16xf32>
    %c7_707 = arith.constant 7 : index
    %c6_708 = arith.constant 6 : index
    %1003 = memref.load %arg2[%c7_707, %c6_708] : memref<8x25xf32, #tpu.memory_space<smem>>
    %1004 = vector.broadcast %1003 : f32 to vector<16x16xf32>
    %1005 = arith.mulf %1004, %828 : vector<16x16xf32>
    %1006 = arith.addf %990, %1005 : vector<16x16xf32>
    %c7_709 = arith.constant 7 : index
    %c7_710 = arith.constant 7 : index
    %1007 = memref.load %arg2[%c7_709, %c7_710] : memref<8x25xf32, #tpu.memory_space<smem>>
    %1008 = vector.broadcast %1007 : f32 to vector<16x16xf32>
    %1009 = arith.mulf %1008, %830 : vector<16x16xf32>
    %1010 = arith.addf %994, %1009 : vector<16x16xf32>
    %c7_711 = arith.constant 7 : index
    %c8_712 = arith.constant 8 : index
    %1011 = memref.load %arg2[%c7_711, %c8_712] : memref<8x25xf32, #tpu.memory_space<smem>>
    %1012 = vector.broadcast %1011 : f32 to vector<16x16xf32>
    %1013 = arith.mulf %1012, %832 : vector<16x16xf32>
    %1014 = arith.addf %998, %1013 : vector<16x16xf32>
    %c7_713 = arith.constant 7 : index
    %c9_714 = arith.constant 9 : index
    %1015 = memref.load %arg2[%c7_713, %c9_714] : memref<8x25xf32, #tpu.memory_space<smem>>
    %1016 = vector.broadcast %1015 : f32 to vector<16x16xf32>
    %1017 = arith.mulf %1016, %834 : vector<16x16xf32>
    %1018 = arith.addf %1002, %1017 : vector<16x16xf32>
    %c7_715 = arith.constant 7 : index
    %c10_716 = arith.constant 10 : index
    %1019 = memref.load %arg2[%c7_715, %c10_716] : memref<8x25xf32, #tpu.memory_space<smem>>
    %1020 = vector.broadcast %1019 : f32 to vector<16x16xf32>
    %1021 = arith.mulf %1020, %836 : vector<16x16xf32>
    %1022 = arith.addf %1006, %1021 : vector<16x16xf32>
    %c7_717 = arith.constant 7 : index
    %c11_718 = arith.constant 11 : index
    %1023 = memref.load %arg2[%c7_717, %c11_718] : memref<8x25xf32, #tpu.memory_space<smem>>
    %1024 = vector.broadcast %1023 : f32 to vector<16x16xf32>
    %1025 = arith.mulf %1024, %838 : vector<16x16xf32>
    %1026 = arith.addf %1010, %1025 : vector<16x16xf32>
    %c7_719 = arith.constant 7 : index
    %c12_720 = arith.constant 12 : index
    %1027 = memref.load %arg2[%c7_719, %c12_720] : memref<8x25xf32, #tpu.memory_space<smem>>
    %1028 = vector.broadcast %1027 : f32 to vector<16x16xf32>
    %1029 = arith.mulf %1028, %840 : vector<16x16xf32>
    %1030 = arith.addf %1014, %1029 : vector<16x16xf32>
    %c7_721 = arith.constant 7 : index
    %c13_722 = arith.constant 13 : index
    %1031 = memref.load %arg2[%c7_721, %c13_722] : memref<8x25xf32, #tpu.memory_space<smem>>
    %1032 = vector.broadcast %1031 : f32 to vector<16x16xf32>
    %1033 = arith.mulf %1032, %842 : vector<16x16xf32>
    %1034 = arith.addf %1018, %1033 : vector<16x16xf32>
    %c7_723 = arith.constant 7 : index
    %c14_724 = arith.constant 14 : index
    %1035 = memref.load %arg2[%c7_723, %c14_724] : memref<8x25xf32, #tpu.memory_space<smem>>
    %1036 = vector.broadcast %1035 : f32 to vector<16x16xf32>
    %1037 = arith.mulf %1036, %844 : vector<16x16xf32>
    %1038 = arith.addf %1022, %1037 : vector<16x16xf32>
    %c7_725 = arith.constant 7 : index
    %c15_726 = arith.constant 15 : index
    %1039 = memref.load %arg2[%c7_725, %c15_726] : memref<8x25xf32, #tpu.memory_space<smem>>
    %1040 = vector.broadcast %1039 : f32 to vector<16x16xf32>
    %1041 = arith.mulf %1040, %846 : vector<16x16xf32>
    %1042 = arith.addf %1026, %1041 : vector<16x16xf32>
    %c7_727 = arith.constant 7 : index
    %c16_728 = arith.constant 16 : index
    %1043 = memref.load %arg2[%c7_727, %c16_728] : memref<8x25xf32, #tpu.memory_space<smem>>
    %1044 = vector.broadcast %1043 : f32 to vector<16x16xf32>
    %1045 = arith.mulf %1044, %848 : vector<16x16xf32>
    %1046 = arith.addf %1030, %1045 : vector<16x16xf32>
    %c7_729 = arith.constant 7 : index
    %c17_730 = arith.constant 17 : index
    %1047 = memref.load %arg2[%c7_729, %c17_730] : memref<8x25xf32, #tpu.memory_space<smem>>
    %1048 = vector.broadcast %1047 : f32 to vector<16x16xf32>
    %1049 = arith.mulf %1048, %850 : vector<16x16xf32>
    %1050 = arith.addf %1034, %1049 : vector<16x16xf32>
    %c7_731 = arith.constant 7 : index
    %c18_732 = arith.constant 18 : index
    %1051 = memref.load %arg2[%c7_731, %c18_732] : memref<8x25xf32, #tpu.memory_space<smem>>
    %1052 = vector.broadcast %1051 : f32 to vector<16x16xf32>
    %1053 = arith.mulf %1052, %852 : vector<16x16xf32>
    %1054 = arith.addf %1038, %1053 : vector<16x16xf32>
    %c7_733 = arith.constant 7 : index
    %c19_734 = arith.constant 19 : index
    %1055 = memref.load %arg2[%c7_733, %c19_734] : memref<8x25xf32, #tpu.memory_space<smem>>
    %1056 = vector.broadcast %1055 : f32 to vector<16x16xf32>
    %1057 = arith.mulf %1056, %854 : vector<16x16xf32>
    %1058 = arith.addf %1042, %1057 : vector<16x16xf32>
    %c7_735 = arith.constant 7 : index
    %c20_736 = arith.constant 20 : index
    %1059 = memref.load %arg2[%c7_735, %c20_736] : memref<8x25xf32, #tpu.memory_space<smem>>
    %1060 = vector.broadcast %1059 : f32 to vector<16x16xf32>
    %1061 = arith.mulf %1060, %856 : vector<16x16xf32>
    %1062 = arith.addf %1046, %1061 : vector<16x16xf32>
    %c7_737 = arith.constant 7 : index
    %c21_738 = arith.constant 21 : index
    %1063 = memref.load %arg2[%c7_737, %c21_738] : memref<8x25xf32, #tpu.memory_space<smem>>
    %1064 = vector.broadcast %1063 : f32 to vector<16x16xf32>
    %1065 = arith.mulf %1064, %858 : vector<16x16xf32>
    %1066 = arith.addf %1050, %1065 : vector<16x16xf32>
    %c7_739 = arith.constant 7 : index
    %c22_740 = arith.constant 22 : index
    %1067 = memref.load %arg2[%c7_739, %c22_740] : memref<8x25xf32, #tpu.memory_space<smem>>
    %1068 = vector.broadcast %1067 : f32 to vector<16x16xf32>
    %1069 = arith.mulf %1068, %860 : vector<16x16xf32>
    %1070 = arith.addf %1054, %1069 : vector<16x16xf32>
    %c7_741 = arith.constant 7 : index
    %c23_742 = arith.constant 23 : index
    %1071 = memref.load %arg2[%c7_741, %c23_742] : memref<8x25xf32, #tpu.memory_space<smem>>
    %1072 = vector.broadcast %1071 : f32 to vector<16x16xf32>
    %1073 = arith.mulf %1072, %862 : vector<16x16xf32>
    %1074 = arith.addf %1058, %1073 : vector<16x16xf32>
    %c7_743 = arith.constant 7 : index
    %c24_744 = arith.constant 24 : index
    %1075 = memref.load %arg2[%c7_743, %c24_744] : memref<8x25xf32, #tpu.memory_space<smem>>
    %1076 = vector.broadcast %1075 : f32 to vector<16x16xf32>
    %1077 = arith.mulf %1076, %864 : vector<16x16xf32>
    %1078 = arith.addf %1062, %1077 : vector<16x16xf32>
    %1079 = arith.addf %1078, %1066 : vector<16x16xf32>
    %1080 = arith.addf %1070, %1074 : vector<16x16xf32>
    %1081 = arith.addf %1079, %1080 : vector<16x16xf32>
    %c0_745 = arith.constant 0 : index
    %c7_746 = arith.constant 7 : index
    %c0_747 = arith.constant 0 : index
    %c0_748 = arith.constant 0 : index
    %1082 = vector.load %arg3[%c0_745, %c7_746, %c0_747, %c0_748] : memref<1x8x16x16xf32, #tpu.memory_space<vmem>>, vector<1x1x16x16xf32>
    %1083 = vector.shape_cast %1082 : vector<1x1x16x16xf32> to vector<16x16xf32>
    %1084 = vector.shape_cast %1081 : vector<16x16xf32> to vector<1x1x16x16xf32>
    tpu.vector_store %arg3[%c0_745, %c7_746, %c0_747, %c0_748], %1084 {strides = array<i32>} : memref<1x8x16x16xf32, #tpu.memory_space<vmem>>, vector<1x1x16x16xf32>,
    return
  }
  func.func @transform_0(%arg0: i32) -> (i32, i32, i32, i32) {
    %c0_i32 = arith.constant 0 : i32
    %c0_i32_0 = arith.constant 0 : i32
    %c0_i32_1 = arith.constant 0 : i32
    %c0_i32_2 = arith.constant 0 : i32
    return %arg0, %c0_i32, %c0_i32_0, %c0_i32_1 : i32, i32, i32, i32
  }
  func.func @transform_1(%arg0: i32) -> (i32, i32) {
    %c0_i32 = arith.constant 0 : i32
    %c0_i32_0 = arith.constant 0 : i32
    %c0_i32_1 = arith.constant 0 : i32
    return %c0_i32, %c0_i32_0 : i32, i32
  }
  func.func @transform_2(%arg0: i32) -> (i32, i32, i32, i32) {
    %c0_i32 = arith.constant 0 : i32
    %c0_i32_0 = arith.constant 0 : i32
    %c0_i32_1 = arith.constant 0 : i32
    %c0_i32_2 = arith.constant 0 : i32
    return %arg0, %c0_i32, %c0_i32_0, %c0_i32_1 : i32, i32, i32, i32
  }
}

</mosaic_0001>

<llo_original>
// kernel: tpu_custom_call.1
$region0: #{tpu_custom_call.1}
  #allocation0 [shape = 'u32[]', space=smem, size = 0x4, offset = 0x4, fixed_abs, tag = 'smem constant byte address 0x4 - core index']
  #allocation1 [shape = 'u32[72,128]{1,0:T(1,128)}', space=vmem, size = 0x9000, scoped, tag = 'internal scratch']
  #allocation2 [shape = 'f32[4,20,20]{2,1,0:T(8,128)}', space=vmem, size = 0xc000, scoped, tag = 'scratch operand']
  %s0 = inlined_call_operand.hbm [shape: f32[2,4,16,16], index: 0, kind: input, shape index: {}]
  %s1 = inlined_call_operand.hbm [shape: f32[8,25], index: 1, kind: input, shape index: {}]
  %s2 = inlined_call_operand.hbm [shape: f32[2,8,16,16], index: 2, kind: output, shape index: {}]
  %s3 = sld [smem:[#allocation0]]
  $region49: #{tpu_custom_call.1} parent=0
    _
  %s5 = ssub.s32 1, %s3
  %s6 = scalar_select 0, %s5, %s3
  $region1: #{tpu_custom_call.1} parent=0
    #allocation3 [shape = 'u8[65536]{0}', space=vmem, size = 0x10000, scoped, tag = 'input window, operand 0']
    #allocation4 [shape = 's32[2]{0}', space=sflag, size = 0x8, scoped, tag = 'scoped memory for tpu_custom_call.1']
    #allocation5 [shape = 's32[2]{0}', space=sflag, size = 0x8, scoped, tag = 'scoped memory for tpu_custom_call.1']
    #allocation6 [shape = 's32[2]{0}', space=sflag, size = 0x8, scoped, tag = 'scoped memory for tpu_custom_call.1']
    #allocation7 [shape = 'u8[4096]{0}', space=smem, size = 0x1000, scoped, tag = 'input window, operand 1, single buffered']
    #allocation8 [shape = 'u8[131072]{0}', space=vmem, size = 0x20000, scoped, tag = 'output window, operand 0']
    %7 = vsyncpa [#allocation4], 0
    %s8 = scalar_lea.sflag [#allocation4], 1
    %9 = vsyncpa %s8, 0
    %10 = vsyncpa [#allocation6], 0
    %11 = vsyncpa [#allocation5], 0
    %s12 = scalar_lea.sflag [#allocation5], 1
    %13 = vsyncpa %s12, 0
    loop: start=0, step=1, limit=4
    $region2: #{tpu_custom_call.1} parent=1 // loop_pre_header
      _
    $region3: #{tpu_custom_call.1} parent=1 // loop_header
      %s15 = sphi 0, %s19
      %p16 = scmp.ge.s32.totalorder %s15, 4
      %s25 = sphi 0, %s27
      %s28 = sphi 0, %s25
      %s29 = sphi 0, %s28
      %s45 = sphi 0, %s29
      %s49 = sphi 0, %s49
      %s51 = sphi 0, %s49
      %s52 = sphi 0, %s51
      %s66 = sphi 0, %s52
      %s72 = sphi 0, %s74
      %s75 = sphi 0, %s72
      %s76 = sphi 0, %s75
      %s92 = sphi 0, %s76
    $region4: #{tpu_custom_call.1} parent=1 // loop_header_branch
      %18 = sbr.rel (%p16) target = $region8
    $region5: #{tpu_custom_call.1} parent=1 // loop_body
      %s20 = ssub.s32 %s15, 1
      %s21 = ssub.s32 %s15, 2
      %s22 = sadd.s32 %s15, 1
      %s23 = ssub.s32 %s15, %s22
      %p24 = scmp.eq.s32.totalorder %s23, 0
      %s26 = sadd.s32 %s25, 1
      %s27 = scalar_select %p24, %s25, %s26
      %p30 = pneg %p24
      %p31 = scmp.eq.s32.totalorder %s15, 1
      %p32 = por %p30, %p31
      %p33 = scmp.ne.s32.totalorder %s25, %s28
      %p34 = scmp.eq.s32.totalorder %s15, 0
      %p35 = por %p33, %p34
      %p36 = scmp.ne.s32.totalorder %s25, %s28
      %p37 = scmp.eq.s32.totalorder %s20, 1
      %p38 = por %p36, %p37
      %p39 = scmp.ne.s32.totalorder %s28, %s29
      %p40 = scmp.eq.s32.totalorder %s20, 0
      %p41 = por %p39, %p40
      %p42 = scmp.ne.s32.totalorder %s28, %s29
      %p43 = scmp.eq.s32.totalorder %s21, 1
      %p44 = por %p42, %p43
      %p46 = scmp.ne.s32.totalorder %s29, %s45
      %p47 = scmp.eq.s32.totalorder %s21, 0
      %p48 = por %p46, %p47
      %s50 = sadd.s32 %s49, 1
      %p53 = scmp.eq.s32.totalorder %s15, 1
      %p54 = scmp.ne.s32.totalorder %s49, %s51
      %p55 = scmp.eq.s32.totalorder %s15, 0
      %p56 = por %p54, %p55
      %p57 = scmp.ne.s32.totalorder %s49, %s51
      %p58 = scmp.eq.s32.totalorder %s20, 1
      %p59 = por %p57, %p58
      %p60 = scmp.ne.s32.totalorder %s51, %s52
      %p61 = scmp.eq.s32.totalorder %s20, 0
      %p62 = por %p60, %p61
      %p63 = scmp.ne.s32.totalorder %s51, %s52
      %p64 = scmp.eq.s32.totalorder %s21, 1
      %p65 = por %p63, %p64
      %p67 = scmp.ne.s32.totalorder %s52, %s66
      %p68 = scmp.eq.s32.totalorder %s21, 0
      %p69 = por %p67, %p68
      %s70 = ssub.s32 %s15, %s22
      %p71 = scmp.eq.s32.totalorder %s70, 0
      %s73 = sadd.s32 %s72, 1
      %s74 = scalar_select %p71, %s72, %s73
      %p77 = pneg %p71
      %p78 = scmp.eq.s32.totalorder %s15, 1
      %p79 = por %p77, %p78
      %p80 = scmp.ne.s32.totalorder %s72, %s75
      %p81 = scmp.eq.s32.totalorder %s15, 0
      %p82 = por %p80, %p81
      %p83 = scmp.ne.s32.totalorder %s72, %s75
      %p84 = scmp.eq.s32.totalorder %s20, 1
      %p85 = por %p83, %p84
      %p86 = scmp.ne.s32.totalorder %s75, %s76
      %p87 = scmp.eq.s32.totalorder %s20, 0
      %p88 = por %p86, %p87
      %p89 = scmp.ne.s32.totalorder %s75, %s76
      %p90 = scmp.eq.s32.totalorder %s21, 1
      %p91 = por %p89, %p90
      %p93 = scmp.ne.s32.totalorder %s76, %s92
      %p94 = scmp.eq.s32.totalorder %s21, 0
      %p95 = por %p93, %p94
      %p96 = scmp.le.s32.totalorder 1, %s15
      %p97 = scmp.lt.s32.totalorder %s15, 3
      %p98 = pnand %p96, %p97
      %p99 = pneg %p98
      // Predicated region
      $region9: #{tpu_custom_call.1} parent=5 // pred_check
        _
      $region10: #{tpu_custom_call.1} parent=5 // pred_check_branch
        %101 = sbr.rel (%p98) target = $region12
      $region11: #{tpu_custom_call.1} parent=5 // pred_region
        %s102 = ssub.s32 %s15, 1
        // Predicated region
        $region13: #{tpu_custom_call.1} parent=11 // pred_check
          %p103 = pneg %p62
        $region14: #{tpu_custom_call.1} parent=11 // pred_check_branch
          %105 = sbr.rel (%p103) target = $region16
        $region15: #{tpu_custom_call.1} parent=11 // pred_region
          %107 = vsyncadd [#allocation6], 0
          %s109 = sshll.u32 %s1, 4
          %s110 = int_to_ptr.hbm [resolvable:$true] %s109
          %112 = dma.hbm_to_smem %s110, 128, [#allocation7], [#allocation6]
        $region16: #{tpu_custom_call.1} parent=11 // pred_fallthru
          _
      $region12: #{tpu_custom_call.1} parent=5 // pred_fallthru
        _
      %p113 = scmp.lt.s32.totalorder %s15, 2
      // Predicated region
      $region17: #{tpu_custom_call.1} parent=5 // pred_check
        %p114 = pneg %p113
      $region18: #{tpu_custom_call.1} parent=5 // pred_check_branch
        %116 = sbr.rel (%p114) target = $region20
      $region19: #{tpu_custom_call.1} parent=5 // pred_region
        // Predicated region
        $region21: #{tpu_custom_call.1} parent=19 // pred_check
          %p117 = pneg %p35
        $region22: #{tpu_custom_call.1} parent=19 // pred_check_branch
          %119 = sbr.rel (%p117) target = $region24
        $region23: #{tpu_custom_call.1} parent=19 // pred_region
          %s120 = sand.u32 %s25, 1
          %s121 = scalar_lea.sflag [#allocation4], %s120
          %s122 = sand.u32 %s25, 1
          %s123 = smul.addr %s122, 64
          %s124 = scalar_lea.vmem [#allocation3], %s123
          %126 = vsyncadd %s121, 0
          %s127 = smul.addr %s15, 8
          %s128 = smul.addr %s127, 8
          %s129 = scalar_lea.hbm %s0, %s128
          %s130 = sshll.u32 %s129, 4
          %s131 = int_to_ptr.hbm [resolvable:$true] %s130
          %s132 = sshll.u32 %s124, 4
          %s133 = int_to_ptr.vmem [resolvable:$true] %s132
          %138 = dma.hbm_to_vmem [thread:$0]  %s131, 1024, %s133, %s121, 128, 128, 8
        $region24: #{tpu_custom_call.1} parent=19 // pred_fallthru
          _
      $region20: #{tpu_custom_call.1} parent=5 // pred_fallthru
        _
      %p139 = scmp.le.s32.totalorder 1, %s15
      %p140 = scmp.lt.s32.totalorder %s15, 3
      %p141 = pnand %p139, %p140
      %p142 = pneg %p141
      // Predicated region
      $region25: #{tpu_custom_call.1} parent=5 // pred_check
        _
      $region26: #{tpu_custom_call.1} parent=5 // pred_check_branch
        %144 = sbr.rel (%p141) target = $region28
      $region27: #{tpu_custom_call.1} parent=5 // pred_region
        %s145 = ssub.s32 %s15, 1
        %s146 = sand.u32 %s28, 1
        %s147 = scalar_lea.sflag [#allocation4], %s146
        %s148 = sand.u32 %s28, 1
        %s149 = smul.addr %s148, 64
        %s150 = scalar_lea.vmem [#allocation3], %s149
        // Predicated region
        $region29: #{tpu_custom_call.1} parent=27 // pred_check
          %p151 = pneg %p41
        $region30: #{tpu_custom_call.1} parent=27 // pred_check_branch
          %153 = sbr.rel (%p151) target = $region32
        $region31: #{tpu_custom_call.1} parent=27 // pred_region
          %155 = dma.done %s147, 1024
        $region32: #{tpu_custom_call.1} parent=27 // pred_fallthru
          _
        // Predicated region
        $region33: #{tpu_custom_call.1} parent=27 // pred_check
          %p156 = pneg %p62
        $region34: #{tpu_custom_call.1} parent=27 // pred_check_branch
          %158 = sbr.rel (%p156) target = $region36
        $region35: #{tpu_custom_call.1} parent=27 // pred_region
          %160 = dma.done [#allocation6], 128
        $region36: #{tpu_custom_call.1} parent=27 // pred_fallthru
          _
        %161 = sfence
        %s162 = sand.u32 %s28, 1
        %s163 = scalar_lea.sflag [#allocation4], %s162
        %s164 = sand.u32 %s28, 1
        %s165 = smul.addr %s164, 64
        %s166 = scalar_lea.vmem [#allocation3], %s165
        %p167 = pneg %p41
        %p168 = pneg %p38
        %p169 = pneg %p62
        %p170 = pneg %p59
        %p171 = pneg %p88
        %p172 = pneg %p85
        %s173 = sand.u32 %s75, 1
        %s174 = scalar_lea.sflag [#allocation5], %s173
        %s175 = sand.u32 %s75, 1
        %s176 = smul.addr %s175, 128
        %s177 = scalar_lea.vmem [#allocation8], %s176
        %vm178 = vcmask 162816
        %179 = vst.msk [vmem:[#allocation2] sm:$0xff] %vm178, 0.0
        %180 = vst.msk [vmem:[#allocation2 + $0x8] sm:$0xff] %vm178, 0.0
        %vm181 = vcmask 158720
        %182 = vst.msk [vmem:[#allocation2 + $0x10] sm:$0xf] %vm181, 0.0
        %183 = vst.msk [vmem:[#allocation2 + $0x18] sm:$0xff] %vm178, 0.0
        %184 = vst.msk [vmem:[#allocation2 + $0x20] sm:$0xff] %vm178, 0.0
        %185 = vst.msk [vmem:[#allocation2 + $0x28] sm:$0xf] %vm181, 0.0
        %186 = vst.msk [vmem:[#allocation2 + $0x30] sm:$0xff] %vm178, 0.0
        %187 = vst.msk [vmem:[#allocation2 + $0x38] sm:$0xff] %vm178, 0.0
        %188 = vst.msk [vmem:[#allocation2 + $0x40] sm:$0xf] %vm181, 0.0
        %189 = vst.msk [vmem:[#allocation2 + $0x48] sm:$0xff] %vm178, 0.0
        %190 = vst.msk [vmem:[#allocation2 + $0x50] sm:$0xff] %vm178, 0.0
        %191 = vst.msk [vmem:[#allocation2 + $0x58] sm:$0xf] %vm181, 0.0
        %v192 = vld [vmem:[%s150] sm:$0xff]
        %v193 = vld [vmem:[%s150 + $0x8] sm:$0xff]
        %v194 = vld [vmem:[%s150 + $0x10] sm:$0xff]
        %v195 = vld [vmem:[%s150 + $0x18] sm:$0xff]
        %v196 = vld [vmem:[%s150 + $0x20] sm:$0xff]
        %v197 = vld [vmem:[%s150 + $0x28] sm:$0xff]
        %v198 = vld [vmem:[%s150 + $0x30] sm:$0xff]
        %v199 = vld [vmem:[%s150 + $0x38] sm:$0xff]
        %208 = vrot.lane.b32.xlu0 %v192, 2
        %v209 = vpop.permute.xlu0 %208
        %210 = vrot.lane.b32.xlu0 %v193, 2
        %v211 = vpop.permute.xlu0 %210
        %212 = vrot.lane.b32.xlu0 %v194, 2
        %v213 = vpop.permute.xlu0 %212
        %214 = vrot.lane.b32.xlu0 %v195, 2
        %v215 = vpop.permute.xlu0 %214
        %216 = vrot.lane.b32.xlu0 %v196, 2
        %v217 = vpop.permute.xlu0 %216
        %218 = vrot.lane.b32.xlu0 %v197, 2
        %v219 = vpop.permute.xlu0 %218
        %220 = vrot.lane.b32.xlu0 %v198, 2
        %v221 = vpop.permute.xlu0 %220
        %222 = vrot.lane.b32.xlu0 %v199, 2
        %v223 = vpop.permute.xlu0 %222
        %vm232 = vcmask 146448
        %233 = vst.msk [vmem:[#allocation2 + $0x2] sm:$0xff] %vm232, %v209
        %234 = vst.msk [vmem:[#allocation2 + $0xa] sm:$0xff] %vm232, %v211
        %235 = vst.msk [vmem:[#allocation2 + $0x1a] sm:$0xff] %vm232, %v213
        %236 = vst.msk [vmem:[#allocation2 + $0x22] sm:$0xff] %vm232, %v215
        %237 = vst.msk [vmem:[#allocation2 + $0x32] sm:$0xff] %vm232, %v217
        %238 = vst.msk [vmem:[#allocation2 + $0x3a] sm:$0xff] %vm232, %v219
        %239 = vst.msk [vmem:[#allocation2 + $0x4a] sm:$0xff] %vm232, %v221
        %240 = vst.msk [vmem:[#allocation2 + $0x52] sm:$0xff] %vm232, %v223
        %v241 = vld [vmem:[#allocation2] sm:$0xff]
        %v242 = vld [vmem:[#allocation2 + $0x8] sm:$0xff]
        %v243 = vld [vmem:[#allocation2 + $0x1] sm:$0xff]
        %v244 = vld [vmem:[#allocation2 + $0x9] sm:$0xff]
        %v245 = vld [vmem:[#allocation2 + $0x2] sm:$0xff]
        %v246 = vld [vmem:[#allocation2 + $0xa] sm:$0xff]
        %v247 = vld [vmem:[#allocation2 + $0x3] sm:$0xff]
        %v248 = vld [vmem:[#allocation2 + $0xb] sm:$0xff]
        %v249 = vld [vmem:[#allocation2 + $0x4] sm:$0xff]
        %v250 = vld [vmem:[#allocation2 + $0xc] sm:$0xff]
        %s251 = sld [smem:[#allocation7]]
        %v252 = vstv %s251
        %v253 = vmul.f32 %v252, %v241
        %v254 = vmul.f32 %v252, %v242
        %v255 = vadd.f32 %v253, 0.0
        %v256 = vadd.f32 %v254, 0.0
        %s257 = sld [smem:[#allocation7 + $0x1]]
        %v258 = vstv %s257
        %v259 = vmul.f32 %v258, %v241
        %v260 = vmul.f32 %v258, %v242
        %v261 = vadd.f32 %v259, 0.0
        %v262 = vadd.f32 %v260, 0.0
        %s263 = sld [smem:[#allocation7 + $0x2]]
        %v264 = vstv %s263
        %v265 = vmul.f32 %v264, %v241
        %v266 = vmul.f32 %v264, %v242
        %v267 = vadd.f32 %v265, 0.0
        %v268 = vadd.f32 %v266, 0.0
        %s269 = sld [smem:[#allocation7 + $0x3]]
        %v270 = vstv %s269
        %v271 = vmul.f32 %v270, %v241
        %v272 = vmul.f32 %v270, %v242
        %v273 = vadd.f32 %v271, 0.0
        %v274 = vadd.f32 %v272, 0.0
        %s275 = sld [smem:[#allocation7 + $0x4]]
        %v276 = vstv %s275
        %v277 = vmul.f32 %v276, %v241
        %v278 = vmul.f32 %v276, %v242
        %281 = vrot.lane.b32.xlu0 %v277, 124
        %v282 = vpop.permute.xlu0 %281
        %283 = vrot.lane.b32.xlu0 %v278, 124
        %v284 = vpop.permute.xlu0 %283
        %v287 = vadd.f32 %v255, %v282
        %v288 = vadd.f32 %v256, %v284
        %s289 = sld [smem:[#allocation7 + $0x5]]
        %v290 = vstv %s289
        %v291 = vmul.f32 %v290, %v243
        %v292 = vmul.f32 %v290, %v244
        %295 = vrot.lane.b32.xlu0 %v291, 1
        %v296 = vpop.permute.xlu0 %295
        %297 = vrot.lane.b32.xlu0 %v292, 1
        %v298 = vpop.permute.xlu0 %297
        %v301 = vadd.f32 %v261, %v296
        %v302 = vadd.f32 %v262, %v298
        %s303 = sld [smem:[#allocation7 + $0x6]]
        %v304 = vstv %s303
        %v305 = vmul.f32 %v304, %v243
        %v306 = vmul.f32 %v304, %v244
        %309 = vrot.lane.b32.xlu0 %v305, 1
        %v310 = vpop.permute.xlu0 %309
        %311 = vrot.lane.b32.xlu0 %v306, 1
        %v312 = vpop.permute.xlu0 %311
        %v315 = vadd.f32 %v267, %v310
        %v316 = vadd.f32 %v268, %v312
        %s317 = sld [smem:[#allocation7 + $0x7]]
        %v318 = vstv %s317
        %v319 = vmul.f32 %v318, %v243
        %v320 = vmul.f32 %v318, %v244
        %323 = vrot.lane.b32.xlu0 %v319, 1
        %v324 = vpop.permute.xlu0 %323
        %325 = vrot.lane.b32.xlu0 %v320, 1
        %v326 = vpop.permute.xlu0 %325
        %v329 = vadd.f32 %v273, %v324
        %v330 = vadd.f32 %v274, %v326
        %s331 = sld [smem:[#allocation7 + $0x8]]
        %v332 = vstv %s331
        %v333 = vmul.f32 %v332, %v243
        %v334 = vmul.f32 %v332, %v244
        %337 = vrot.lane.b32.xlu0 %v333, 125
        %v338 = vpop.permute.xlu0 %337
        %339 = vrot.lane.b32.xlu0 %v334, 125
        %v340 = vpop.permute.xlu0 %339
        %v343 = vadd.f32 %v287, %v338
        %v344 = vadd.f32 %v288, %v340
        %s345 = sld [smem:[#allocation7 + $0x9]]
        %v346 = vstv %s345
        %v347 = vmul.f32 %v346, %v243
        %v348 = vmul.f32 %v346, %v244
        %351 = vrot.lane.b32.xlu0 %v347, 125
        %v352 = vpop.permute.xlu0 %351
        %353 = vrot.lane.b32.xlu0 %v348, 125
        %v354 = vpop.permute.xlu0 %353
        %v357 = vadd.f32 %v301, %v352
        %v358 = vadd.f32 %v302, %v354
        %s359 = sld [smem:[#allocation7 + $0xa]]
        %v360 = vstv %s359
        %v361 = vmul.f32 %v360, %v245
        %v362 = vmul.f32 %v360, %v246
        %365 = vrot.lane.b32.xlu0 %v361, 2
        %v366 = vpop.permute.xlu0 %365
        %367 = vrot.lane.b32.xlu0 %v362, 2
        %v368 = vpop.permute.xlu0 %367
        %v371 = vadd.f32 %v315, %v366
        %v372 = vadd.f32 %v316, %v368
        %s373 = sld [smem:[#allocation7 + $0xb]]
        %v374 = vstv %s373
        %v375 = vmul.f32 %v374, %v245
        %v376 = vmul.f32 %v374, %v246
        %379 = vrot.lane.b32.xlu0 %v375, 2
        %v380 = vpop.permute.xlu0 %379
        %381 = vrot.lane.b32.xlu0 %v376, 2
        %v382 = vpop.permute.xlu0 %381
        %v385 = vadd.f32 %v329, %v380
        %v386 = vadd.f32 %v330, %v382
        %s387 = sld [smem:[#allocation7 + $0xc]]
        %v388 = vstv %s387
        %v389 = vmul.f32 %v388, %v245
        %v390 = vmul.f32 %v388, %v246
        %393 = vrot.lane.b32.xlu0 %v389, 126
        %v394 = vpop.permute.xlu0 %393
        %395 = vrot.lane.b32.xlu0 %v390, 126
        %v396 = vpop.permute.xlu0 %395
        %v399 = vadd.f32 %v343, %v394
        %v400 = vadd.f32 %v344, %v396
        %s401 = sld [smem:[#allocation7 + $0xd]]
        %v402 = vstv %s401
        %v403 = vmul.f32 %v402, %v245
        %v404 = vmul.f32 %v402, %v246
        %407 = vrot.lane.b32.xlu0 %v403, 126
        %v408 = vpop.permute.xlu0 %407
        %409 = vrot.lane.b32.xlu0 %v404, 126
        %v410 = vpop.permute.xlu0 %409
        %v413 = vadd.f32 %v357, %v408
        %v414 = vadd.f32 %v358, %v410
        %s415 = sld [smem:[#allocation7 + $0xe]]
        %v416 = vstv %s415
        %v417 = vmul.f32 %v416, %v245
        %v418 = vmul.f32 %v416, %v246
        %421 = vrot.lane.b32.xlu0 %v417, 126
        %v422 = vpop.permute.xlu0 %421
        %423 = vrot.lane.b32.xlu0 %v418, 126
        %v424 = vpop.permute.xlu0 %423
        %v427 = vadd.f32 %v371, %v422
        %v428 = vadd.f32 %v372, %v424
        %s429 = sld [smem:[#allocation7 + $0xf]]
        %v430 = vstv %s429
        %v431 = vmul.f32 %v430, %v247
        %v432 = vmul.f32 %v430, %v248
        %435 = vrot.lane.b32.xlu0 %v431, 3
        %v436 = vpop.permute.xlu0 %435
        %437 = vrot.lane.b32.xlu0 %v432, 3
        %v438 = vpop.permute.xlu0 %437
        %v441 = vadd.f32 %v385, %v436
        %v442 = vadd.f32 %v386, %v438
        %s443 = sld [smem:[#allocation7 + $0x10]]
        %v444 = vstv %s443
        %v445 = vmul.f32 %v444, %v247
        %v446 = vmul.f32 %v444, %v248
        %449 = vrot.lane.b32.xlu0 %v445, 127
        %v450 = vpop.permute.xlu0 %449
        %451 = vrot.lane.b32.xlu0 %v446, 127
        %v452 = vpop.permute.xlu0 %451
        %v455 = vadd.f32 %v399, %v450
        %v456 = vadd.f32 %v400, %v452
        %s457 = sld [smem:[#allocation7 + $0x11]]
        %v458 = vstv %s457
        %v459 = vmul.f32 %v458, %v247
        %v460 = vmul.f32 %v458, %v248
        %463 = vrot.lane.b32.xlu0 %v459, 127
        %v464 = vpop.permute.xlu0 %463
        %465 = vrot.lane.b32.xlu0 %v460, 127
        %v466 = vpop.permute.xlu0 %465
        %v469 = vadd.f32 %v413, %v464
        %v470 = vadd.f32 %v414, %v466
        %s471 = sld [smem:[#allocation7 + $0x12]]
        %v472 = vstv %s471
        %v473 = vmul.f32 %v472, %v247
        %v474 = vmul.f32 %v472, %v248
        %477 = vrot.lane.b32.xlu0 %v473, 127
        %v478 = vpop.permute.xlu0 %477
        %479 = vrot.lane.b32.xlu0 %v474, 127
        %v480 = vpop.permute.xlu0 %479
        %v483 = vadd.f32 %v427, %v478
        %v484 = vadd.f32 %v428, %v480
        %s485 = sld [smem:[#allocation7 + $0x13]]
        %v486 = vstv %s485
        %v487 = vmul.f32 %v486, %v247
        %v488 = vmul.f32 %v486, %v248
        %491 = vrot.lane.b32.xlu0 %v487, 127
        %v492 = vpop.permute.xlu0 %491
        %493 = vrot.lane.b32.xlu0 %v488, 127
        %v494 = vpop.permute.xlu0 %493
        %v497 = vadd.f32 %v441, %v492
        %v498 = vadd.f32 %v442, %v494
        %s499 = sld [smem:[#allocation7 + $0x14]]
        %v500 = vstv %s499
        %v501 = vmul.f32 %v500, %v249
        %v502 = vmul.f32 %v500, %v250
        %v503 = vadd.f32 %v455, %v501
        %v504 = vadd.f32 %v456, %v502
        %s505 = sld [smem:[#allocation7 + $0x15]]
        %v506 = vstv %s505
        %v507 = vmul.f32 %v506, %v249
        %v508 = vmul.f32 %v506, %v250
        %v509 = vadd.f32 %v469, %v507
        %v510 = vadd.f32 %v470, %v508
        %s511 = sld [smem:[#allocation7 + $0x16]]
        %v512 = vstv %s511
        %v513 = vmul.f32 %v512, %v249
        %v514 = vmul.f32 %v512, %v250
        %v515 = vadd.f32 %v483, %v513
        %v516 = vadd.f32 %v484, %v514
        %s517 = sld [smem:[#allocation7 + $0x17]]
        %v518 = vstv %s517
        %v519 = vmul.f32 %v518, %v249
        %v520 = vmul.f32 %v518, %v250
        %v521 = vadd.f32 %v497, %v519
        %v522 = vadd.f32 %v498, %v520
        %s523 = sld [smem:[#allocation7 + $0x18]]
        %v524 = vstv %s523
        %v525 = vmul.f32 %v524, %v249
        %v526 = vmul.f32 %v524, %v250
        %529 = vrot.lane.b32.xlu0 %v525, 124
        %v530 = vpop.permute.xlu0 %529
        %531 = vrot.lane.b32.xlu0 %v526, 124
        %v532 = vpop.permute.xlu0 %531
        %v535 = vadd.f32 %v503, %v530
        %v536 = vadd.f32 %v504, %v532
        %539 = vrot.lane.b32.xlu0 %v509, 127
        %v540 = vpop.permute.xlu0 %539
        %541 = vrot.lane.b32.xlu0 %v510, 127
        %v542 = vpop.permute.xlu0 %541
        %v545 = vadd.f32 %v535, %v540
        %v546 = vadd.f32 %v536, %v542
        %549 = vrot.lane.b32.xlu0 %v521, 127
        %v550 = vpop.permute.xlu0 %549
        %551 = vrot.lane.b32.xlu0 %v522, 127
        %v552 = vpop.permute.xlu0 %551
        %v555 = vadd.f32 %v515, %v550
        %v556 = vadd.f32 %v516, %v552
        %559 = vrot.lane.b32.xlu0 %v555, 126
        %v560 = vpop.permute.xlu0 %559
        %561 = vrot.lane.b32.xlu0 %v556, 126
        %v562 = vpop.permute.xlu0 %561
        %v565 = vadd.f32 %v545, %v560
        %v566 = vadd.f32 %v546, %v562
        %vm567 = vcmask 130048
        %568 = vst.msk [vmem:[%s177] sm:$0xff] %vm567, %v565
        %569 = vst.msk [vmem:[%s177 + $0x8] sm:$0xff] %vm567, %v566
        %s570 = sld [smem:[#allocation7 + $0x80]]
        %v571 = vstv %s570
        %v572 = vmul.f32 %v571, %v241
        %v573 = vmul.f32 %v571, %v242
        %v574 = vadd.f32 %v572, 0.0
        %v575 = vadd.f32 %v573, 0.0
        %s576 = sld [smem:[#allocation7 + $0x81]]
        %v577 = vstv %s576
        %v578 = vmul.f32 %v577, %v241
        %v579 = vmul.f32 %v577, %v242
        %v580 = vadd.f32 %v578, 0.0
        %v581 = vadd.f32 %v579, 0.0
        %s582 = sld [smem:[#allocation7 + $0x82]]
        %v583 = vstv %s582
        %v584 = vmul.f32 %v583, %v241
        %v585 = vmul.f32 %v583, %v242
        %v586 = vadd.f32 %v584, 0.0
        %v587 = vadd.f32 %v585, 0.0
        %s588 = sld [smem:[#allocation7 + $0x83]]
        %v589 = vstv %s588
        %v590 = vmul.f32 %v589, %v241
        %v591 = vmul.f32 %v589, %v242
        %v592 = vadd.f32 %v590, 0.0
        %v593 = vadd.f32 %v591, 0.0
        %s594 = sld [smem:[#allocation7 + $0x84]]
        %v595 = vstv %s594
        %v596 = vmul.f32 %v595, %v241
        %v597 = vmul.f32 %v595, %v242
        %600 = vrot.lane.b32.xlu0 %v596, 124
        %v601 = vpop.permute.xlu0 %600
        %602 = vrot.lane.b32.xlu0 %v597, 124
        %v603 = vpop.permute.xlu0 %602
        %v606 = vadd.f32 %v574, %v601
        %v607 = vadd.f32 %v575, %v603
        %s608 = sld [smem:[#allocation7 + $0x85]]
        %v609 = vstv %s608
        %v610 = vmul.f32 %v609, %v243
        %v611 = vmul.f32 %v609, %v244
        %614 = vrot.lane.b32.xlu0 %v610, 1
        %v615 = vpop.permute.xlu0 %614
        %616 = vrot.lane.b32.xlu0 %v611, 1
        %v617 = vpop.permute.xlu0 %616
        %v620 = vadd.f32 %v580, %v615
        %v621 = vadd.f32 %v581, %v617
        %s622 = sld [smem:[#allocation7 + $0x86]]
        %v623 = vstv %s622
        %v624 = vmul.f32 %v623, %v243
        %v625 = vmul.f32 %v623, %v244
        %628 = vrot.lane.b32.xlu0 %v624, 1
        %v629 = vpop.permute.xlu0 %628
        %630 = vrot.lane.b32.xlu0 %v625, 1
        %v631 = vpop.permute.xlu0 %630
        %v634 = vadd.f32 %v586, %v629
        %v635 = vadd.f32 %v587, %v631
        %s636 = sld [smem:[#allocation7 + $0x87]]
        %v637 = vstv %s636
        %v638 = vmul.f32 %v637, %v243
        %v639 = vmul.f32 %v637, %v244
        %642 = vrot.lane.b32.xlu0 %v638, 1
        %v643 = vpop.permute.xlu0 %642
        %644 = vrot.lane.b32.xlu0 %v639, 1
        %v645 = vpop.permute.xlu0 %644
        %v648 = vadd.f32 %v592, %v643
        %v649 = vadd.f32 %v593, %v645
        %s650 = sld [smem:[#allocation7 + $0x88]]
        %v651 = vstv %s650
        %v652 = vmul.f32 %v651, %v243
        %v653 = vmul.f32 %v651, %v244
        %656 = vrot.lane.b32.xlu0 %v652, 125
        %v657 = vpop.permute.xlu0 %656
        %658 = vrot.lane.b32.xlu0 %v653, 125
        %v659 = vpop.permute.xlu0 %658
        %v662 = vadd.f32 %v606, %v657
        %v663 = vadd.f32 %v607, %v659
        %s664 = sld [smem:[#allocation7 + $0x89]]
        %v665 = vstv %s664
        %v666 = vmul.f32 %v665, %v243
        %v667 = vmul.f32 %v665, %v244
        %670 = vrot.lane.b32.xlu0 %v666, 125
        %v671 = vpop.permute.xlu0 %670
        %672 = vrot.lane.b32.xlu0 %v667, 125
        %v673 = vpop.permute.xlu0 %672
        %v676 = vadd.f32 %v620, %v671
        %v677 = vadd.f32 %v621, %v673
        %s678 = sld [smem:[#allocation7 + $0x8a]]
        %v679 = vstv %s678
        %v680 = vmul.f32 %v679, %v245
        %v681 = vmul.f32 %v679, %v246
        %684 = vrot.lane.b32.xlu0 %v680, 2
        %v685 = vpop.permute.xlu0 %684
        %686 = vrot.lane.b32.xlu0 %v681, 2
        %v687 = vpop.permute.xlu0 %686
        %v690 = vadd.f32 %v634, %v685
        %v691 = vadd.f32 %v635, %v687
        %s692 = sld [smem:[#allocation7 + $0x8b]]
        %v693 = vstv %s692
        %v694 = vmul.f32 %v693, %v245
        %v695 = vmul.f32 %v693, %v246
        %698 = vrot.lane.b32.xlu0 %v694, 2
        %v699 = vpop.permute.xlu0 %698
        %700 = vrot.lane.b32.xlu0 %v695, 2
        %v701 = vpop.permute.xlu0 %700
        %v704 = vadd.f32 %v648, %v699
        %v705 = vadd.f32 %v649, %v701
        %s706 = sld [smem:[#allocation7 + $0x8c]]
        %v707 = vstv %s706
        %v708 = vmul.f32 %v707, %v245
        %v709 = vmul.f32 %v707, %v246
        %712 = vrot.lane.b32.xlu0 %v708, 126
        %v713 = vpop.permute.xlu0 %712
        %714 = vrot.lane.b32.xlu0 %v709, 126
        %v715 = vpop.permute.xlu0 %714
        %v718 = vadd.f32 %v662, %v713
        %v719 = vadd.f32 %v663, %v715
        %s720 = sld [smem:[#allocation7 + $0x8d]]
        %v721 = vstv %s720
        %v722 = vmul.f32 %v721, %v245
        %v723 = vmul.f32 %v721, %v246
        %726 = vrot.lane.b32.xlu0 %v722, 126
        %v727 = vpop.permute.xlu0 %726
        %728 = vrot.lane.b32.xlu0 %v723, 126
        %v729 = vpop.permute.xlu0 %728
        %v732 = vadd.f32 %v676, %v727
        %v733 = vadd.f32 %v677, %v729
        %s734 = sld [smem:[#allocation7 + $0x8e]]
        %v735 = vstv %s734
        %v736 = vmul.f32 %v735, %v245
        %v737 = vmul.f32 %v735, %v246
        %740 = vrot.lane.b32.xlu0 %v736, 126
        %v741 = vpop.permute.xlu0 %740
        %742 = vrot.lane.b32.xlu0 %v737, 126
        %v743 = vpop.permute.xlu0 %742
        %v746 = vadd.f32 %v690, %v741
        %v747 = vadd.f32 %v691, %v743
        %s748 = sld [smem:[#allocation7 + $0x8f]]
        %v749 = vstv %s748
        %v750 = vmul.f32 %v749, %v247
        %v751 = vmul.f32 %v749, %v248
        %754 = vrot.lane.b32.xlu0 %v750, 3
        %v755 = vpop.permute.xlu0 %754
        %756 = vrot.lane.b32.xlu0 %v751, 3
        %v757 = vpop.permute.xlu0 %756
        %v760 = vadd.f32 %v704, %v755
        %v761 = vadd.f32 %v705, %v757
        %s762 = sld [smem:[#allocation7 + $0x90]]
        %v763 = vstv %s762
        %v764 = vmul.f32 %v763, %v247
        %v765 = vmul.f32 %v763, %v248
        %768 = vrot.lane.b32.xlu0 %v764, 127
        %v769 = vpop.permute.xlu0 %768
        %770 = vrot.lane.b32.xlu0 %v765, 127
        %v771 = vpop.permute.xlu0 %770
        %v774 = vadd.f32 %v718, %v769
        %v775 = vadd.f32 %v719, %v771
        %s776 = sld [smem:[#allocation7 + $0x91]]
        %v777 = vstv %s776
        %v778 = vmul.f32 %v777, %v247
        %v779 = vmul.f32 %v777, %v248
        %782 = vrot.lane.b32.xlu0 %v778, 127
        %v783 = vpop.permute.xlu0 %782
        %784 = vrot.lane.b32.xlu0 %v779, 127
        %v785 = vpop.permute.xlu0 %784
        %v788 = vadd.f32 %v732, %v783
        %v789 = vadd.f32 %v733, %v785
        %s790 = sld [smem:[#allocation7 + $0x92]]
        %v791 = vstv %s790
        %v792 = vmul.f32 %v791, %v247
        %v793 = vmul.f32 %v791, %v248
        %796 = vrot.lane.b32.xlu0 %v792, 127
        %v797 = vpop.permute.xlu0 %796
        %798 = vrot.lane.b32.xlu0 %v793, 127
        %v799 = vpop.permute.xlu0 %798
        %v802 = vadd.f32 %v746, %v797
        %v803 = vadd.f32 %v747, %v799
        %s804 = sld [smem:[#allocation7 + $0x93]]
        %v805 = vstv %s804
        %v806 = vmul.f32 %v805, %v247
        %v807 = vmul.f32 %v805, %v248
        %810 = vrot.lane.b32.xlu0 %v806, 127
        %v811 = vpop.permute.xlu0 %810
        %812 = vrot.lane.b32.xlu0 %v807, 127
        %v813 = vpop.permute.xlu0 %812
        %v816 = vadd.f32 %v760, %v811
        %v817 = vadd.f32 %v761, %v813
        %s818 = sld [smem:[#allocation7 + $0x94]]
        %v819 = vstv %s818
        %v820 = vmul.f32 %v819, %v249
        %v821 = vmul.f32 %v819, %v250
        %v822 = vadd.f32 %v774, %v820
        %v823 = vadd.f32 %v775, %v821
        %s824 = sld [smem:[#allocation7 + $0x95]]
        %v825 = vstv %s824
        %v826 = vmul.f32 %v825, %v249
        %v827 = vmul.f32 %v825, %v250
        %v828 = vadd.f32 %v788, %v826
        %v829 = vadd.f32 %v789, %v827
        %s830 = sld [smem:[#allocation7 + $0x96]]
        %v831 = vstv %s830
        %v832 = vmul.f32 %v831, %v249
        %v833 = vmul.f32 %v831, %v250
        %v834 = vadd.f32 %v802, %v832
        %v835 = vadd.f32 %v803, %v833
        %s836 = sld [smem:[#allocation7 + $0x97]]
        %v837 = vstv %s836
        %v838 = vmul.f32 %v837, %v249
        %v839 = vmul.f32 %v837, %v250
        %v840 = vadd.f32 %v816, %v838
        %v841 = vadd.f32 %v817, %v839
        %s842 = sld [smem:[#allocation7 + $0x98]]
        %v843 = vstv %s842
        %v844 = vmul.f32 %v843, %v249
        %v845 = vmul.f32 %v843, %v250
        %848 = vrot.lane.b32.xlu0 %v844, 124
        %v849 = vpop.permute.xlu0 %848
        %850 = vrot.lane.b32.xlu0 %v845, 124
        %v851 = vpop.permute.xlu0 %850
        %v854 = vadd.f32 %v822, %v849
        %v855 = vadd.f32 %v823, %v851
        %858 = vrot.lane.b32.xlu0 %v828, 127
        %v859 = vpop.permute.xlu0 %858
        %860 = vrot.lane.b32.xlu0 %v829, 127
        %v861 = vpop.permute.xlu0 %860
        %v864 = vadd.f32 %v854, %v859
        %v865 = vadd.f32 %v855, %v861
        %868 = vrot.lane.b32.xlu0 %v840, 127
        %v869 = vpop.permute.xlu0 %868
        %870 = vrot.lane.b32.xlu0 %v841, 127
        %v871 = vpop.permute.xlu0 %870
        %v874 = vadd.f32 %v834, %v869
        %v875 = vadd.f32 %v835, %v871
        %878 = vrot.lane.b32.xlu0 %v874, 126
        %v879 = vpop.permute.xlu0 %878
        %880 = vrot.lane.b32.xlu0 %v875, 126
        %v881 = vpop.permute.xlu0 %880
        %v884 = vadd.f32 %v864, %v879
        %v885 = vadd.f32 %v865, %v881
        %s886 = scalar_lea.vmem %s177, 16 [#allocation8]
        %887 = vst.msk [vmem:[%s886] sm:$0xff] %vm567, %v884
        %888 = vst.msk [vmem:[%s886 + $0x8] sm:$0xff] %vm567, %v885
        %s889 = scalar_lea.vmem [#allocation2], 24
        %v890 = vld [vmem:[%s889] sm:$0xff]
        %v891 = vld [vmem:[%s889 + $0x8] sm:$0xff]
        %v892 = vld [vmem:[%s889 + $0x1] sm:$0xff]
        %v893 = vld [vmem:[%s889 + $0x9] sm:$0xff]
        %v894 = vld [vmem:[%s889 + $0x2] sm:$0xff]
        %v895 = vld [vmem:[%s889 + $0xa] sm:$0xff]
        %v896 = vld [vmem:[%s889 + $0x3] sm:$0xff]
        %v897 = vld [vmem:[%s889 + $0xb] sm:$0xff]
        %v898 = vld [vmem:[%s889 + $0x4] sm:$0xff]
        %v899 = vld [vmem:[%s889 + $0xc] sm:$0xff]
        %s900 = sld [smem:[#allocation7 + $0x100]]
        %v901 = vstv %s900
        %v902 = vmul.f32 %v901, %v890
        %v903 = vmul.f32 %v901, %v891
        %v904 = vadd.f32 %v902, 0.0
        %v905 = vadd.f32 %v903, 0.0
        %s906 = sld [smem:[#allocation7 + $0x101]]
        %v907 = vstv %s906
        %v908 = vmul.f32 %v907, %v890
        %v909 = vmul.f32 %v907, %v891
        %v910 = vadd.f32 %v908, 0.0
        %v911 = vadd.f32 %v909, 0.0
        %s912 = sld [smem:[#allocation7 + $0x102]]
        %v913 = vstv %s912
        %v914 = vmul.f32 %v913, %v890
        %v915 = vmul.f32 %v913, %v891
        %v916 = vadd.f32 %v914, 0.0
        %v917 = vadd.f32 %v915, 0.0
        %s918 = sld [smem:[#allocation7 + $0x103]]
        %v919 = vstv %s918
        %v920 = vmul.f32 %v919, %v890
        %v921 = vmul.f32 %v919, %v891
        %v922 = vadd.f32 %v920, 0.0
        %v923 = vadd.f32 %v921, 0.0
        %s924 = sld [smem:[#allocation7 + $0x104]]
        %v925 = vstv %s924
        %v926 = vmul.f32 %v925, %v890
        %v927 = vmul.f32 %v925, %v891
        %930 = vrot.lane.b32.xlu0 %v926, 124
        %v931 = vpop.permute.xlu0 %930
        %932 = vrot.lane.b32.xlu0 %v927, 124
        %v933 = vpop.permute.xlu0 %932
        %v936 = vadd.f32 %v904, %v931
        %v937 = vadd.f32 %v905, %v933
        %s938 = sld [smem:[#allocation7 + $0x105]]
        %v939 = vstv %s938
        %v940 = vmul.f32 %v939, %v892
        %v941 = vmul.f32 %v939, %v893
        %944 = vrot.lane.b32.xlu0 %v940, 1
        %v945 = vpop.permute.xlu0 %944
        %946 = vrot.lane.b32.xlu0 %v941, 1
        %v947 = vpop.permute.xlu0 %946
        %v950 = vadd.f32 %v910, %v945
        %v951 = vadd.f32 %v911, %v947
        %s952 = sld [smem:[#allocation7 + $0x106]]
        %v953 = vstv %s952
        %v954 = vmul.f32 %v953, %v892
        %v955 = vmul.f32 %v953, %v893
        %958 = vrot.lane.b32.xlu0 %v954, 1
        %v959 = vpop.permute.xlu0 %958
        %960 = vrot.lane.b32.xlu0 %v955, 1
        %v961 = vpop.permute.xlu0 %960
        %v964 = vadd.f32 %v916, %v959
        %v965 = vadd.f32 %v917, %v961
        %s966 = sld [smem:[#allocation7 + $0x107]]
        %v967 = vstv %s966
        %v968 = vmul.f32 %v967, %v892
        %v969 = vmul.f32 %v967, %v893
        %972 = vrot.lane.b32.xlu0 %v968, 1
        %v973 = vpop.permute.xlu0 %972
        %974 = vrot.lane.b32.xlu0 %v969, 1
        %v975 = vpop.permute.xlu0 %974
        %v978 = vadd.f32 %v922, %v973
        %v979 = vadd.f32 %v923, %v975
        %s980 = sld [smem:[#allocation7 + $0x108]]
        %v981 = vstv %s980
        %v982 = vmul.f32 %v981, %v892
        %v983 = vmul.f32 %v981, %v893
        %986 = vrot.lane.b32.xlu0 %v982, 125
        %v987 = vpop.permute.xlu0 %986
        %988 = vrot.lane.b32.xlu0 %v983, 125
        %v989 = vpop.permute.xlu0 %988
        %v992 = vadd.f32 %v936, %v987
        %v993 = vadd.f32 %v937, %v989
        %s994 = sld [smem:[#allocation7 + $0x109]]
        %v995 = vstv %s994
        %v996 = vmul.f32 %v995, %v892
        %v997 = vmul.f32 %v995, %v893
        %1000 = vrot.lane.b32.xlu0 %v996, 125
        %v1001 = vpop.permute.xlu0 %1000
        %1002 = vrot.lane.b32.xlu0 %v997, 125
        %v1003 = vpop.permute.xlu0 %1002
        %v1006 = vadd.f32 %v950, %v1001
        %v1007 = vadd.f32 %v951, %v1003
        %s1008 = sld [smem:[#allocation7 + $0x10a]]
        %v1009 = vstv %s1008
        %v1010 = vmul.f32 %v1009, %v894
        %v1011 = vmul.f32 %v1009, %v895
        %1014 = vrot.lane.b32.xlu0 %v1010, 2
        %v1015 = vpop.permute.xlu0 %1014
        %1016 = vrot.lane.b32.xlu0 %v1011, 2
        %v1017 = vpop.permute.xlu0 %1016
        %v1020 = vadd.f32 %v964, %v1015
        %v1021 = vadd.f32 %v965, %v1017
        %s1022 = sld [smem:[#allocation7 + $0x10b]]
        %v1023 = vstv %s1022
        %v1024 = vmul.f32 %v1023, %v894
        %v1025 = vmul.f32 %v1023, %v895
        %1028 = vrot.lane.b32.xlu0 %v1024, 2
        %v1029 = vpop.permute.xlu0 %1028
        %1030 = vrot.lane.b32.xlu0 %v1025, 2
        %v1031 = vpop.permute.xlu0 %1030
        %v1034 = vadd.f32 %v978, %v1029
        %v1035 = vadd.f32 %v979, %v1031
        %s1036 = sld [smem:[#allocation7 + $0x10c]]
        %v1037 = vstv %s1036
        %v1038 = vmul.f32 %v1037, %v894
        %v1039 = vmul.f32 %v1037, %v895
        %1042 = vrot.lane.b32.xlu0 %v1038, 126
        %v1043 = vpop.permute.xlu0 %1042
        %1044 = vrot.lane.b32.xlu0 %v1039, 126
        %v1045 = vpop.permute.xlu0 %1044
        %v1048 = vadd.f32 %v992, %v1043
        %v1049 = vadd.f32 %v993, %v1045
        %s1050 = sld [smem:[#allocation7 + $0x10d]]
        %v1051 = vstv %s1050
        %v1052 = vmul.f32 %v1051, %v894
        %v1053 = vmul.f32 %v1051, %v895
        %1056 = vrot.lane.b32.xlu0 %v1052, 126
        %v1057 = vpop.permute.xlu0 %1056
        %1058 = vrot.lane.b32.xlu0 %v1053, 126
        %v1059 = vpop.permute.xlu0 %1058
        %v1062 = vadd.f32 %v1006, %v1057
        %v1063 = vadd.f32 %v1007, %v1059
        %s1064 = sld [smem:[#allocation7 + $0x10e]]
        %v1065 = vstv %s1064
        %v1066 = vmul.f32 %v1065, %v894
        %v1067 = vmul.f32 %v1065, %v895
        %1070 = vrot.lane.b32.xlu0 %v1066, 126
        %v1071 = vpop.permute.xlu0 %1070
        %1072 = vrot.lane.b32.xlu0 %v1067, 126
        %v1073 = vpop.permute.xlu0 %1072
        %v1076 = vadd.f32 %v1020, %v1071
        %v1077 = vadd.f32 %v1021, %v1073
        %s1078 = sld [smem:[#allocation7 + $0x10f]]
        %v1079 = vstv %s1078
        %v1080 = vmul.f32 %v1079, %v896
        %v1081 = vmul.f32 %v1079, %v897
        %1084 = vrot.lane.b32.xlu0 %v1080, 3
        %v1085 = vpop.permute.xlu0 %1084
        %1086 = vrot.lane.b32.xlu0 %v1081, 3
        %v1087 = vpop.permute.xlu0 %1086
        %v1090 = vadd.f32 %v1034, %v1085
        %v1091 = vadd.f32 %v1035, %v1087
        %s1092 = sld [smem:[#allocation7 + $0x110]]
        %v1093 = vstv %s1092
        %v1094 = vmul.f32 %v1093, %v896
        %v1095 = vmul.f32 %v1093, %v897
        %1098 = vrot.lane.b32.xlu0 %v1094, 127
        %v1099 = vpop.permute.xlu0 %1098
        %1100 = vrot.lane.b32.xlu0 %v1095, 127
        %v1101 = vpop.permute.xlu0 %1100
        %v1104 = vadd.f32 %v1048, %v1099
        %v1105 = vadd.f32 %v1049, %v1101
        %s1106 = sld [smem:[#allocation7 + $0x111]]
        %v1107 = vstv %s1106
        %v1108 = vmul.f32 %v1107, %v896
        %v1109 = vmul.f32 %v1107, %v897
        %1112 = vrot.lane.b32.xlu0 %v1108, 127
        %v1113 = vpop.permute.xlu0 %1112
        %1114 = vrot.lane.b32.xlu0 %v1109, 127
        %v1115 = vpop.permute.xlu0 %1114
        %v1118 = vadd.f32 %v1062, %v1113
        %v1119 = vadd.f32 %v1063, %v1115
        %s1120 = sld [smem:[#allocation7 + $0x112]]
        %v1121 = vstv %s1120
        %v1122 = vmul.f32 %v1121, %v896
        %v1123 = vmul.f32 %v1121, %v897
        %1126 = vrot.lane.b32.xlu0 %v1122, 127
        %v1127 = vpop.permute.xlu0 %1126
        %1128 = vrot.lane.b32.xlu0 %v1123, 127
        %v1129 = vpop.permute.xlu0 %1128
        %v1132 = vadd.f32 %v1076, %v1127
        %v1133 = vadd.f32 %v1077, %v1129
        %s1134 = sld [smem:[#allocation7 + $0x113]]
        %v1135 = vstv %s1134
        %v1136 = vmul.f32 %v1135, %v896
        %v1137 = vmul.f32 %v1135, %v897
        %1140 = vrot.lane.b32.xlu0 %v1136, 127
        %v1141 = vpop.permute.xlu0 %1140
        %1142 = vrot.lane.b32.xlu0 %v1137, 127
        %v1143 = vpop.permute.xlu0 %1142
        %v1146 = vadd.f32 %v1090, %v1141
        %v1147 = vadd.f32 %v1091, %v1143
        %s1148 = sld [smem:[#allocation7 + $0x114]]
        %v1149 = vstv %s1148
        %v1150 = vmul.f32 %v1149, %v898
        %v1151 = vmul.f32 %v1149, %v899
        %v1152 = vadd.f32 %v1104, %v1150
        %v1153 = vadd.f32 %v1105, %v1151
        %s1154 = sld [smem:[#allocation7 + $0x115]]
        %v1155 = vstv %s1154
        %v1156 = vmul.f32 %v1155, %v898
        %v1157 = vmul.f32 %v1155, %v899
        %v1158 = vadd.f32 %v1118, %v1156
        %v1159 = vadd.f32 %v1119, %v1157
        %s1160 = sld [smem:[#allocation7 + $0x116]]
        %v1161 = vstv %s1160
        %v1162 = vmul.f32 %v1161, %v898
        %v1163 = vmul.f32 %v1161, %v899
        %v1164 = vadd.f32 %v1132, %v1162
        %v1165 = vadd.f32 %v1133, %v1163
        %s1166 = sld [smem:[#allocation7 + $0x117]]
        %v1167 = vstv %s1166
        %v1168 = vmul.f32 %v1167, %v898
        %v1169 = vmul.f32 %v1167, %v899
        %v1170 = vadd.f32 %v1146, %v1168
        %v1171 = vadd.f32 %v1147, %v1169
        %s1172 = sld [smem:[#allocation7 + $0x118]]
        %v1173 = vstv %s1172
        %v1174 = vmul.f32 %v1173, %v898
        %v1175 = vmul.f32 %v1173, %v899
        %1178 = vrot.lane.b32.xlu0 %v1174, 124
        %v1179 = vpop.permute.xlu0 %1178
        %1180 = vrot.lane.b32.xlu0 %v1175, 124
        %v1181 = vpop.permute.xlu0 %1180
        %v1184 = vadd.f32 %v1152, %v1179
        %v1185 = vadd.f32 %v1153, %v1181
        %1188 = vrot.lane.b32.xlu0 %v1158, 127
        %v1189 = vpop.permute.xlu0 %1188
        %1190 = vrot.lane.b32.xlu0 %v1159, 127
        %v1191 = vpop.permute.xlu0 %1190
        %v1194 = vadd.f32 %v1184, %v1189
        %v1195 = vadd.f32 %v1185, %v1191
        %1198 = vrot.lane.b32.xlu0 %v1170, 127
        %v1199 = vpop.permute.xlu0 %1198
        %1200 = vrot.lane.b32.xlu0 %v1171, 127
        %v1201 = vpop.permute.xlu0 %1200
        %v1204 = vadd.f32 %v1164, %v1199
        %v1205 = vadd.f32 %v1165, %v1201
        %1208 = vrot.lane.b32.xlu0 %v1204, 126
        %v1209 = vpop.permute.xlu0 %1208
        %1210 = vrot.lane.b32.xlu0 %v1205, 126
        %v1211 = vpop.permute.xlu0 %1210
        %v1214 = vadd.f32 %v1194, %v1209
        %v1215 = vadd.f32 %v1195, %v1211
        %s1216 = scalar_lea.vmem %s177, 32 [#allocation8]
        %1217 = vst.msk [vmem:[%s1216] sm:$0xff] %vm567, %v1214
        %1218 = vst.msk [vmem:[%s1216 + $0x8] sm:$0xff] %vm567, %v1215
        %s1219 = sld [smem:[#allocation7 + $0x180]]
        %v1220 = vstv %s1219
        %v1221 = vmul.f32 %v1220, %v890
        %v1222 = vmul.f32 %v1220, %v891
        %v1223 = vadd.f32 %v1221, 0.0
        %v1224 = vadd.f32 %v1222, 0.0
        %s1225 = sld [smem:[#allocation7 + $0x181]]
        %v1226 = vstv %s1225
        %v1227 = vmul.f32 %v1226, %v890
        %v1228 = vmul.f32 %v1226, %v891
        %v1229 = vadd.f32 %v1227, 0.0
        %v1230 = vadd.f32 %v1228, 0.0
        %s1231 = sld [smem:[#allocation7 + $0x182]]
        %v1232 = vstv %s1231
        %v1233 = vmul.f32 %v1232, %v890
        %v1234 = vmul.f32 %v1232, %v891
        %v1235 = vadd.f32 %v1233, 0.0
        %v1236 = vadd.f32 %v1234, 0.0
        %s1237 = sld [smem:[#allocation7 + $0x183]]
        %v1238 = vstv %s1237
        %v1239 = vmul.f32 %v1238, %v890
        %v1240 = vmul.f32 %v1238, %v891
        %v1241 = vadd.f32 %v1239, 0.0
        %v1242 = vadd.f32 %v1240, 0.0
        %s1243 = sld [smem:[#allocation7 + $0x184]]
        %v1244 = vstv %s1243
        %v1245 = vmul.f32 %v1244, %v890
        %v1246 = vmul.f32 %v1244, %v891
        %1249 = vrot.lane.b32.xlu0 %v1245, 124
        %v1250 = vpop.permute.xlu0 %1249
        %1251 = vrot.lane.b32.xlu0 %v1246, 124
        %v1252 = vpop.permute.xlu0 %1251
        %v1255 = vadd.f32 %v1223, %v1250
        %v1256 = vadd.f32 %v1224, %v1252
        %s1257 = sld [smem:[#allocation7 + $0x185]]
        %v1258 = vstv %s1257
        %v1259 = vmul.f32 %v1258, %v892
        %v1260 = vmul.f32 %v1258, %v893
        %1263 = vrot.lane.b32.xlu0 %v1259, 1
        %v1264 = vpop.permute.xlu0 %1263
        %1265 = vrot.lane.b32.xlu0 %v1260, 1
        %v1266 = vpop.permute.xlu0 %1265
        %v1269 = vadd.f32 %v1229, %v1264
        %v1270 = vadd.f32 %v1230, %v1266
        %s1271 = sld [smem:[#allocation7 + $0x186]]
        %v1272 = vstv %s1271
        %v1273 = vmul.f32 %v1272, %v892
        %v1274 = vmul.f32 %v1272, %v893
        %1277 = vrot.lane.b32.xlu0 %v1273, 1
        %v1278 = vpop.permute.xlu0 %1277
        %1279 = vrot.lane.b32.xlu0 %v1274, 1
        %v1280 = vpop.permute.xlu0 %1279
        %v1283 = vadd.f32 %v1235, %v1278
        %v1284 = vadd.f32 %v1236, %v1280
        %s1285 = sld [smem:[#allocation7 + $0x187]]
        %v1286 = vstv %s1285
        %v1287 = vmul.f32 %v1286, %v892
        %v1288 = vmul.f32 %v1286, %v893
        %1291 = vrot.lane.b32.xlu0 %v1287, 1
        %v1292 = vpop.permute.xlu0 %1291
        %1293 = vrot.lane.b32.xlu0 %v1288, 1
        %v1294 = vpop.permute.xlu0 %1293
        %v1297 = vadd.f32 %v1241, %v1292
        %v1298 = vadd.f32 %v1242, %v1294
        %s1299 = sld [smem:[#allocation7 + $0x188]]
        %v1300 = vstv %s1299
        %v1301 = vmul.f32 %v1300, %v892
        %v1302 = vmul.f32 %v1300, %v893
        %1305 = vrot.lane.b32.xlu0 %v1301, 125
        %v1306 = vpop.permute.xlu0 %1305
        %1307 = vrot.lane.b32.xlu0 %v1302, 125
        %v1308 = vpop.permute.xlu0 %1307
        %v1311 = vadd.f32 %v1255, %v1306
        %v1312 = vadd.f32 %v1256, %v1308
        %s1313 = sld [smem:[#allocation7 + $0x189]]
        %v1314 = vstv %s1313
        %v1315 = vmul.f32 %v1314, %v892
        %v1316 = vmul.f32 %v1314, %v893
        %1319 = vrot.lane.b32.xlu0 %v1315, 125
        %v1320 = vpop.permute.xlu0 %1319
        %1321 = vrot.lane.b32.xlu0 %v1316, 125
        %v1322 = vpop.permute.xlu0 %1321
        %v1325 = vadd.f32 %v1269, %v1320
        %v1326 = vadd.f32 %v1270, %v1322
        %s1327 = sld [smem:[#allocation7 + $0x18a]]
        %v1328 = vstv %s1327
        %v1329 = vmul.f32 %v1328, %v894
        %v1330 = vmul.f32 %v1328, %v895
        %1333 = vrot.lane.b32.xlu0 %v1329, 2
        %v1334 = vpop.permute.xlu0 %1333
        %1335 = vrot.lane.b32.xlu0 %v1330, 2
        %v1336 = vpop.permute.xlu0 %1335
        %v1339 = vadd.f32 %v1283, %v1334
        %v1340 = vadd.f32 %v1284, %v1336
        %s1341 = sld [smem:[#allocation7 + $0x18b]]
        %v1342 = vstv %s1341
        %v1343 = vmul.f32 %v1342, %v894
        %v1344 = vmul.f32 %v1342, %v895
        %1347 = vrot.lane.b32.xlu0 %v1343, 2
        %v1348 = vpop.permute.xlu0 %1347
        %1349 = vrot.lane.b32.xlu0 %v1344, 2
        %v1350 = vpop.permute.xlu0 %1349
        %v1353 = vadd.f32 %v1297, %v1348
        %v1354 = vadd.f32 %v1298, %v1350
        %s1355 = sld [smem:[#allocation7 + $0x18c]]
        %v1356 = vstv %s1355
        %v1357 = vmul.f32 %v1356, %v894
        %v1358 = vmul.f32 %v1356, %v895
        %1361 = vrot.lane.b32.xlu0 %v1357, 126
        %v1362 = vpop.permute.xlu0 %1361
        %1363 = vrot.lane.b32.xlu0 %v1358, 126
        %v1364 = vpop.permute.xlu0 %1363
        %v1367 = vadd.f32 %v1311, %v1362
        %v1368 = vadd.f32 %v1312, %v1364
        %s1369 = sld [smem:[#allocation7 + $0x18d]]
        %v1370 = vstv %s1369
        %v1371 = vmul.f32 %v1370, %v894
        %v1372 = vmul.f32 %v1370, %v895
        %1375 = vrot.lane.b32.xlu0 %v1371, 126
        %v1376 = vpop.permute.xlu0 %1375
        %1377 = vrot.lane.b32.xlu0 %v1372, 126
        %v1378 = vpop.permute.xlu0 %1377
        %v1381 = vadd.f32 %v1325, %v1376
        %v1382 = vadd.f32 %v1326, %v1378
        %s1383 = sld [smem:[#allocation7 + $0x18e]]
        %v1384 = vstv %s1383
        %v1385 = vmul.f32 %v1384, %v894
        %v1386 = vmul.f32 %v1384, %v895
        %1389 = vrot.lane.b32.xlu0 %v1385, 126
        %v1390 = vpop.permute.xlu0 %1389
        %1391 = vrot.lane.b32.xlu0 %v1386, 126
        %v1392 = vpop.permute.xlu0 %1391
        %v1395 = vadd.f32 %v1339, %v1390
        %v1396 = vadd.f32 %v1340, %v1392
        %s1397 = sld [smem:[#allocation7 + $0x18f]]
        %v1398 = vstv %s1397
        %v1399 = vmul.f32 %v1398, %v896
        %v1400 = vmul.f32 %v1398, %v897
        %1403 = vrot.lane.b32.xlu0 %v1399, 3
        %v1404 = vpop.permute.xlu0 %1403
        %1405 = vrot.lane.b32.xlu0 %v1400, 3
        %v1406 = vpop.permute.xlu0 %1405
        %v1409 = vadd.f32 %v1353, %v1404
        %v1410 = vadd.f32 %v1354, %v1406
        %s1411 = sld [smem:[#allocation7 + $0x190]]
        %v1412 = vstv %s1411
        %v1413 = vmul.f32 %v1412, %v896
        %v1414 = vmul.f32 %v1412, %v897
        %1417 = vrot.lane.b32.xlu0 %v1413, 127
        %v1418 = vpop.permute.xlu0 %1417
        %1419 = vrot.lane.b32.xlu0 %v1414, 127
        %v1420 = vpop.permute.xlu0 %1419
        %v1423 = vadd.f32 %v1367, %v1418
        %v1424 = vadd.f32 %v1368, %v1420
        %s1425 = sld [smem:[#allocation7 + $0x191]]
        %v1426 = vstv %s1425
        %v1427 = vmul.f32 %v1426, %v896
        %v1428 = vmul.f32 %v1426, %v897
        %1431 = vrot.lane.b32.xlu0 %v1427, 127
        %v1432 = vpop.permute.xlu0 %1431
        %1433 = vrot.lane.b32.xlu0 %v1428, 127
        %v1434 = vpop.permute.xlu0 %1433
        %v1437 = vadd.f32 %v1381, %v1432
        %v1438 = vadd.f32 %v1382, %v1434
        %s1439 = sld [smem:[#allocation7 + $0x192]]
        %v1440 = vstv %s1439
        %v1441 = vmul.f32 %v1440, %v896
        %v1442 = vmul.f32 %v1440, %v897
        %1445 = vrot.lane.b32.xlu0 %v1441, 127
        %v1446 = vpop.permute.xlu0 %1445
        %1447 = vrot.lane.b32.xlu0 %v1442, 127
        %v1448 = vpop.permute.xlu0 %1447
        %v1451 = vadd.f32 %v1395, %v1446
        %v1452 = vadd.f32 %v1396, %v1448
        %s1453 = sld [smem:[#allocation7 + $0x193]]
        %v1454 = vstv %s1453
        %v1455 = vmul.f32 %v1454, %v896
        %v1456 = vmul.f32 %v1454, %v897
        %1459 = vrot.lane.b32.xlu0 %v1455, 127
        %v1460 = vpop.permute.xlu0 %1459
        %1461 = vrot.lane.b32.xlu0 %v1456, 127
        %v1462 = vpop.permute.xlu0 %1461
        %v1465 = vadd.f32 %v1409, %v1460
        %v1466 = vadd.f32 %v1410, %v1462
        %s1467 = sld [smem:[#allocation7 + $0x194]]
        %v1468 = vstv %s1467
        %v1469 = vmul.f32 %v1468, %v898
        %v1470 = vmul.f32 %v1468, %v899
        %v1471 = vadd.f32 %v1423, %v1469
        %v1472 = vadd.f32 %v1424, %v1470
        %s1473 = sld [smem:[#allocation7 + $0x195]]
        %v1474 = vstv %s1473
        %v1475 = vmul.f32 %v1474, %v898
        %v1476 = vmul.f32 %v1474, %v899
        %v1477 = vadd.f32 %v1437, %v1475
        %v1478 = vadd.f32 %v1438, %v1476
        %s1479 = sld [smem:[#allocation7 + $0x196]]
        %v1480 = vstv %s1479
        %v1481 = vmul.f32 %v1480, %v898
        %v1482 = vmul.f32 %v1480, %v899
        %v1483 = vadd.f32 %v1451, %v1481
        %v1484 = vadd.f32 %v1452, %v1482
        %s1485 = sld [smem:[#allocation7 + $0x197]]
        %v1486 = vstv %s1485
        %v1487 = vmul.f32 %v1486, %v898
        %v1488 = vmul.f32 %v1486, %v899
        %v1489 = vadd.f32 %v1465, %v1487
        %v1490 = vadd.f32 %v1466, %v1488
        %s1491 = sld [smem:[#allocation7 + $0x198]]
        %v1492 = vstv %s1491
        %v1493 = vmul.f32 %v1492, %v898
        %v1494 = vmul.f32 %v1492, %v899
        %1497 = vrot.lane.b32.xlu0 %v1493, 124
        %v1498 = vpop.permute.xlu0 %1497
        %1499 = vrot.lane.b32.xlu0 %v1494, 124
        %v1500 = vpop.permute.xlu0 %1499
        %v1503 = vadd.f32 %v1471, %v1498
        %v1504 = vadd.f32 %v1472, %v1500
        %1507 = vrot.lane.b32.xlu0 %v1477, 127
        %v1508 = vpop.permute.xlu0 %1507
        %1509 = vrot.lane.b32.xlu0 %v1478, 127
        %v1510 = vpop.permute.xlu0 %1509
        %v1513 = vadd.f32 %v1503, %v1508
        %v1514 = vadd.f32 %v1504, %v1510
        %1517 = vrot.lane.b32.xlu0 %v1489, 127
        %v1518 = vpop.permute.xlu0 %1517
        %1519 = vrot.lane.b32.xlu0 %v1490, 127
        %v1520 = vpop.permute.xlu0 %1519
        %v1523 = vadd.f32 %v1483, %v1518
        %v1524 = vadd.f32 %v1484, %v1520
        %1527 = vrot.lane.b32.xlu0 %v1523, 126
        %v1528 = vpop.permute.xlu0 %1527
        %1529 = vrot.lane.b32.xlu0 %v1524, 126
        %v1530 = vpop.permute.xlu0 %1529
        %v1533 = vadd.f32 %v1513, %v1528
        %v1534 = vadd.f32 %v1514, %v1530
        %s1535 = scalar_lea.vmem %s177, 48 [#allocation8]
        %1536 = vst.msk [vmem:[%s1535] sm:$0xff] %vm567, %v1533
        %1537 = vst.msk [vmem:[%s1535 + $0x8] sm:$0xff] %vm567, %v1534
        %s1538 = scalar_lea.vmem [#allocation2], 48
        %v1539 = vld [vmem:[%s1538] sm:$0xff]
        %v1540 = vld [vmem:[%s1538 + $0x8] sm:$0xff]
        %v1541 = vld [vmem:[%s1538 + $0x1] sm:$0xff]
        %v1542 = vld [vmem:[%s1538 + $0x9] sm:$0xff]
        %v1543 = vld [vmem:[%s1538 + $0x2] sm:$0xff]
        %v1544 = vld [vmem:[%s1538 + $0xa] sm:$0xff]
        %v1545 = vld [vmem:[%s1538 + $0x3] sm:$0xff]
        %v1546 = vld [vmem:[%s1538 + $0xb] sm:$0xff]
        %v1547 = vld [vmem:[%s1538 + $0x4] sm:$0xff]
        %v1548 = vld [vmem:[%s1538 + $0xc] sm:$0xff]
        %s1549 = sld [smem:[#allocation7 + $0x200]]
        %v1550 = vstv %s1549
        %v1551 = vmul.f32 %v1550, %v1539
        %v1552 = vmul.f32 %v1550, %v1540
        %v1553 = vadd.f32 %v1551, 0.0
        %v1554 = vadd.f32 %v1552, 0.0
        %s1555 = sld [smem:[#allocation7 + $0x201]]
        %v1556 = vstv %s1555
        %v1557 = vmul.f32 %v1556, %v1539
        %v1558 = vmul.f32 %v1556, %v1540
        %v1559 = vadd.f32 %v1557, 0.0
        %v1560 = vadd.f32 %v1558, 0.0
        %s1561 = sld [smem:[#allocation7 + $0x202]]
        %v1562 = vstv %s1561
        %v1563 = vmul.f32 %v1562, %v1539
        %v1564 = vmul.f32 %v1562, %v1540
        %v1565 = vadd.f32 %v1563, 0.0
        %v1566 = vadd.f32 %v1564, 0.0
        %s1567 = sld [smem:[#allocation7 + $0x203]]
        %v1568 = vstv %s1567
        %v1569 = vmul.f32 %v1568, %v1539
        %v1570 = vmul.f32 %v1568, %v1540
        %v1571 = vadd.f32 %v1569, 0.0
        %v1572 = vadd.f32 %v1570, 0.0
        %s1573 = sld [smem:[#allocation7 + $0x204]]
        %v1574 = vstv %s1573
        %v1575 = vmul.f32 %v1574, %v1539
        %v1576 = vmul.f32 %v1574, %v1540
        %1579 = vrot.lane.b32.xlu0 %v1575, 124
        %v1580 = vpop.permute.xlu0 %1579
        %1581 = vrot.lane.b32.xlu0 %v1576, 124
        %v1582 = vpop.permute.xlu0 %1581
        %v1585 = vadd.f32 %v1553, %v1580
        %v1586 = vadd.f32 %v1554, %v1582
        %s1587 = sld [smem:[#allocation7 + $0x205]]
        %v1588 = vstv %s1587
        %v1589 = vmul.f32 %v1588, %v1541
        %v1590 = vmul.f32 %v1588, %v1542
        %1593 = vrot.lane.b32.xlu0 %v1589, 1
        %v1594 = vpop.permute.xlu0 %1593
        %1595 = vrot.lane.b32.xlu0 %v1590, 1
        %v1596 = vpop.permute.xlu0 %1595
        %v1599 = vadd.f32 %v1559, %v1594
        %v1600 = vadd.f32 %v1560, %v1596
        %s1601 = sld [smem:[#allocation7 + $0x206]]
        %v1602 = vstv %s1601
        %v1603 = vmul.f32 %v1602, %v1541
        %v1604 = vmul.f32 %v1602, %v1542
        %1607 = vrot.lane.b32.xlu0 %v1603, 1
        %v1608 = vpop.permute.xlu0 %1607
        %1609 = vrot.lane.b32.xlu0 %v1604, 1
        %v1610 = vpop.permute.xlu0 %1609
        %v1613 = vadd.f32 %v1565, %v1608
        %v1614 = vadd.f32 %v1566, %v1610
        %s1615 = sld [smem:[#allocation7 + $0x207]]
        %v1616 = vstv %s1615
        %v1617 = vmul.f32 %v1616, %v1541
        %v1618 = vmul.f32 %v1616, %v1542
        %1621 = vrot.lane.b32.xlu0 %v1617, 1
        %v1622 = vpop.permute.xlu0 %1621
        %1623 = vrot.lane.b32.xlu0 %v1618, 1
        %v1624 = vpop.permute.xlu0 %1623
        %v1627 = vadd.f32 %v1571, %v1622
        %v1628 = vadd.f32 %v1572, %v1624
        %s1629 = sld [smem:[#allocation7 + $0x208]]
        %v1630 = vstv %s1629
        %v1631 = vmul.f32 %v1630, %v1541
        %v1632 = vmul.f32 %v1630, %v1542
        %1635 = vrot.lane.b32.xlu0 %v1631, 125
        %v1636 = vpop.permute.xlu0 %1635
        %1637 = vrot.lane.b32.xlu0 %v1632, 125
        %v1638 = vpop.permute.xlu0 %1637
        %v1641 = vadd.f32 %v1585, %v1636
        %v1642 = vadd.f32 %v1586, %v1638
        %s1643 = sld [smem:[#allocation7 + $0x209]]
        %v1644 = vstv %s1643
        %v1645 = vmul.f32 %v1644, %v1541
        %v1646 = vmul.f32 %v1644, %v1542
        %1649 = vrot.lane.b32.xlu0 %v1645, 125
        %v1650 = vpop.permute.xlu0 %1649
        %1651 = vrot.lane.b32.xlu0 %v1646, 125
        %v1652 = vpop.permute.xlu0 %1651
        %v1655 = vadd.f32 %v1599, %v1650
        %v1656 = vadd.f32 %v1600, %v1652
        %s1657 = sld [smem:[#allocation7 + $0x20a]]
        %v1658 = vstv %s1657
        %v1659 = vmul.f32 %v1658, %v1543
        %v1660 = vmul.f32 %v1658, %v1544
        %1663 = vrot.lane.b32.xlu0 %v1659, 2
        %v1664 = vpop.permute.xlu0 %1663
        %1665 = vrot.lane.b32.xlu0 %v1660, 2
        %v1666 = vpop.permute.xlu0 %1665
        %v1669 = vadd.f32 %v1613, %v1664
        %v1670 = vadd.f32 %v1614, %v1666
        %s1671 = sld [smem:[#allocation7 + $0x20b]]
        %v1672 = vstv %s1671
        %v1673 = vmul.f32 %v1672, %v1543
        %v1674 = vmul.f32 %v1672, %v1544
        %1677 = vrot.lane.b32.xlu0 %v1673, 2
        %v1678 = vpop.permute.xlu0 %1677
        %1679 = vrot.lane.b32.xlu0 %v1674, 2
        %v1680 = vpop.permute.xlu0 %1679
        %v1683 = vadd.f32 %v1627, %v1678
        %v1684 = vadd.f32 %v1628, %v1680
        %s1685 = sld [smem:[#allocation7 + $0x20c]]
        %v1686 = vstv %s1685
        %v1687 = vmul.f32 %v1686, %v1543
        %v1688 = vmul.f32 %v1686, %v1544
        %1691 = vrot.lane.b32.xlu0 %v1687, 126
        %v1692 = vpop.permute.xlu0 %1691
        %1693 = vrot.lane.b32.xlu0 %v1688, 126
        %v1694 = vpop.permute.xlu0 %1693
        %v1697 = vadd.f32 %v1641, %v1692
        %v1698 = vadd.f32 %v1642, %v1694
        %s1699 = sld [smem:[#allocation7 + $0x20d]]
        %v1700 = vstv %s1699
        %v1701 = vmul.f32 %v1700, %v1543
        %v1702 = vmul.f32 %v1700, %v1544
        %1705 = vrot.lane.b32.xlu0 %v1701, 126
        %v1706 = vpop.permute.xlu0 %1705
        %1707 = vrot.lane.b32.xlu0 %v1702, 126
        %v1708 = vpop.permute.xlu0 %1707
        %v1711 = vadd.f32 %v1655, %v1706
        %v1712 = vadd.f32 %v1656, %v1708
        %s1713 = sld [smem:[#allocation7 + $0x20e]]
        %v1714 = vstv %s1713
        %v1715 = vmul.f32 %v1714, %v1543
        %v1716 = vmul.f32 %v1714, %v1544
        %1719 = vrot.lane.b32.xlu0 %v1715, 126
        %v1720 = vpop.permute.xlu0 %1719
        %1721 = vrot.lane.b32.xlu0 %v1716, 126
        %v1722 = vpop.permute.xlu0 %1721
        %v1725 = vadd.f32 %v1669, %v1720
        %v1726 = vadd.f32 %v1670, %v1722
        %s1727 = sld [smem:[#allocation7 + $0x20f]]
        %v1728 = vstv %s1727
        %v1729 = vmul.f32 %v1728, %v1545
        %v1730 = vmul.f32 %v1728, %v1546
        %1733 = vrot.lane.b32.xlu0 %v1729, 3
        %v1734 = vpop.permute.xlu0 %1733
        %1735 = vrot.lane.b32.xlu0 %v1730, 3
        %v1736 = vpop.permute.xlu0 %1735
        %v1739 = vadd.f32 %v1683, %v1734
        %v1740 = vadd.f32 %v1684, %v1736
        %s1741 = sld [smem:[#allocation7 + $0x210]]
        %v1742 = vstv %s1741
        %v1743 = vmul.f32 %v1742, %v1545
        %v1744 = vmul.f32 %v1742, %v1546
        %1747 = vrot.lane.b32.xlu0 %v1743, 127
        %v1748 = vpop.permute.xlu0 %1747
        %1749 = vrot.lane.b32.xlu0 %v1744, 127
        %v1750 = vpop.permute.xlu0 %1749
        %v1753 = vadd.f32 %v1697, %v1748
        %v1754 = vadd.f32 %v1698, %v1750
        %s1755 = sld [smem:[#allocation7 + $0x211]]
        %v1756 = vstv %s1755
        %v1757 = vmul.f32 %v1756, %v1545
        %v1758 = vmul.f32 %v1756, %v1546
        %1761 = vrot.lane.b32.xlu0 %v1757, 127
        %v1762 = vpop.permute.xlu0 %1761
        %1763 = vrot.lane.b32.xlu0 %v1758, 127
        %v1764 = vpop.permute.xlu0 %1763
        %v1767 = vadd.f32 %v1711, %v1762
        %v1768 = vadd.f32 %v1712, %v1764
        %s1769 = sld [smem:[#allocation7 + $0x212]]
        %v1770 = vstv %s1769
        %v1771 = vmul.f32 %v1770, %v1545
        %v1772 = vmul.f32 %v1770, %v1546
        %1775 = vrot.lane.b32.xlu0 %v1771, 127
        %v1776 = vpop.permute.xlu0 %1775
        %1777 = vrot.lane.b32.xlu0 %v1772, 127
        %v1778 = vpop.permute.xlu0 %1777
        %v1781 = vadd.f32 %v1725, %v1776
        %v1782 = vadd.f32 %v1726, %v1778
        %s1783 = sld [smem:[#allocation7 + $0x213]]
        %v1784 = vstv %s1783
        %v1785 = vmul.f32 %v1784, %v1545
        %v1786 = vmul.f32 %v1784, %v1546
        %1789 = vrot.lane.b32.xlu0 %v1785, 127
        %v1790 = vpop.permute.xlu0 %1789
        %1791 = vrot.lane.b32.xlu0 %v1786, 127
        %v1792 = vpop.permute.xlu0 %1791
        %v1795 = vadd.f32 %v1739, %v1790
        %v1796 = vadd.f32 %v1740, %v1792
        %s1797 = sld [smem:[#allocation7 + $0x214]]
        %v1798 = vstv %s1797
        %v1799 = vmul.f32 %v1798, %v1547
        %v1800 = vmul.f32 %v1798, %v1548
        %v1801 = vadd.f32 %v1753, %v1799
        %v1802 = vadd.f32 %v1754, %v1800
        %s1803 = sld [smem:[#allocation7 + $0x215]]
        %v1804 = vstv %s1803
        %v1805 = vmul.f32 %v1804, %v1547
        %v1806 = vmul.f32 %v1804, %v1548
        %v1807 = vadd.f32 %v1767, %v1805
        %v1808 = vadd.f32 %v1768, %v1806
        %s1809 = sld [smem:[#allocation7 + $0x216]]
        %v1810 = vstv %s1809
        %v1811 = vmul.f32 %v1810, %v1547
        %v1812 = vmul.f32 %v1810, %v1548
        %v1813 = vadd.f32 %v1781, %v1811
        %v1814 = vadd.f32 %v1782, %v1812
        %s1815 = sld [smem:[#allocation7 + $0x217]]
        %v1816 = vstv %s1815
        %v1817 = vmul.f32 %v1816, %v1547
        %v1818 = vmul.f32 %v1816, %v1548
        %v1819 = vadd.f32 %v1795, %v1817
        %v1820 = vadd.f32 %v1796, %v1818
        %s1821 = sld [smem:[#allocation7 + $0x218]]
        %v1822 = vstv %s1821
        %v1823 = vmul.f32 %v1822, %v1547
        %v1824 = vmul.f32 %v1822, %v1548
        %1827 = vrot.lane.b32.xlu0 %v1823, 124
        %v1828 = vpop.permute.xlu0 %1827
        %1829 = vrot.lane.b32.xlu0 %v1824, 124
        %v1830 = vpop.permute.xlu0 %1829
        %v1833 = vadd.f32 %v1801, %v1828
        %v1834 = vadd.f32 %v1802, %v1830
        %1837 = vrot.lane.b32.xlu0 %v1807, 127
        %v1838 = vpop.permute.xlu0 %1837
        %1839 = vrot.lane.b32.xlu0 %v1808, 127
        %v1840 = vpop.permute.xlu0 %1839
        %v1843 = vadd.f32 %v1833, %v1838
        %v1844 = vadd.f32 %v1834, %v1840
        %1847 = vrot.lane.b32.xlu0 %v1819, 127
        %v1848 = vpop.permute.xlu0 %1847
        %1849 = vrot.lane.b32.xlu0 %v1820, 127
        %v1850 = vpop.permute.xlu0 %1849
        %v1853 = vadd.f32 %v1813, %v1848
        %v1854 = vadd.f32 %v1814, %v1850
        %1857 = vrot.lane.b32.xlu0 %v1853, 126
        %v1858 = vpop.permute.xlu0 %1857
        %1859 = vrot.lane.b32.xlu0 %v1854, 126
        %v1860 = vpop.permute.xlu0 %1859
        %v1863 = vadd.f32 %v1843, %v1858
        %v1864 = vadd.f32 %v1844, %v1860
        %s1865 = scalar_lea.vmem %s177, 64 [#allocation8]
        %1866 = vst.msk [vmem:[%s1865] sm:$0xff] %vm567, %v1863
        %1867 = vst.msk [vmem:[%s1865 + $0x8] sm:$0xff] %vm567, %v1864
        %s1868 = sld [smem:[#allocation7 + $0x280]]
        %v1869 = vstv %s1868
        %v1870 = vmul.f32 %v1869, %v1539
        %v1871 = vmul.f32 %v1869, %v1540
        %v1872 = vadd.f32 %v1870, 0.0
        %v1873 = vadd.f32 %v1871, 0.0
        %s1874 = sld [smem:[#allocation7 + $0x281]]
        %v1875 = vstv %s1874
        %v1876 = vmul.f32 %v1875, %v1539
        %v1877 = vmul.f32 %v1875, %v1540
        %v1878 = vadd.f32 %v1876, 0.0
        %v1879 = vadd.f32 %v1877, 0.0
        %s1880 = sld [smem:[#allocation7 + $0x282]]
        %v1881 = vstv %s1880
        %v1882 = vmul.f32 %v1881, %v1539
        %v1883 = vmul.f32 %v1881, %v1540
        %v1884 = vadd.f32 %v1882, 0.0
        %v1885 = vadd.f32 %v1883, 0.0
        %s1886 = sld [smem:[#allocation7 + $0x283]]
        %v1887 = vstv %s1886
        %v1888 = vmul.f32 %v1887, %v1539
        %v1889 = vmul.f32 %v1887, %v1540
        %v1890 = vadd.f32 %v1888, 0.0
        %v1891 = vadd.f32 %v1889, 0.0
        %s1892 = sld [smem:[#allocation7 + $0x284]]
        %v1893 = vstv %s1892
        %v1894 = vmul.f32 %v1893, %v1539
        %v1895 = vmul.f32 %v1893, %v1540
        %1898 = vrot.lane.b32.xlu0 %v1894, 124
        %v1899 = vpop.permute.xlu0 %1898
        %1900 = vrot.lane.b32.xlu0 %v1895, 124
        %v1901 = vpop.permute.xlu0 %1900
        %v1904 = vadd.f32 %v1872, %v1899
        %v1905 = vadd.f32 %v1873, %v1901
        %s1906 = sld [smem:[#allocation7 + $0x285]]
        %v1907 = vstv %s1906
        %v1908 = vmul.f32 %v1907, %v1541
        %v1909 = vmul.f32 %v1907, %v1542
        %1912 = vrot.lane.b32.xlu0 %v1908, 1
        %v1913 = vpop.permute.xlu0 %1912
        %1914 = vrot.lane.b32.xlu0 %v1909, 1
        %v1915 = vpop.permute.xlu0 %1914
        %v1918 = vadd.f32 %v1878, %v1913
        %v1919 = vadd.f32 %v1879, %v1915
        %s1920 = sld [smem:[#allocation7 + $0x286]]
        %v1921 = vstv %s1920
        %v1922 = vmul.f32 %v1921, %v1541
        %v1923 = vmul.f32 %v1921, %v1542
        %1926 = vrot.lane.b32.xlu0 %v1922, 1
        %v1927 = vpop.permute.xlu0 %1926
        %1928 = vrot.lane.b32.xlu0 %v1923, 1
        %v1929 = vpop.permute.xlu0 %1928
        %v1932 = vadd.f32 %v1884, %v1927
        %v1933 = vadd.f32 %v1885, %v1929
        %s1934 = sld [smem:[#allocation7 + $0x287]]
        %v1935 = vstv %s1934
        %v1936 = vmul.f32 %v1935, %v1541
        %v1937 = vmul.f32 %v1935, %v1542
        %1940 = vrot.lane.b32.xlu0 %v1936, 1
        %v1941 = vpop.permute.xlu0 %1940
        %1942 = vrot.lane.b32.xlu0 %v1937, 1
        %v1943 = vpop.permute.xlu0 %1942
        %v1946 = vadd.f32 %v1890, %v1941
        %v1947 = vadd.f32 %v1891, %v1943
        %s1948 = sld [smem:[#allocation7 + $0x288]]
        %v1949 = vstv %s1948
        %v1950 = vmul.f32 %v1949, %v1541
        %v1951 = vmul.f32 %v1949, %v1542
        %1954 = vrot.lane.b32.xlu0 %v1950, 125
        %v1955 = vpop.permute.xlu0 %1954
        %1956 = vrot.lane.b32.xlu0 %v1951, 125
        %v1957 = vpop.permute.xlu0 %1956
        %v1960 = vadd.f32 %v1904, %v1955
        %v1961 = vadd.f32 %v1905, %v1957
        %s1962 = sld [smem:[#allocation7 + $0x289]]
        %v1963 = vstv %s1962
        %v1964 = vmul.f32 %v1963, %v1541
        %v1965 = vmul.f32 %v1963, %v1542
        %1968 = vrot.lane.b32.xlu0 %v1964, 125
        %v1969 = vpop.permute.xlu0 %1968
        %1970 = vrot.lane.b32.xlu0 %v1965, 125
        %v1971 = vpop.permute.xlu0 %1970
        %v1974 = vadd.f32 %v1918, %v1969
        %v1975 = vadd.f32 %v1919, %v1971
        %s1976 = sld [smem:[#allocation7 + $0x28a]]
        %v1977 = vstv %s1976
        %v1978 = vmul.f32 %v1977, %v1543
        %v1979 = vmul.f32 %v1977, %v1544
        %1982 = vrot.lane.b32.xlu0 %v1978, 2
        %v1983 = vpop.permute.xlu0 %1982
        %1984 = vrot.lane.b32.xlu0 %v1979, 2
        %v1985 = vpop.permute.xlu0 %1984
        %v1988 = vadd.f32 %v1932, %v1983
        %v1989 = vadd.f32 %v1933, %v1985
        %s1990 = sld [smem:[#allocation7 + $0x28b]]
        %v1991 = vstv %s1990
        %v1992 = vmul.f32 %v1991, %v1543
        %v1993 = vmul.f32 %v1991, %v1544
        %1996 = vrot.lane.b32.xlu0 %v1992, 2
        %v1997 = vpop.permute.xlu0 %1996
        %1998 = vrot.lane.b32.xlu0 %v1993, 2
        %v1999 = vpop.permute.xlu0 %1998
        %v2002 = vadd.f32 %v1946, %v1997
        %v2003 = vadd.f32 %v1947, %v1999
        %s2004 = sld [smem:[#allocation7 + $0x28c]]
        %v2005 = vstv %s2004
        %v2006 = vmul.f32 %v2005, %v1543
        %v2007 = vmul.f32 %v2005, %v1544
        %2010 = vrot.lane.b32.xlu0 %v2006, 126
        %v2011 = vpop.permute.xlu0 %2010
        %2012 = vrot.lane.b32.xlu0 %v2007, 126
        %v2013 = vpop.permute.xlu0 %2012
        %v2016 = vadd.f32 %v1960, %v2011
        %v2017 = vadd.f32 %v1961, %v2013
        %s2018 = sld [smem:[#allocation7 + $0x28d]]
        %v2019 = vstv %s2018
        %v2020 = vmul.f32 %v2019, %v1543
        %v2021 = vmul.f32 %v2019, %v1544
        %2024 = vrot.lane.b32.xlu0 %v2020, 126
        %v2025 = vpop.permute.xlu0 %2024
        %2026 = vrot.lane.b32.xlu0 %v2021, 126
        %v2027 = vpop.permute.xlu0 %2026
        %v2030 = vadd.f32 %v1974, %v2025
        %v2031 = vadd.f32 %v1975, %v2027
        %s2032 = sld [smem:[#allocation7 + $0x28e]]
        %v2033 = vstv %s2032
        %v2034 = vmul.f32 %v2033, %v1543
        %v2035 = vmul.f32 %v2033, %v1544
        %2038 = vrot.lane.b32.xlu0 %v2034, 126
        %v2039 = vpop.permute.xlu0 %2038
        %2040 = vrot.lane.b32.xlu0 %v2035, 126
        %v2041 = vpop.permute.xlu0 %2040
        %v2044 = vadd.f32 %v1988, %v2039
        %v2045 = vadd.f32 %v1989, %v2041
        %s2046 = sld [smem:[#allocation7 + $0x28f]]
        %v2047 = vstv %s2046
        %v2048 = vmul.f32 %v2047, %v1545
        %v2049 = vmul.f32 %v2047, %v1546
        %2052 = vrot.lane.b32.xlu0 %v2048, 3
        %v2053 = vpop.permute.xlu0 %2052
        %2054 = vrot.lane.b32.xlu0 %v2049, 3
        %v2055 = vpop.permute.xlu0 %2054
        %v2058 = vadd.f32 %v2002, %v2053
        %v2059 = vadd.f32 %v2003, %v2055
        %s2060 = sld [smem:[#allocation7 + $0x290]]
        %v2061 = vstv %s2060
        %v2062 = vmul.f32 %v2061, %v1545
        %v2063 = vmul.f32 %v2061, %v1546
        %2066 = vrot.lane.b32.xlu0 %v2062, 127
        %v2067 = vpop.permute.xlu0 %2066
        %2068 = vrot.lane.b32.xlu0 %v2063, 127
        %v2069 = vpop.permute.xlu0 %2068
        %v2072 = vadd.f32 %v2016, %v2067
        %v2073 = vadd.f32 %v2017, %v2069
        %s2074 = sld [smem:[#allocation7 + $0x291]]
        %v2075 = vstv %s2074
        %v2076 = vmul.f32 %v2075, %v1545
        %v2077 = vmul.f32 %v2075, %v1546
        %2080 = vrot.lane.b32.xlu0 %v2076, 127
        %v2081 = vpop.permute.xlu0 %2080
        %2082 = vrot.lane.b32.xlu0 %v2077, 127
        %v2083 = vpop.permute.xlu0 %2082
        %v2086 = vadd.f32 %v2030, %v2081
        %v2087 = vadd.f32 %v2031, %v2083
        %s2088 = sld [smem:[#allocation7 + $0x292]]
        %v2089 = vstv %s2088
        %v2090 = vmul.f32 %v2089, %v1545
        %v2091 = vmul.f32 %v2089, %v1546
        %2094 = vrot.lane.b32.xlu0 %v2090, 127
        %v2095 = vpop.permute.xlu0 %2094
        %2096 = vrot.lane.b32.xlu0 %v2091, 127
        %v2097 = vpop.permute.xlu0 %2096
        %v2100 = vadd.f32 %v2044, %v2095
        %v2101 = vadd.f32 %v2045, %v2097
        %s2102 = sld [smem:[#allocation7 + $0x293]]
        %v2103 = vstv %s2102
        %v2104 = vmul.f32 %v2103, %v1545
        %v2105 = vmul.f32 %v2103, %v1546
        %2108 = vrot.lane.b32.xlu0 %v2104, 127
        %v2109 = vpop.permute.xlu0 %2108
        %2110 = vrot.lane.b32.xlu0 %v2105, 127
        %v2111 = vpop.permute.xlu0 %2110
        %v2114 = vadd.f32 %v2058, %v2109
        %v2115 = vadd.f32 %v2059, %v2111
        %s2116 = sld [smem:[#allocation7 + $0x294]]
        %v2117 = vstv %s2116
        %v2118 = vmul.f32 %v2117, %v1547
        %v2119 = vmul.f32 %v2117, %v1548
        %v2120 = vadd.f32 %v2072, %v2118
        %v2121 = vadd.f32 %v2073, %v2119
        %s2122 = sld [smem:[#allocation7 + $0x295]]
        %v2123 = vstv %s2122
        %v2124 = vmul.f32 %v2123, %v1547
        %v2125 = vmul.f32 %v2123, %v1548
        %v2126 = vadd.f32 %v2086, %v2124
        %v2127 = vadd.f32 %v2087, %v2125
        %s2128 = sld [smem:[#allocation7 + $0x296]]
        %v2129 = vstv %s2128
        %v2130 = vmul.f32 %v2129, %v1547
        %v2131 = vmul.f32 %v2129, %v1548
        %v2132 = vadd.f32 %v2100, %v2130
        %v2133 = vadd.f32 %v2101, %v2131
        %s2134 = sld [smem:[#allocation7 + $0x297]]
        %v2135 = vstv %s2134
        %v2136 = vmul.f32 %v2135, %v1547
        %v2137 = vmul.f32 %v2135, %v1548
        %v2138 = vadd.f32 %v2114, %v2136
        %v2139 = vadd.f32 %v2115, %v2137
        %s2140 = sld [smem:[#allocation7 + $0x298]]
        %v2141 = vstv %s2140
        %v2142 = vmul.f32 %v2141, %v1547
        %v2143 = vmul.f32 %v2141, %v1548
        %2146 = vrot.lane.b32.xlu0 %v2142, 124
        %v2147 = vpop.permute.xlu0 %2146
        %2148 = vrot.lane.b32.xlu0 %v2143, 124
        %v2149 = vpop.permute.xlu0 %2148
        %v2152 = vadd.f32 %v2120, %v2147
        %v2153 = vadd.f32 %v2121, %v2149
        %2156 = vrot.lane.b32.xlu0 %v2126, 127
        %v2157 = vpop.permute.xlu0 %2156
        %2158 = vrot.lane.b32.xlu0 %v2127, 127
        %v2159 = vpop.permute.xlu0 %2158
        %v2162 = vadd.f32 %v2152, %v2157
        %v2163 = vadd.f32 %v2153, %v2159
        %2166 = vrot.lane.b32.xlu0 %v2138, 127
        %v2167 = vpop.permute.xlu0 %2166
        %2168 = vrot.lane.b32.xlu0 %v2139, 127
        %v2169 = vpop.permute.xlu0 %2168
        %v2172 = vadd.f32 %v2132, %v2167
        %v2173 = vadd.f32 %v2133, %v2169
        %2176 = vrot.lane.b32.xlu0 %v2172, 126
        %v2177 = vpop.permute.xlu0 %2176
        %2178 = vrot.lane.b32.xlu0 %v2173, 126
        %v2179 = vpop.permute.xlu0 %2178
        %v2182 = vadd.f32 %v2162, %v2177
        %v2183 = vadd.f32 %v2163, %v2179
        %s2184 = scalar_lea.vmem %s177, 80 [#allocation8]
        %2185 = vst.msk [vmem:[%s2184] sm:$0xff] %vm567, %v2182
        %2186 = vst.msk [vmem:[%s2184 + $0x8] sm:$0xff] %vm567, %v2183
        %s2187 = scalar_lea.vmem [#allocation2], 72
        %v2188 = vld [vmem:[%s2187] sm:$0xff]
        %v2189 = vld [vmem:[%s2187 + $0x8] sm:$0xff]
        %v2190 = vld [vmem:[%s2187 + $0x1] sm:$0xff]
        %v2191 = vld [vmem:[%s2187 + $0x9] sm:$0xff]
        %v2192 = vld [vmem:[%s2187 + $0x2] sm:$0xff]
        %v2193 = vld [vmem:[%s2187 + $0xa] sm:$0xff]
        %v2194 = vld [vmem:[%s2187 + $0x3] sm:$0xff]
        %v2195 = vld [vmem:[%s2187 + $0xb] sm:$0xff]
        %v2196 = vld [vmem:[%s2187 + $0x4] sm:$0xff]
        %v2197 = vld [vmem:[%s2187 + $0xc] sm:$0xff]
        %s2198 = sld [smem:[#allocation7 + $0x300]]
        %v2199 = vstv %s2198
        %v2200 = vmul.f32 %v2199, %v2188
        %v2201 = vmul.f32 %v2199, %v2189
        %v2202 = vadd.f32 %v2200, 0.0
        %v2203 = vadd.f32 %v2201, 0.0
        %s2204 = sld [smem:[#allocation7 + $0x301]]
        %v2205 = vstv %s2204
        %v2206 = vmul.f32 %v2205, %v2188
        %v2207 = vmul.f32 %v2205, %v2189
        %v2208 = vadd.f32 %v2206, 0.0
        %v2209 = vadd.f32 %v2207, 0.0
        %s2210 = sld [smem:[#allocation7 + $0x302]]
        %v2211 = vstv %s2210
        %v2212 = vmul.f32 %v2211, %v2188
        %v2213 = vmul.f32 %v2211, %v2189
        %v2214 = vadd.f32 %v2212, 0.0
        %v2215 = vadd.f32 %v2213, 0.0
        %s2216 = sld [smem:[#allocation7 + $0x303]]
        %v2217 = vstv %s2216
        %v2218 = vmul.f32 %v2217, %v2188
        %v2219 = vmul.f32 %v2217, %v2189
        %v2220 = vadd.f32 %v2218, 0.0
        %v2221 = vadd.f32 %v2219, 0.0
        %s2222 = sld [smem:[#allocation7 + $0x304]]
        %v2223 = vstv %s2222
        %v2224 = vmul.f32 %v2223, %v2188
        %v2225 = vmul.f32 %v2223, %v2189
        %2228 = vrot.lane.b32.xlu0 %v2224, 124
        %v2229 = vpop.permute.xlu0 %2228
        %2230 = vrot.lane.b32.xlu0 %v2225, 124
        %v2231 = vpop.permute.xlu0 %2230
        %v2234 = vadd.f32 %v2202, %v2229
        %v2235 = vadd.f32 %v2203, %v2231
        %s2236 = sld [smem:[#allocation7 + $0x305]]
        %v2237 = vstv %s2236
        %v2238 = vmul.f32 %v2237, %v2190
        %v2239 = vmul.f32 %v2237, %v2191
        %2242 = vrot.lane.b32.xlu0 %v2238, 1
        %v2243 = vpop.permute.xlu0 %2242
        %2244 = vrot.lane.b32.xlu0 %v2239, 1
        %v2245 = vpop.permute.xlu0 %2244
        %v2248 = vadd.f32 %v2208, %v2243
        %v2249 = vadd.f32 %v2209, %v2245
        %s2250 = sld [smem:[#allocation7 + $0x306]]
        %v2251 = vstv %s2250
        %v2252 = vmul.f32 %v2251, %v2190
        %v2253 = vmul.f32 %v2251, %v2191
        %2256 = vrot.lane.b32.xlu0 %v2252, 1
        %v2257 = vpop.permute.xlu0 %2256
        %2258 = vrot.lane.b32.xlu0 %v2253, 1
        %v2259 = vpop.permute.xlu0 %2258
        %v2262 = vadd.f32 %v2214, %v2257
        %v2263 = vadd.f32 %v2215, %v2259
        %s2264 = sld [smem:[#allocation7 + $0x307]]
        %v2265 = vstv %s2264
        %v2266 = vmul.f32 %v2265, %v2190
        %v2267 = vmul.f32 %v2265, %v2191
        %2270 = vrot.lane.b32.xlu0 %v2266, 1
        %v2271 = vpop.permute.xlu0 %2270
        %2272 = vrot.lane.b32.xlu0 %v2267, 1
        %v2273 = vpop.permute.xlu0 %2272
        %v2276 = vadd.f32 %v2220, %v2271
        %v2277 = vadd.f32 %v2221, %v2273
        %s2278 = sld [smem:[#allocation7 + $0x308]]
        %v2279 = vstv %s2278
        %v2280 = vmul.f32 %v2279, %v2190
        %v2281 = vmul.f32 %v2279, %v2191
        %2284 = vrot.lane.b32.xlu0 %v2280, 125
        %v2285 = vpop.permute.xlu0 %2284
        %2286 = vrot.lane.b32.xlu0 %v2281, 125
        %v2287 = vpop.permute.xlu0 %2286
        %v2290 = vadd.f32 %v2234, %v2285
        %v2291 = vadd.f32 %v2235, %v2287
        %s2292 = sld [smem:[#allocation7 + $0x309]]
        %v2293 = vstv %s2292
        %v2294 = vmul.f32 %v2293, %v2190
        %v2295 = vmul.f32 %v2293, %v2191
        %2298 = vrot.lane.b32.xlu0 %v2294, 125
        %v2299 = vpop.permute.xlu0 %2298
        %2300 = vrot.lane.b32.xlu0 %v2295, 125
        %v2301 = vpop.permute.xlu0 %2300
        %v2304 = vadd.f32 %v2248, %v2299
        %v2305 = vadd.f32 %v2249, %v2301
        %s2306 = sld [smem:[#allocation7 + $0x30a]]
        %v2307 = vstv %s2306
        %v2308 = vmul.f32 %v2307, %v2192
        %v2309 = vmul.f32 %v2307, %v2193
        %2312 = vrot.lane.b32.xlu0 %v2308, 2
        %v2313 = vpop.permute.xlu0 %2312
        %2314 = vrot.lane.b32.xlu0 %v2309, 2
        %v2315 = vpop.permute.xlu0 %2314
        %v2318 = vadd.f32 %v2262, %v2313
        %v2319 = vadd.f32 %v2263, %v2315
        %s2320 = sld [smem:[#allocation7 + $0x30b]]
        %v2321 = vstv %s2320
        %v2322 = vmul.f32 %v2321, %v2192
        %v2323 = vmul.f32 %v2321, %v2193
        %2326 = vrot.lane.b32.xlu0 %v2322, 2
        %v2327 = vpop.permute.xlu0 %2326
        %2328 = vrot.lane.b32.xlu0 %v2323, 2
        %v2329 = vpop.permute.xlu0 %2328
        %v2332 = vadd.f32 %v2276, %v2327
        %v2333 = vadd.f32 %v2277, %v2329
        %s2334 = sld [smem:[#allocation7 + $0x30c]]
        %v2335 = vstv %s2334
        %v2336 = vmul.f32 %v2335, %v2192
        %v2337 = vmul.f32 %v2335, %v2193
        %2340 = vrot.lane.b32.xlu0 %v2336, 126
        %v2341 = vpop.permute.xlu0 %2340
        %2342 = vrot.lane.b32.xlu0 %v2337, 126
        %v2343 = vpop.permute.xlu0 %2342
        %v2346 = vadd.f32 %v2290, %v2341
        %v2347 = vadd.f32 %v2291, %v2343
        %s2348 = sld [smem:[#allocation7 + $0x30d]]
        %v2349 = vstv %s2348
        %v2350 = vmul.f32 %v2349, %v2192
        %v2351 = vmul.f32 %v2349, %v2193
        %2354 = vrot.lane.b32.xlu0 %v2350, 126
        %v2355 = vpop.permute.xlu0 %2354
        %2356 = vrot.lane.b32.xlu0 %v2351, 126
        %v2357 = vpop.permute.xlu0 %2356
        %v2360 = vadd.f32 %v2304, %v2355
        %v2361 = vadd.f32 %v2305, %v2357
        %s2362 = sld [smem:[#allocation7 + $0x30e]]
        %v2363 = vstv %s2362
        %v2364 = vmul.f32 %v2363, %v2192
        %v2365 = vmul.f32 %v2363, %v2193
        %2368 = vrot.lane.b32.xlu0 %v2364, 126
        %v2369 = vpop.permute.xlu0 %2368
        %2370 = vrot.lane.b32.xlu0 %v2365, 126
        %v2371 = vpop.permute.xlu0 %2370
        %v2374 = vadd.f32 %v2318, %v2369
        %v2375 = vadd.f32 %v2319, %v2371
        %s2376 = sld [smem:[#allocation7 + $0x30f]]
        %v2377 = vstv %s2376
        %v2378 = vmul.f32 %v2377, %v2194
        %v2379 = vmul.f32 %v2377, %v2195
        %2382 = vrot.lane.b32.xlu0 %v2378, 3
        %v2383 = vpop.permute.xlu0 %2382
        %2384 = vrot.lane.b32.xlu0 %v2379, 3
        %v2385 = vpop.permute.xlu0 %2384
        %v2388 = vadd.f32 %v2332, %v2383
        %v2389 = vadd.f32 %v2333, %v2385
        %s2390 = sld [smem:[#allocation7 + $0x310]]
        %v2391 = vstv %s2390
        %v2392 = vmul.f32 %v2391, %v2194
        %v2393 = vmul.f32 %v2391, %v2195
        %2396 = vrot.lane.b32.xlu0 %v2392, 127
        %v2397 = vpop.permute.xlu0 %2396
        %2398 = vrot.lane.b32.xlu0 %v2393, 127
        %v2399 = vpop.permute.xlu0 %2398
        %v2402 = vadd.f32 %v2346, %v2397
        %v2403 = vadd.f32 %v2347, %v2399
        %s2404 = sld [smem:[#allocation7 + $0x311]]
        %v2405 = vstv %s2404
        %v2406 = vmul.f32 %v2405, %v2194
        %v2407 = vmul.f32 %v2405, %v2195
        %2410 = vrot.lane.b32.xlu0 %v2406, 127
        %v2411 = vpop.permute.xlu0 %2410
        %2412 = vrot.lane.b32.xlu0 %v2407, 127
        %v2413 = vpop.permute.xlu0 %2412
        %v2416 = vadd.f32 %v2360, %v2411
        %v2417 = vadd.f32 %v2361, %v2413
        %s2418 = sld [smem:[#allocation7 + $0x312]]
        %v2419 = vstv %s2418
        %v2420 = vmul.f32 %v2419, %v2194
        %v2421 = vmul.f32 %v2419, %v2195
        %2424 = vrot.lane.b32.xlu0 %v2420, 127
        %v2425 = vpop.permute.xlu0 %2424
        %2426 = vrot.lane.b32.xlu0 %v2421, 127
        %v2427 = vpop.permute.xlu0 %2426
        %v2430 = vadd.f32 %v2374, %v2425
        %v2431 = vadd.f32 %v2375, %v2427
        %s2432 = sld [smem:[#allocation7 + $0x313]]
        %v2433 = vstv %s2432
        %v2434 = vmul.f32 %v2433, %v2194
        %v2435 = vmul.f32 %v2433, %v2195
        %2438 = vrot.lane.b32.xlu0 %v2434, 127
        %v2439 = vpop.permute.xlu0 %2438
        %2440 = vrot.lane.b32.xlu0 %v2435, 127
        %v2441 = vpop.permute.xlu0 %2440
        %v2444 = vadd.f32 %v2388, %v2439
        %v2445 = vadd.f32 %v2389, %v2441
        %s2446 = sld [smem:[#allocation7 + $0x314]]
        %v2447 = vstv %s2446
        %v2448 = vmul.f32 %v2447, %v2196
        %v2449 = vmul.f32 %v2447, %v2197
        %v2450 = vadd.f32 %v2402, %v2448
        %v2451 = vadd.f32 %v2403, %v2449
        %s2452 = sld [smem:[#allocation7 + $0x315]]
        %v2453 = vstv %s2452
        %v2454 = vmul.f32 %v2453, %v2196
        %v2455 = vmul.f32 %v2453, %v2197
        %v2456 = vadd.f32 %v2416, %v2454
        %v2457 = vadd.f32 %v2417, %v2455
        %s2458 = sld [smem:[#allocation7 + $0x316]]
        %v2459 = vstv %s2458
        %v2460 = vmul.f32 %v2459, %v2196
        %v2461 = vmul.f32 %v2459, %v2197
        %v2462 = vadd.f32 %v2430, %v2460
        %v2463 = vadd.f32 %v2431, %v2461
        %s2464 = sld [smem:[#allocation7 + $0x317]]
        %v2465 = vstv %s2464
        %v2466 = vmul.f32 %v2465, %v2196
        %v2467 = vmul.f32 %v2465, %v2197
        %v2468 = vadd.f32 %v2444, %v2466
        %v2469 = vadd.f32 %v2445, %v2467
        %s2470 = sld [smem:[#allocation7 + $0x318]]
        %v2471 = vstv %s2470
        %v2472 = vmul.f32 %v2471, %v2196
        %v2473 = vmul.f32 %v2471, %v2197
        %2476 = vrot.lane.b32.xlu0 %v2472, 124
        %v2477 = vpop.permute.xlu0 %2476
        %2478 = vrot.lane.b32.xlu0 %v2473, 124
        %v2479 = vpop.permute.xlu0 %2478
        %v2482 = vadd.f32 %v2450, %v2477
        %v2483 = vadd.f32 %v2451, %v2479
        %2486 = vrot.lane.b32.xlu0 %v2456, 127
        %v2487 = vpop.permute.xlu0 %2486
        %2488 = vrot.lane.b32.xlu0 %v2457, 127
        %v2489 = vpop.permute.xlu0 %2488
        %v2492 = vadd.f32 %v2482, %v2487
        %v2493 = vadd.f32 %v2483, %v2489
        %2496 = vrot.lane.b32.xlu0 %v2468, 127
        %v2497 = vpop.permute.xlu0 %2496
        %2498 = vrot.lane.b32.xlu0 %v2469, 127
        %v2499 = vpop.permute.xlu0 %2498
        %v2502 = vadd.f32 %v2462, %v2497
        %v2503 = vadd.f32 %v2463, %v2499
        %2506 = vrot.lane.b32.xlu0 %v2502, 126
        %v2507 = vpop.permute.xlu0 %2506
        %2508 = vrot.lane.b32.xlu0 %v2503, 126
        %v2509 = vpop.permute.xlu0 %2508
        %v2512 = vadd.f32 %v2492, %v2507
        %v2513 = vadd.f32 %v2493, %v2509
        %s2514 = scalar_lea.vmem %s177, 96 [#allocation8]
        %2515 = vst.msk [vmem:[%s2514] sm:$0xff] %vm567, %v2512
        %2516 = vst.msk [vmem:[%s2514 + $0x8] sm:$0xff] %vm567, %v2513
        %s2517 = sld [smem:[#allocation7 + $0x380]]
        %v2518 = vstv %s2517
        %v2519 = vmul.f32 %v2518, %v2188
        %v2520 = vmul.f32 %v2518, %v2189
        %v2521 = vadd.f32 %v2519, 0.0
        %v2522 = vadd.f32 %v2520, 0.0
        %s2523 = sld [smem:[#allocation7 + $0x381]]
        %v2524 = vstv %s2523
        %v2525 = vmul.f32 %v2524, %v2188
        %v2526 = vmul.f32 %v2524, %v2189
        %v2527 = vadd.f32 %v2525, 0.0
        %v2528 = vadd.f32 %v2526, 0.0
        %s2529 = sld [smem:[#allocation7 + $0x382]]
        %v2530 = vstv %s2529
        %v2531 = vmul.f32 %v2530, %v2188
        %v2532 = vmul.f32 %v2530, %v2189
        %v2533 = vadd.f32 %v2531, 0.0
        %v2534 = vadd.f32 %v2532, 0.0
        %s2535 = sld [smem:[#allocation7 + $0x383]]
        %v2536 = vstv %s2535
        %v2537 = vmul.f32 %v2536, %v2188
        %v2538 = vmul.f32 %v2536, %v2189
        %v2539 = vadd.f32 %v2537, 0.0
        %v2540 = vadd.f32 %v2538, 0.0
        %s2541 = sld [smem:[#allocation7 + $0x384]]
        %v2542 = vstv %s2541
        %v2543 = vmul.f32 %v2542, %v2188
        %v2544 = vmul.f32 %v2542, %v2189
        %2547 = vrot.lane.b32.xlu0 %v2543, 124
        %v2548 = vpop.permute.xlu0 %2547
        %2549 = vrot.lane.b32.xlu0 %v2544, 124
        %v2550 = vpop.permute.xlu0 %2549
        %v2553 = vadd.f32 %v2521, %v2548
        %v2554 = vadd.f32 %v2522, %v2550
        %s2555 = sld [smem:[#allocation7 + $0x385]]
        %v2556 = vstv %s2555
        %v2557 = vmul.f32 %v2556, %v2190
        %v2558 = vmul.f32 %v2556, %v2191
        %2561 = vrot.lane.b32.xlu0 %v2557, 1
        %v2562 = vpop.permute.xlu0 %2561
        %2563 = vrot.lane.b32.xlu0 %v2558, 1
        %v2564 = vpop.permute.xlu0 %2563
        %v2567 = vadd.f32 %v2527, %v2562
        %v2568 = vadd.f32 %v2528, %v2564
        %s2569 = sld [smem:[#allocation7 + $0x386]]
        %v2570 = vstv %s2569
        %v2571 = vmul.f32 %v2570, %v2190
        %v2572 = vmul.f32 %v2570, %v2191
        %2575 = vrot.lane.b32.xlu0 %v2571, 1
        %v2576 = vpop.permute.xlu0 %2575
        %2577 = vrot.lane.b32.xlu0 %v2572, 1
        %v2578 = vpop.permute.xlu0 %2577
        %v2581 = vadd.f32 %v2533, %v2576
        %v2582 = vadd.f32 %v2534, %v2578
        %s2583 = sld [smem:[#allocation7 + $0x387]]
        %v2584 = vstv %s2583
        %v2585 = vmul.f32 %v2584, %v2190
        %v2586 = vmul.f32 %v2584, %v2191
        %2589 = vrot.lane.b32.xlu0 %v2585, 1
        %v2590 = vpop.permute.xlu0 %2589
        %2591 = vrot.lane.b32.xlu0 %v2586, 1
        %v2592 = vpop.permute.xlu0 %2591
        %v2595 = vadd.f32 %v2539, %v2590
        %v2596 = vadd.f32 %v2540, %v2592
        %s2597 = sld [smem:[#allocation7 + $0x388]]
        %v2598 = vstv %s2597
        %v2599 = vmul.f32 %v2598, %v2190
        %v2600 = vmul.f32 %v2598, %v2191
        %2603 = vrot.lane.b32.xlu0 %v2599, 125
        %v2604 = vpop.permute.xlu0 %2603
        %2605 = vrot.lane.b32.xlu0 %v2600, 125
        %v2606 = vpop.permute.xlu0 %2605
        %v2609 = vadd.f32 %v2553, %v2604
        %v2610 = vadd.f32 %v2554, %v2606
        %s2611 = sld [smem:[#allocation7 + $0x389]]
        %v2612 = vstv %s2611
        %v2613 = vmul.f32 %v2612, %v2190
        %v2614 = vmul.f32 %v2612, %v2191
        %2617 = vrot.lane.b32.xlu0 %v2613, 125
        %v2618 = vpop.permute.xlu0 %2617
        %2619 = vrot.lane.b32.xlu0 %v2614, 125
        %v2620 = vpop.permute.xlu0 %2619
        %v2623 = vadd.f32 %v2567, %v2618
        %v2624 = vadd.f32 %v2568, %v2620
        %s2625 = sld [smem:[#allocation7 + $0x38a]]
        %v2626 = vstv %s2625
        %v2627 = vmul.f32 %v2626, %v2192
        %v2628 = vmul.f32 %v2626, %v2193
        %2631 = vrot.lane.b32.xlu0 %v2627, 2
        %v2632 = vpop.permute.xlu0 %2631
        %2633 = vrot.lane.b32.xlu0 %v2628, 2
        %v2634 = vpop.permute.xlu0 %2633
        %v2637 = vadd.f32 %v2581, %v2632
        %v2638 = vadd.f32 %v2582, %v2634
        %s2639 = sld [smem:[#allocation7 + $0x38b]]
        %v2640 = vstv %s2639
        %v2641 = vmul.f32 %v2640, %v2192
        %v2642 = vmul.f32 %v2640, %v2193
        %2645 = vrot.lane.b32.xlu0 %v2641, 2
        %v2646 = vpop.permute.xlu0 %2645
        %2647 = vrot.lane.b32.xlu0 %v2642, 2
        %v2648 = vpop.permute.xlu0 %2647
        %v2651 = vadd.f32 %v2595, %v2646
        %v2652 = vadd.f32 %v2596, %v2648
        %s2653 = sld [smem:[#allocation7 + $0x38c]]
        %v2654 = vstv %s2653
        %v2655 = vmul.f32 %v2654, %v2192
        %v2656 = vmul.f32 %v2654, %v2193
        %2659 = vrot.lane.b32.xlu0 %v2655, 126
        %v2660 = vpop.permute.xlu0 %2659
        %2661 = vrot.lane.b32.xlu0 %v2656, 126
        %v2662 = vpop.permute.xlu0 %2661
        %v2665 = vadd.f32 %v2609, %v2660
        %v2666 = vadd.f32 %v2610, %v2662
        %s2667 = sld [smem:[#allocation7 + $0x38d]]
        %v2668 = vstv %s2667
        %v2669 = vmul.f32 %v2668, %v2192
        %v2670 = vmul.f32 %v2668, %v2193
        %2673 = vrot.lane.b32.xlu0 %v2669, 126
        %v2674 = vpop.permute.xlu0 %2673
        %2675 = vrot.lane.b32.xlu0 %v2670, 126
        %v2676 = vpop.permute.xlu0 %2675
        %v2679 = vadd.f32 %v2623, %v2674
        %v2680 = vadd.f32 %v2624, %v2676
        %s2681 = sld [smem:[#allocation7 + $0x38e]]
        %v2682 = vstv %s2681
        %v2683 = vmul.f32 %v2682, %v2192
        %v2684 = vmul.f32 %v2682, %v2193
        %2687 = vrot.lane.b32.xlu0 %v2683, 126
        %v2688 = vpop.permute.xlu0 %2687
        %2689 = vrot.lane.b32.xlu0 %v2684, 126
        %v2690 = vpop.permute.xlu0 %2689
        %v2693 = vadd.f32 %v2637, %v2688
        %v2694 = vadd.f32 %v2638, %v2690
        %s2695 = sld [smem:[#allocation7 + $0x38f]]
        %v2696 = vstv %s2695
        %v2697 = vmul.f32 %v2696, %v2194
        %v2698 = vmul.f32 %v2696, %v2195
        %2701 = vrot.lane.b32.xlu0 %v2697, 3
        %v2702 = vpop.permute.xlu0 %2701
        %2703 = vrot.lane.b32.xlu0 %v2698, 3
        %v2704 = vpop.permute.xlu0 %2703
        %v2707 = vadd.f32 %v2651, %v2702
        %v2708 = vadd.f32 %v2652, %v2704
        %s2709 = sld [smem:[#allocation7 + $0x390]]
        %v2710 = vstv %s2709
        %v2711 = vmul.f32 %v2710, %v2194
        %v2712 = vmul.f32 %v2710, %v2195
        %2715 = vrot.lane.b32.xlu0 %v2711, 127
        %v2716 = vpop.permute.xlu0 %2715
        %2717 = vrot.lane.b32.xlu0 %v2712, 127
        %v2718 = vpop.permute.xlu0 %2717
        %v2721 = vadd.f32 %v2665, %v2716
        %v2722 = vadd.f32 %v2666, %v2718
        %s2723 = sld [smem:[#allocation7 + $0x391]]
        %v2724 = vstv %s2723
        %v2725 = vmul.f32 %v2724, %v2194
        %v2726 = vmul.f32 %v2724, %v2195
        %2729 = vrot.lane.b32.xlu0 %v2725, 127
        %v2730 = vpop.permute.xlu0 %2729
        %2731 = vrot.lane.b32.xlu0 %v2726, 127
        %v2732 = vpop.permute.xlu0 %2731
        %v2735 = vadd.f32 %v2679, %v2730
        %v2736 = vadd.f32 %v2680, %v2732
        %s2737 = sld [smem:[#allocation7 + $0x392]]
        %v2738 = vstv %s2737
        %v2739 = vmul.f32 %v2738, %v2194
        %v2740 = vmul.f32 %v2738, %v2195
        %2743 = vrot.lane.b32.xlu0 %v2739, 127
        %v2744 = vpop.permute.xlu0 %2743
        %2745 = vrot.lane.b32.xlu0 %v2740, 127
        %v2746 = vpop.permute.xlu0 %2745
        %v2749 = vadd.f32 %v2693, %v2744
        %v2750 = vadd.f32 %v2694, %v2746
        %s2751 = sld [smem:[#allocation7 + $0x393]]
        %v2752 = vstv %s2751
        %v2753 = vmul.f32 %v2752, %v2194
        %v2754 = vmul.f32 %v2752, %v2195
        %2757 = vrot.lane.b32.xlu0 %v2753, 127
        %v2758 = vpop.permute.xlu0 %2757
        %2759 = vrot.lane.b32.xlu0 %v2754, 127
        %v2760 = vpop.permute.xlu0 %2759
        %v2763 = vadd.f32 %v2707, %v2758
        %v2764 = vadd.f32 %v2708, %v2760
        %s2765 = sld [smem:[#allocation7 + $0x394]]
        %v2766 = vstv %s2765
        %v2767 = vmul.f32 %v2766, %v2196
        %v2768 = vmul.f32 %v2766, %v2197
        %v2769 = vadd.f32 %v2721, %v2767
        %v2770 = vadd.f32 %v2722, %v2768
        %s2771 = sld [smem:[#allocation7 + $0x395]]
        %v2772 = vstv %s2771
        %v2773 = vmul.f32 %v2772, %v2196
        %v2774 = vmul.f32 %v2772, %v2197
        %v2775 = vadd.f32 %v2735, %v2773
        %v2776 = vadd.f32 %v2736, %v2774
        %s2777 = sld [smem:[#allocation7 + $0x396]]
        %v2778 = vstv %s2777
        %v2779 = vmul.f32 %v2778, %v2196
        %v2780 = vmul.f32 %v2778, %v2197
        %v2781 = vadd.f32 %v2749, %v2779
        %v2782 = vadd.f32 %v2750, %v2780
        %s2783 = sld [smem:[#allocation7 + $0x397]]
        %v2784 = vstv %s2783
        %v2785 = vmul.f32 %v2784, %v2196
        %v2786 = vmul.f32 %v2784, %v2197
        %v2787 = vadd.f32 %v2763, %v2785
        %v2788 = vadd.f32 %v2764, %v2786
        %s2789 = sld [smem:[#allocation7 + $0x398]]
        %v2790 = vstv %s2789
        %v2791 = vmul.f32 %v2790, %v2196
        %v2792 = vmul.f32 %v2790, %v2197
        %2795 = vrot.lane.b32.xlu0 %v2791, 124
        %v2796 = vpop.permute.xlu0 %2795
        %2797 = vrot.lane.b32.xlu0 %v2792, 124
        %v2798 = vpop.permute.xlu0 %2797
        %v2801 = vadd.f32 %v2769, %v2796
        %v2802 = vadd.f32 %v2770, %v2798
        %2805 = vrot.lane.b32.xlu0 %v2775, 127
        %v2806 = vpop.permute.xlu0 %2805
        %2807 = vrot.lane.b32.xlu0 %v2776, 127
        %v2808 = vpop.permute.xlu0 %2807
        %v2811 = vadd.f32 %v2801, %v2806
        %v2812 = vadd.f32 %v2802, %v2808
        %2815 = vrot.lane.b32.xlu0 %v2787, 127
        %v2816 = vpop.permute.xlu0 %2815
        %2817 = vrot.lane.b32.xlu0 %v2788, 127
        %v2818 = vpop.permute.xlu0 %2817
        %v2821 = vadd.f32 %v2781, %v2816
        %v2822 = vadd.f32 %v2782, %v2818
        %2825 = vrot.lane.b32.xlu0 %v2821, 126
        %v2826 = vpop.permute.xlu0 %2825
        %2827 = vrot.lane.b32.xlu0 %v2822, 126
        %v2828 = vpop.permute.xlu0 %2827
        %v2831 = vadd.f32 %v2811, %v2826
        %v2832 = vadd.f32 %v2812, %v2828
        %s2833 = scalar_lea.vmem %s177, 112 [#allocation8]
        %2834 = vst.msk [vmem:[%s2833] sm:$0xff] %vm567, %v2831
        %2835 = vst.msk [vmem:[%s2833 + $0x8] sm:$0xff] %vm567, %v2832
        %s2836 = sand.u32 %s75, 1
        %s2837 = scalar_lea.sflag [#allocation5], %s2836
        %s2838 = sand.u32 %s75, 1
        %s2839 = smul.addr %s2838, 128
        %s2840 = scalar_lea.vmem [#allocation8], %s2839
        // Predicated region
        $region37: #{tpu_custom_call.1} parent=27 // pred_check
          %p2841 = pneg %p85
        $region38: #{tpu_custom_call.1} parent=27 // pred_check_branch
          %2843 = sbr.rel (%p2841) target = $region40
        $region39: #{tpu_custom_call.1} parent=27 // pred_region
          %2845 = vsyncadd %s2837, 0
          %s2846 = smul.addr %s20, 16
          %s2847 = smul.addr %s2846, 8
          %s2848 = scalar_lea.hbm %s2, %s2847
          %s2849 = sshll.u32 %s2840, 4
          %s2850 = int_to_ptr.vmem [resolvable:$true] %s2849
          %s2851 = sshll.u32 %s2848, 4
          %s2852 = int_to_ptr.hbm [resolvable:$true] %s2851
          %2857 = dma.vmem_to_hbm [thread:$0]  %s2850, 2048, %s2852, %s2837, 128, 128, 8
        $region40: #{tpu_custom_call.1} parent=27 // pred_fallthru
          _
      $region28: #{tpu_custom_call.1} parent=5 // pred_fallthru
        _
      %p2858 = scmp.le.s32.totalorder 2, %s15
      // Predicated region
      $region41: #{tpu_custom_call.1} parent=5 // pred_check
        %p2859 = pneg %p2858
      $region42: #{tpu_custom_call.1} parent=5 // pred_check_branch
        %2861 = sbr.rel (%p2859) target = $region44
      $region43: #{tpu_custom_call.1} parent=5 // pred_region
        %s2862 = ssub.s32 %s15, 2
        // Predicated region
        $region45: #{tpu_custom_call.1} parent=43 // pred_check
          %p2863 = pneg %p91
        $region46: #{tpu_custom_call.1} parent=43 // pred_check_branch
          %2865 = sbr.rel (%p2863) target = $region48
        $region47: #{tpu_custom_call.1} parent=43 // pred_region
          %s2866 = sand.u32 %s76, 1
          %s2867 = scalar_lea.sflag [#allocation5], %s2866
          %s2868 = sand.u32 %s76, 1
          %s2869 = smul.addr %s2868, 128
          %s2870 = scalar_lea.vmem [#allocation8], %s2869
          %2872 = dma.done %s2867, 2048
        $region48: #{tpu_custom_call.1} parent=43 // pred_fallthru
          _
      $region44: #{tpu_custom_call.1} parent=5 // pred_fallthru
        _
    $region6: #{tpu_custom_call.1} parent=1 // loop_footer
      %s19 = sadd.s32 1, %s15
    $region7: #{tpu_custom_call.1} parent=1 // loop_footer_branch
      %14 = sbr.rel target = $region3
    $region8: #{tpu_custom_call.1} parent=1 // loop_exit
      _
    %2873 = vsyncpa [#allocation4], 1
    %s2874 = scalar_lea.sflag [#allocation4], 1
    %2875 = vsyncpa %s2874, 1
    %2876 = vsyncpa [#allocation5], 1
    %s2877 = scalar_lea.sflag [#allocation5], 1
    %2878 = vsyncpa %s2877, 1
    %2879 = vsyncpa [#allocation6], 1
    %s2880 = scalar_lea.sflag [#allocation6], 1
    %2881 = vsyncpa %s2880, 1

</llo_original>
